<compile_context>
chip_gen: v5e
topology: v5e:2x2
jax: 0.10.0
libtpu: 0.0.40
codegen_flags: <defaults>
</compile_context>

<pallas_src>
import jax
import jax.numpy as jnp
from jax import lax
from jax.experimental import pallas as pl
from jax.experimental.pallas import tpu as pltpu  # noqa: F401

# ---------------- small synthetic configuration ----------------
B = 2                      # batch
S = 16                     # seq_len
N = B * S                  # fused row dimension
H = 32                     # hidden
NH = 2                     # attention heads
HD = H // NH
FFN = 64                   # feed-forward size
LAYERS = 2
TREE_DEPTH = 4
NODE_DEGREE = (2, 4, 8, 16)
TOTAL_NODE = sum(NODE_DEGREE)   # 30
VOCAB = 64
MAG = PRE = TOPD = LOWD = 12
ORDER = 16
ROWS = COLS = 32
FMT = 11
ATTN_METHOD = "max"
PADDING_DIST = 100.0
LN_EPS = 1e-6              # TODO(synk): reference eps unknown (emb/enc source not provided)
# TODO(synk): enc.Encoder source not provided; assumed distance->additive-bias rule.
ATTN_DIST_THRESHOLD = 8.0
NEG_MASK = -1e4            # in-batch "too far" additive bias
NEG_XBATCH = -1e9          # cross-batch (block-diagonal) additive bias

# fused embedding-table layout: [tok, mag, pre, topd, lowd, order, row, col]
TAB_SIZES = (VOCAB, MAG, PRE, TOPD, LOWD, ORDER, ROWS, COLS)
TAB_OFFSETS = tuple(int(sum(TAB_SIZES[:i])) for i in range(len(TAB_SIZES)))
TAB_TOTAL = int(sum(TAB_SIZES))   # 192


def _layer_norm(v, g, b):
    mu = jnp.mean(v, axis=-1, keepdims=True)
    var = jnp.mean((v - mu) ** 2, axis=-1, keepdims=True)
    return (v - mu) * lax.rsqrt(var + LN_EPS) * g + b


# ======================= single fused kernel =======================
def _bb_fused_kernel(idx_ref, fmt_ref, ptop_ref, pleft_ref, auxr_ref, auxc_ref,
                     table_ref, wtree_ref, wfmt_ref, embln_ref,
                     wqkv_ref, wo_ref, w1_ref, w2_ref, vec_ref, out_ref):
    f32 = jnp.float32
    bf16 = jnp.bfloat16
    cdim = (((1,), (1,)), ((), ()))                 # contract last dim of both operands

    # ---- 1) fused embedding lookups: one-hot rows over all 8 tables ----
    idx = idx_ref[...]                              # (N, 8) int32
    tab_iota = lax.broadcasted_iota(jnp.int32, (N, TAB_TOTAL), 1)
    oh = jnp.zeros((N, TAB_TOTAL), f32)
    for j, off in enumerate(TAB_OFFSETS):
        oh = oh + (tab_iota == (idx[:, j:j + 1] + off)).astype(f32)

    # ---- 2) unzip_tree_position: scatter_(value=1) == max of one-hots ----
    node_iota = lax.broadcasted_iota(jnp.int32, (N, TOTAL_NODE), 1)

    def multi_hot(zref):
        z = zref[...]                               # (N, TREE_DEPTH) int32
        acc = jnp.zeros((N, TOTAL_NODE), f32)
        for d in range(TREE_DEPTH):
            acc = jnp.maximum(acc, (node_iota == z[:, d:d + 1]).astype(f32))
        return acc                                  # index == TOTAL_NODE truncated away (as in ref)

    top = multi_hot(ptop_ref)                       # (N, TOTAL_NODE)
    left = multi_hot(pleft_ref)
    tree = jnp.concatenate([top, left], axis=-1)    # (N, 2*TOTAL_NODE) for fused projection

    # ---- 3) embeddings: one-hot table dot + fused tree projection + fmt + LayerNorm ----
    # TODO(synk): emb.EmbeddingForTutaExplicit source not provided; shape-faithful
    # sum-of-embeddings approximation, fully in-kernel (no XLA-side gathers).
    e = jnp.dot(oh.astype(bf16), table_ref[...], preferred_element_type=f32)
    e = e + jnp.dot(tree.astype(bf16), wtree_ref[...], preferred_element_type=f32)
    e = e + jnp.dot(fmt_ref[...].astype(bf16), wfmt_ref[...], preferred_element_type=f32)
    embln = embln_ref[...]                          # (2, H): [gain; bias]
    x = _layer_norm(e, embln[0:1, :], embln[1:2, :])          # (N, H) f32

    # ---- 4) pos2attn + create_post_mask -> additive attention bias ----
    def l1_dist(p):
        # 0/1 entries: sum_k |p_ik - p_jk| = p(1-p)^T + (1-p)p^T, fused as one K=60 dot
        pn = 1.0 - p
        a = jnp.concatenate([p, pn], axis=-1).astype(bf16)
        b = jnp.concatenate([pn, p], axis=-1).astype(bf16)
        return lax.dot_general(a, b, cdim, preferred_element_type=f32)

    d_top = l1_dist(top)
    d_left = l1_dist(left)
    if ATTN_METHOD == "max":
        dist = jnp.maximum(d_top, d_left)
    else:
        dist = d_top + d_left

    aux_r = auxr_ref[...]                           # (N, 2): [indicator, batch_id]
    aux_c = auxc_ref[...]                           # (2, N)
    ind_r, bat_r = aux_r[:, 0:1], aux_r[:, 1:2]
    ind_c, bat_c = aux_c[0:1, :], aux_c[1:2, :]

    cls_m = jnp.maximum((ind_r == -1).astype(f32), (ind_c == -1).astype(f32))
    pad_m = jnp.maximum((ind_r == 0).astype(f32), (ind_c == 0).astype(f32)) * PADDING_DIST
    dist = dist - cls_m * dist + pad_m
    sep_r = ((ind_r > 0) & ((ind_r & 1) == 1)).astype(f32)
    sep_c = ((ind_c > 0) & ((ind_c & 1) == 1)).astype(f32)
    # Faithful to the reference: attn_dist *= ((1 - sep*sep^T) * padding_dist + 1),
    # i.e. SEP-SEP pairs keep their distance, everything else is scaled up.
    dist = dist * ((1.0 - sep_r * sep_c) * PADDING_DIST + 1.0)

    # block-diagonal bias: batch folded into rows, cross-batch pairs fully masked
    bias = jnp.where(bat_r == bat_c,
                     jnp.where(dist <= ATTN_DIST_THRESHOLD, 0.0, NEG_MASK),
                     NEG_XBATCH)

    # ---- 5) transformer encoder stack, fully VMEM-resident (layers unrolled) ----
    # (1/sqrt(HD) is folded into the Q weight/bias at init time.)
    for l in range(LAYERS):
        vec = vec_ref[l]                            # (8, 128) packed bias / LayerNorm slab
        bqkv = vec[0:1, 0:3 * H]
        bo = vec[1:2, 0:H]
        g1 = vec[2:3, 0:H]
        b1 = vec[3:4, 0:H]
        bf1 = vec[4:5, 0:FFN]
        bf2 = vec[5:6, 0:H]
        g2 = vec[6:7, 0:H]
        b2 = vec[7:8, 0:H]

        # fused QKV projection: bf16 x bf16 -> f32 accumulate (single MXU pass)
        qkv = jnp.dot(x.astype(bf16), wqkv_ref[l], preferred_element_type=f32) + bqkv

        wo_l = wo_ref[l]                            # (H, H) bf16
        attn_out = jnp.zeros((N, H), f32)
        for h in range(NH):                         # NH = 2, statically unrolled
            lo, hi = h * HD, (h + 1) * HD
            q_h = qkv[:, lo:hi]
            k_h = qkv[:, H + lo:H + hi]
            v_h = qkv[:, 2 * H + lo:2 * H + hi]
            sc = lax.dot_general(q_h.astype(bf16), k_h.astype(bf16), cdim,
                                 preferred_element_type=f32) + bias
            sc = sc - jnp.max(sc, axis=-1, keepdims=True)
            p = jnp.exp(sc)
            p = p * pl.reciprocal(jnp.sum(p, axis=-1, keepdims=True), approx=True)
            ctx_h = jnp.dot(p.astype(bf16), v_h.astype(bf16), preferred_element_type=f32)
            # per-head output-projection accumulation (no VMEM scratch round trip)
            attn_out = attn_out + jnp.dot(ctx_h.astype(bf16), wo_l[lo:hi, :],
                                          preferred_element_type=f32)
        attn_out = attn_out + bo

        x1 = _layer_norm(x + attn_out, g1, b1)
        h1 = jnp.dot(x1.astype(bf16), w1_ref[l], preferred_element_type=f32) + bf1
        # TODO(synk): PyTorch nn.GELU default is exact erf; tanh approximation kept
        # here (known-good Mosaic lowering) since enc.Encoder source is unavailable.
        h1 = jax.nn.gelu(h1)
        ff = jnp.dot(h1.astype(bf16), w2_ref[l], preferred_element_type=f32) + bf2
        x = _layer_norm(x1 + ff, g2, b2)

    out_ref[...] = x


# ======================= full forward =======================
def bb_for_tuta_explicit_forward(params, token_id, num_mag, num_pre, num_top, num_low,
                                 token_order, pos_row, pos_col, pos_top, pos_left,
                                 format_vec, indicator):
    ep, enc = params["emb"], params["enc"]

    # pack the 8 per-token table indices as one (N, 8) int32 array (gathers happen in-kernel)
    idx = jnp.stack([token_id, num_mag, num_pre, num_top, num_low,
                     token_order, pos_row, pos_col], axis=-1).reshape(N, 8).astype(jnp.int32)

    ind_flat = indicator.reshape(N).astype(jnp.int32)
    batch_id = jnp.arange(N, dtype=jnp.int32) // S
    aux_r = jnp.stack([ind_flat, batch_id], axis=1)           # (N, 2) row view
    aux_c = jnp.stack([ind_flat, batch_id], axis=0)           # (2, N) column view

    out = pl.pallas_call(
        _bb_fused_kernel,
        out_shape=jax.ShapeDtypeStruct((N, H), jnp.float32),
    )(idx,
      format_vec.reshape(N, FMT).astype(jnp.float32),
      pos_top.reshape(N, TREE_DEPTH).astype(jnp.int32),
      pos_left.reshape(N, TREE_DEPTH).astype(jnp.int32),
      aux_r, aux_c,
      ep["table"], ep["w_tree"], ep["w_fmt"], ep["ln"],
      enc["wqkv"], enc["wo"], enc["w1"], enc["w2"], enc["vec"])
    return out.reshape(B, S, H)


# ======================= deterministic parameter init =======================
def init_params(key):
    keys = jax.random.split(key, 16)
    nrm = lambda k, shape: jax.random.normal(k, shape, jnp.float32) * 0.02

    # concatenated embedding tables in fused-lookup order: [tok, mag, pre, topd, lowd, order, row, col]
    table = jnp.concatenate([
        nrm(keys[0], (VOCAB, H)), nrm(keys[1], (MAG, H)), nrm(keys[2], (PRE, H)),
        nrm(keys[3], (TOPD, H)), nrm(keys[4], (LOWD, H)), nrm(keys[5], (ORDER, H)),
        nrm(keys[6], (ROWS, H)), nrm(keys[7], (COLS, H)),
    ], axis=0)                                                 # (TAB_TOTAL, H)
    w_tree = jnp.concatenate([nrm(keys[8], (TOTAL_NODE, H)),
                              nrm(keys[9], (TOTAL_NODE, H))], axis=0)   # [w_top; w_left]
    emb_p = dict(
        table=table.astype(jnp.bfloat16),
        w_tree=w_tree.astype(jnp.bfloat16),
        w_fmt=nrm(keys[10], (FMT, H)).astype(jnp.bfloat16),
        ln=jnp.stack([jnp.ones((H,), jnp.float32), jnp.zeros((H,), jnp.float32)]),
    )

    def pad128(v):
        v = v.reshape(-1)
        return jnp.pad(v, (0, 128 - v.shape[0]))

    scale = 1.0 / float(HD) ** 0.5
    wqkv_l, wo_l, w1_l, w2_l, vec_l = [], [], [], [], []
    ones_h, zeros_h = jnp.ones((H,), jnp.float32), jnp.zeros((H,), jnp.float32)
    for l in range(LAYERS):
        lk = jax.random.split(keys[11 + l], 10)
        wq, wk, wv, wo = (nrm(lk[i], (H, H)) for i in range(4))
        w1, w2 = nrm(lk[4], (H, FFN)), nrm(lk[5], (FFN, H))
        bqkv, bo = nrm(lk[6], (3 * H,)), nrm(lk[7], (H,))
        bf1, bf2 = nrm(lk[8], (FFN,)), nrm(lk[9], (H,))
        # fold the 1/sqrt(head_dim) attention scale into the Q projection + bias
        wqkv_l.append(jnp.concatenate([wq * scale, wk, wv], axis=1))    # (H, 3H)
        bqkv = jnp.concatenate([bqkv[:H] * scale, bqkv[H:]])
        wo_l.append(wo)
        w1_l.append(w1)
        w2_l.append(w2)
        vec_l.append(jnp.stack([pad128(r) for r in
                                (bqkv, bo, ones_h, zeros_h, bf1, bf2, ones_h, zeros_h)]))
    enc_p = dict(
        wqkv=jnp.stack(wqkv_l).astype(jnp.bfloat16),   # bf16 storage + bf16 MXU feed
        wo=jnp.stack(wo_l).astype(jnp.bfloat16),
        w1=jnp.stack(w1_l).astype(jnp.bfloat16),
        w2=jnp.stack(w2_l).astype(jnp.bfloat16),
        vec=jnp.stack(vec_l),                          # (LAYERS, 8, 128) f32 bias/LN slab
    )
    return dict(emb=emb_p, enc=enc_p)


if __name__ == "__main__":
    root = jax.random.PRNGKey(0)
    k = jax.random.split(root, 16)

    token_id = jax.random.randint(k[0], (B, S), 0, VOCAB, jnp.int32)
    num_mag = jax.random.randint(k[1], (B, S), 0, MAG, jnp.int32)
    num_pre = jax.random.randint(k[2], (B, S), 0, PRE, jnp.int32)
    num_top = jax.random.randint(k[3], (B, S), 0, TOPD, jnp.int32)
    num_low = jax.random.randint(k[4], (B, S), 0, LOWD, jnp.int32)
    token_order = jax.random.randint(k[5], (B, S), 0, ORDER, jnp.int32)
    pos_row = jax.random.randint(k[6], (B, S), 0, ROWS, jnp.int32)
    pos_col = jax.random.randint(k[7], (B, S), 0, COLS, jnp.int32)
    pos_top = jax.random.randint(k[8], (B, S, TREE_DEPTH), 0, TOTAL_NODE + 1, jnp.int32)
    pos_left = jax.random.randint(k[9], (B, S, TREE_DEPTH), 0, TOTAL_NODE + 1, jnp.int32)
    format_vec = jax.random.uniform(k[10], (B, S, FMT), jnp.float32)
    # indicator: [CLS]=-1 at position 0, a few [PAD]=0 at the end, odd values act as [SEP]
    mid = jax.random.randint(k[11], (B, S - 4), 1, 5, jnp.int32)
    indicator = jnp.concatenate(
        [-jnp.ones((B, 1), jnp.int32), mid, jnp.zeros((B, 3), jnp.int32)], axis=1)

    params = init_params(jax.random.PRNGKey(42))

    fwd = jax.jit(bb_for_tuta_explicit_forward)
    out = fwd(params, token_id, num_mag, num_pre, num_top, num_low, token_order,
              pos_row, pos_col, pos_top, pos_left, format_vec, indicator)
    out = jax.block_until_ready(out)
    assert out.shape == (B, S, H) and bool(jnp.all(jnp.isfinite(out)))
    print("KERNEL_OK")
</pallas_src>

<mosaic_0001>
module attributes {stable_mosaic.version = 11 : i64} {
  func.func @_bb_fused_kernel(%arg0: memref<32x8xi32, #tpu.memory_space<vmem>>, %arg1: memref<32x11xf32, #tpu.memory_space<vmem>>, %arg2: memref<32x4xi32, #tpu.memory_space<vmem>>, %arg3: memref<32x4xi32, #tpu.memory_space<vmem>>, %arg4: memref<32x2xi32, #tpu.memory_space<vmem>>, %arg5: memref<2x32xi32, #tpu.memory_space<vmem>>, %arg6: memref<192x32xbf16, #tpu.memory_space<vmem>>, %arg7: memref<60x32xbf16, #tpu.memory_space<vmem>>, %arg8: memref<11x32xbf16, #tpu.memory_space<vmem>>, %arg9: memref<2x32xf32, #tpu.memory_space<vmem>>, %arg10: memref<2x32x96xbf16, #tpu.memory_space<vmem>>, %arg11: memref<2x32x32xbf16, #tpu.memory_space<vmem>>, %arg12: memref<2x32x64xbf16, #tpu.memory_space<vmem>>, %arg13: memref<2x64x32xbf16, #tpu.memory_space<vmem>>, %arg14: memref<2x8x128xf32, #tpu.memory_space<vmem>>, %arg15: memref<32x32xf32, #tpu.memory_space<vmem>>) attributes {dimension_semantics = [], scalar_prefetch = 0 : i64, scratch_operands = 0 : i64, tpu.core_type = #tpu.core_type<tc>} {
    %c0 = arith.constant 0 : index
    %c0_0 = arith.constant 0 : index
    %0 = vector.load %arg0[%c0, %c0_0] : memref<32x8xi32, #tpu.memory_space<vmem>>, vector<32x8xi32>
    %1 = tpu.iota {dimensions = array<i32: 1>} : vector<32x192xi32>
    %cst = arith.constant 0.000000e+00 : f32
    %2 = vector.broadcast %cst : f32 to vector<32x192xf32>
    %3 = vector.extract_strided_slice %0 {offsets = [0, 0], sizes = [32, 1], strides = [1, 1]} : vector<32x8xi32> to vector<32x1xi32>
    %c0_i32 = arith.constant 0 : i32
    %4 = vector.broadcast %c0_i32 : i32 to vector<32x1xi32>
    %5 = arith.addi %3, %4 : vector<32x1xi32>
    %6 = vector.broadcast %5 : vector<32x1xi32> to vector<32x192xi32>
    %7 = arith.cmpi eq, %1, %6 : vector<32x192xi32>
    %8 = arith.extui %7 : vector<32x192xi1> to vector<32x192xi32>
    %9 = arith.sitofp %8 : vector<32x192xi32> to vector<32x192xf32>
    %10 = arith.addf %2, %9 : vector<32x192xf32>
    %11 = vector.extract_strided_slice %0 {offsets = [0, 1], sizes = [32, 1], strides = [1, 1]} : vector<32x8xi32> to vector<32x1xi32>
    %c64_i32 = arith.constant 64 : i32
    %12 = vector.broadcast %c64_i32 : i32 to vector<32x1xi32>
    %13 = arith.addi %11, %12 : vector<32x1xi32>
    %14 = vector.broadcast %13 : vector<32x1xi32> to vector<32x192xi32>
    %15 = arith.cmpi eq, %1, %14 : vector<32x192xi32>
    %16 = arith.extui %15 : vector<32x192xi1> to vector<32x192xi32>
    %17 = arith.sitofp %16 : vector<32x192xi32> to vector<32x192xf32>
    %18 = arith.addf %10, %17 : vector<32x192xf32>
    %19 = vector.extract_strided_slice %0 {offsets = [0, 2], sizes = [32, 1], strides = [1, 1]} : vector<32x8xi32> to vector<32x1xi32>
    %c76_i32 = arith.constant 76 : i32
    %20 = vector.broadcast %c76_i32 : i32 to vector<32x1xi32>
    %21 = arith.addi %19, %20 : vector<32x1xi32>
    %22 = vector.broadcast %21 : vector<32x1xi32> to vector<32x192xi32>
    %23 = arith.cmpi eq, %1, %22 : vector<32x192xi32>
    %24 = arith.extui %23 : vector<32x192xi1> to vector<32x192xi32>
    %25 = arith.sitofp %24 : vector<32x192xi32> to vector<32x192xf32>
    %26 = arith.addf %18, %25 : vector<32x192xf32>
    %27 = vector.extract_strided_slice %0 {offsets = [0, 3], sizes = [32, 1], strides = [1, 1]} : vector<32x8xi32> to vector<32x1xi32>
    %c88_i32 = arith.constant 88 : i32
    %28 = vector.broadcast %c88_i32 : i32 to vector<32x1xi32>
    %29 = arith.addi %27, %28 : vector<32x1xi32>
    %30 = vector.broadcast %29 : vector<32x1xi32> to vector<32x192xi32>
    %31 = arith.cmpi eq, %1, %30 : vector<32x192xi32>
    %32 = arith.extui %31 : vector<32x192xi1> to vector<32x192xi32>
    %33 = arith.sitofp %32 : vector<32x192xi32> to vector<32x192xf32>
    %34 = arith.addf %26, %33 : vector<32x192xf32>
    %35 = vector.extract_strided_slice %0 {offsets = [0, 4], sizes = [32, 1], strides = [1, 1]} : vector<32x8xi32> to vector<32x1xi32>
    %c100_i32 = arith.constant 100 : i32
    %36 = vector.broadcast %c100_i32 : i32 to vector<32x1xi32>
    %37 = arith.addi %35, %36 : vector<32x1xi32>
    %38 = vector.broadcast %37 : vector<32x1xi32> to vector<32x192xi32>
    %39 = arith.cmpi eq, %1, %38 : vector<32x192xi32>
    %40 = arith.extui %39 : vector<32x192xi1> to vector<32x192xi32>
    %41 = arith.sitofp %40 : vector<32x192xi32> to vector<32x192xf32>
    %42 = arith.addf %34, %41 : vector<32x192xf32>
    %43 = vector.extract_strided_slice %0 {offsets = [0, 5], sizes = [32, 1], strides = [1, 1]} : vector<32x8xi32> to vector<32x1xi32>
    %c112_i32 = arith.constant 112 : i32
    %44 = vector.broadcast %c112_i32 : i32 to vector<32x1xi32>
    %45 = arith.addi %43, %44 : vector<32x1xi32>
    %46 = vector.broadcast %45 : vector<32x1xi32> to vector<32x192xi32>
    %47 = arith.cmpi eq, %1, %46 : vector<32x192xi32>
    %48 = arith.extui %47 : vector<32x192xi1> to vector<32x192xi32>
    %49 = arith.sitofp %48 : vector<32x192xi32> to vector<32x192xf32>
    %50 = arith.addf %42, %49 : vector<32x192xf32>
    %51 = vector.extract_strided_slice %0 {offsets = [0, 6], sizes = [32, 1], strides = [1, 1]} : vector<32x8xi32> to vector<32x1xi32>
    %c128_i32 = arith.constant 128 : i32
    %52 = vector.broadcast %c128_i32 : i32 to vector<32x1xi32>
    %53 = arith.addi %51, %52 : vector<32x1xi32>
    %54 = vector.broadcast %53 : vector<32x1xi32> to vector<32x192xi32>
    %55 = arith.cmpi eq, %1, %54 : vector<32x192xi32>
    %56 = arith.extui %55 : vector<32x192xi1> to vector<32x192xi32>
    %57 = arith.sitofp %56 : vector<32x192xi32> to vector<32x192xf32>
    %58 = arith.addf %50, %57 : vector<32x192xf32>
    %59 = vector.extract_strided_slice %0 {offsets = [0, 7], sizes = [32, 1], strides = [1, 1]} : vector<32x8xi32> to vector<32x1xi32>
    %c160_i32 = arith.constant 160 : i32
    %60 = vector.broadcast %c160_i32 : i32 to vector<32x1xi32>
    %61 = arith.addi %59, %60 : vector<32x1xi32>
    %62 = vector.broadcast %61 : vector<32x1xi32> to vector<32x192xi32>
    %63 = arith.cmpi eq, %1, %62 : vector<32x192xi32>
    %64 = arith.extui %63 : vector<32x192xi1> to vector<32x192xi32>
    %65 = arith.sitofp %64 : vector<32x192xi32> to vector<32x192xf32>
    %66 = arith.addf %58, %65 : vector<32x192xf32>
    %67 = tpu.iota {dimensions = array<i32: 1>} : vector<32x30xi32>
    %c0_1 = arith.constant 0 : index
    %c0_2 = arith.constant 0 : index
    %68 = vector.load %arg2[%c0_1, %c0_2] : memref<32x4xi32, #tpu.memory_space<vmem>>, vector<32x4xi32>
    %cst_3 = arith.constant 0.000000e+00 : f32
    %69 = vector.broadcast %cst_3 : f32 to vector<32x30xf32>
    %70 = vector.extract_strided_slice %68 {offsets = [0, 0], sizes = [32, 1], strides = [1, 1]} : vector<32x4xi32> to vector<32x1xi32>
    %71 = vector.broadcast %70 : vector<32x1xi32> to vector<32x30xi32>
    %72 = arith.cmpi eq, %67, %71 : vector<32x30xi32>
    %73 = arith.extui %72 : vector<32x30xi1> to vector<32x30xi32>
    %74 = arith.sitofp %73 : vector<32x30xi32> to vector<32x30xf32>
    %75 = arith.maximumf %69, %74 : vector<32x30xf32>
    %76 = vector.extract_strided_slice %68 {offsets = [0, 1], sizes = [32, 1], strides = [1, 1]} : vector<32x4xi32> to vector<32x1xi32>
    %77 = vector.broadcast %76 : vector<32x1xi32> to vector<32x30xi32>
    %78 = arith.cmpi eq, %67, %77 : vector<32x30xi32>
    %79 = arith.extui %78 : vector<32x30xi1> to vector<32x30xi32>
    %80 = arith.sitofp %79 : vector<32x30xi32> to vector<32x30xf32>
    %81 = arith.maximumf %75, %80 : vector<32x30xf32>
    %82 = vector.extract_strided_slice %68 {offsets = [0, 2], sizes = [32, 1], strides = [1, 1]} : vector<32x4xi32> to vector<32x1xi32>
    %83 = vector.broadcast %82 : vector<32x1xi32> to vector<32x30xi32>
    %84 = arith.cmpi eq, %67, %83 : vector<32x30xi32>
    %85 = arith.extui %84 : vector<32x30xi1> to vector<32x30xi32>
    %86 = arith.sitofp %85 : vector<32x30xi32> to vector<32x30xf32>
    %87 = arith.maximumf %81, %86 : vector<32x30xf32>
    %88 = vector.extract_strided_slice %68 {offsets = [0, 3], sizes = [32, 1], strides = [1, 1]} : vector<32x4xi32> to vector<32x1xi32>
    %89 = vector.broadcast %88 : vector<32x1xi32> to vector<32x30xi32>
    %90 = arith.cmpi eq, %67, %89 : vector<32x30xi32>
    %91 = arith.extui %90 : vector<32x30xi1> to vector<32x30xi32>
    %92 = arith.sitofp %91 : vector<32x30xi32> to vector<32x30xf32>
    %93 = arith.maximumf %87, %92 : vector<32x30xf32>
    %c0_4 = arith.constant 0 : index
    %c0_5 = arith.constant 0 : index
    %94 = vector.load %arg3[%c0_4, %c0_5] : memref<32x4xi32, #tpu.memory_space<vmem>>, vector<32x4xi32>
    %cst_6 = arith.constant 0.000000e+00 : f32
    %95 = vector.broadcast %cst_6 : f32 to vector<32x30xf32>
    %96 = vector.extract_strided_slice %94 {offsets = [0, 0], sizes = [32, 1], strides = [1, 1]} : vector<32x4xi32> to vector<32x1xi32>
    %97 = vector.broadcast %96 : vector<32x1xi32> to vector<32x30xi32>
    %98 = arith.cmpi eq, %67, %97 : vector<32x30xi32>
    %99 = arith.extui %98 : vector<32x30xi1> to vector<32x30xi32>
    %100 = arith.sitofp %99 : vector<32x30xi32> to vector<32x30xf32>
    %101 = arith.maximumf %95, %100 : vector<32x30xf32>
    %102 = vector.extract_strided_slice %94 {offsets = [0, 1], sizes = [32, 1], strides = [1, 1]} : vector<32x4xi32> to vector<32x1xi32>
    %103 = vector.broadcast %102 : vector<32x1xi32> to vector<32x30xi32>
    %104 = arith.cmpi eq, %67, %103 : vector<32x30xi32>
    %105 = arith.extui %104 : vector<32x30xi1> to vector<32x30xi32>
    %106 = arith.sitofp %105 : vector<32x30xi32> to vector<32x30xf32>
    %107 = arith.maximumf %101, %106 : vector<32x30xf32>
    %108 = vector.extract_strided_slice %94 {offsets = [0, 2], sizes = [32, 1], strides = [1, 1]} : vector<32x4xi32> to vector<32x1xi32>
    %109 = vector.broadcast %108 : vector<32x1xi32> to vector<32x30xi32>
    %110 = arith.cmpi eq, %67, %109 : vector<32x30xi32>
    %111 = arith.extui %110 : vector<32x30xi1> to vector<32x30xi32>
    %112 = arith.sitofp %111 : vector<32x30xi32> to vector<32x30xf32>
    %113 = arith.maximumf %107, %112 : vector<32x30xf32>
    %114 = vector.extract_strided_slice %94 {offsets = [0, 3], sizes = [32, 1], strides = [1, 1]} : vector<32x4xi32> to vector<32x1xi32>
    %115 = vector.broadcast %114 : vector<32x1xi32> to vector<32x30xi32>
    %116 = arith.cmpi eq, %67, %115 : vector<32x30xi32>
    %117 = arith.extui %116 : vector<32x30xi1> to vector<32x30xi32>
    %118 = arith.sitofp %117 : vector<32x30xi32> to vector<32x30xf32>
    %119 = arith.maximumf %113, %118 : vector<32x30xf32>
    %120 = tpu.concatenate %93, %119 in 1 : vector<32x30xf32>, vector<32x30xf32> -> vector<32x60xf32>
    %121 = arith.truncf %66 : vector<32x192xf32> to vector<32x192xbf16>
    %c0_7 = arith.constant 0 : index
    %c0_8 = arith.constant 0 : index
    %122 = vector.load %arg6[%c0_7, %c0_8] : memref<192x32xbf16, #tpu.memory_space<vmem>>, vector<192x32xbf16>
    %cst_9 = arith.constant dense<0.000000e+00> : vector<32x32xf32>
    %123 = tpu.matmul %121, %122, %cst_9 {dimension_numbers = #tpu.dot_dimension_numbers<[1], [0], [0], [1], [0, 0, 1, 1], [], []>} : vector<32x192xbf16>, vector<192x32xbf16>, vector<32x32xf32> -> vector<32x32xf32>
    %124 = arith.truncf %120 : vector<32x60xf32> to vector<32x60xbf16>
    %c0_10 = arith.constant 0 : index
    %c0_11 = arith.constant 0 : index
    %125 = vector.load %arg7[%c0_10, %c0_11] : memref<60x32xbf16, #tpu.memory_space<vmem>>, vector<60x32xbf16>
    %cst_12 = arith.constant dense<0.000000e+00> : vector<32x32xf32>
    %126 = tpu.matmul %124, %125, %cst_12 {dimension_numbers = #tpu.dot_dimension_numbers<[1], [0], [0], [1], [0, 0, 1, 1], [], []>} : vector<32x60xbf16>, vector<60x32xbf16>, vector<32x32xf32> -> vector<32x32xf32>
    %127 = arith.addf %123, %126 : vector<32x32xf32>
    %c0_13 = arith.constant 0 : index
    %c0_14 = arith.constant 0 : index
    %128 = vector.load %arg1[%c0_13, %c0_14] : memref<32x11xf32, #tpu.memory_space<vmem>>, vector<32x11xf32>
    %129 = arith.truncf %128 : vector<32x11xf32> to vector<32x11xbf16>
    %c0_15 = arith.constant 0 : index
    %c0_16 = arith.constant 0 : index
    %130 = vector.load %arg8[%c0_15, %c0_16] : memref<11x32xbf16, #tpu.memory_space<vmem>>, vector<11x32xbf16>
    %cst_17 = arith.constant dense<0.000000e+00> : vector<32x32xf32>
    %131 = tpu.matmul %129, %130, %cst_17 {dimension_numbers = #tpu.dot_dimension_numbers<[1], [0], [0], [1], [0, 0, 1, 1], [], []>} : vector<32x11xbf16>, vector<11x32xbf16>, vector<32x32xf32> -> vector<32x32xf32>
    %132 = arith.addf %127, %131 : vector<32x32xf32>
    %c0_18 = arith.constant 0 : index
    %c0_19 = arith.constant 0 : index
    %133 = vector.load %arg9[%c0_18, %c0_19] : memref<2x32xf32, #tpu.memory_space<vmem>>, vector<2x32xf32>
    %134 = vector.extract_strided_slice %133 {offsets = [0, 0], sizes = [1, 32], strides = [1, 1]} : vector<2x32xf32> to vector<1x32xf32>
    %135 = vector.extract_strided_slice %133 {offsets = [1, 0], sizes = [1, 32], strides = [1, 1]} : vector<2x32xf32> to vector<1x32xf32>
    %cst_20 = arith.constant dense<0.000000e+00> : vector<32xf32>
    %136 = vector.multi_reduction <add>, %132, %cst_20 [1] : vector<32x32xf32> to vector<32xf32>
    %137 = vector.shape_cast %136 : vector<32xf32> to vector<32x1xf32>
    %cst_21 = arith.constant 3.200000e+01 : f32
    %138 = vector.broadcast %cst_21 : f32 to vector<32x1xf32>
    %139 = arith.divf %137, %138 : vector<32x1xf32>
    %140 = vector.broadcast %139 : vector<32x1xf32> to vector<32x32xf32>
    %141 = arith.subf %132, %140 : vector<32x32xf32>
    %142 = arith.mulf %141, %141 : vector<32x32xf32>
    %cst_22 = arith.constant dense<0.000000e+00> : vector<32xf32>
    %143 = vector.multi_reduction <add>, %142, %cst_22 [1] : vector<32x32xf32> to vector<32xf32>
    %144 = vector.shape_cast %143 : vector<32xf32> to vector<32x1xf32>
    %cst_23 = arith.constant 3.200000e+01 : f32
    %145 = vector.broadcast %cst_23 : f32 to vector<32x1xf32>
    %146 = arith.divf %144, %145 : vector<32x1xf32>
    %147 = vector.broadcast %139 : vector<32x1xf32> to vector<32x32xf32>
    %148 = arith.subf %132, %147 : vector<32x32xf32>
    %cst_24 = arith.constant 9.99999997E-7 : f32
    %149 = vector.broadcast %cst_24 : f32 to vector<32x1xf32>
    %150 = arith.addf %146, %149 : vector<32x1xf32>
    %151 = math.rsqrt %150 : vector<32x1xf32>
    %152 = vector.broadcast %151 : vector<32x1xf32> to vector<32x32xf32>
    %153 = arith.mulf %148, %152 : vector<32x32xf32>
    %154 = vector.broadcast %134 : vector<1x32xf32> to vector<32x32xf32>
    %155 = arith.mulf %153, %154 : vector<32x32xf32>
    %156 = vector.broadcast %135 : vector<1x32xf32> to vector<32x32xf32>
    %157 = arith.addf %155, %156 : vector<32x32xf32>
    %cst_25 = arith.constant 1.000000e+00 : f32
    %158 = vector.broadcast %cst_25 : f32 to vector<32x30xf32>
    %159 = arith.subf %158, %93 : vector<32x30xf32>
    %160 = tpu.concatenate %93, %159 in 1 : vector<32x30xf32>, vector<32x30xf32> -> vector<32x60xf32>
    %161 = arith.truncf %160 : vector<32x60xf32> to vector<32x60xbf16>
    %162 = tpu.concatenate %159, %93 in 1 : vector<32x30xf32>, vector<32x30xf32> -> vector<32x60xf32>
    %163 = arith.truncf %162 : vector<32x60xf32> to vector<32x60xbf16>
    %cst_26 = arith.constant dense<0.000000e+00> : vector<32x32xf32>
    %164 = tpu.matmul %161, %163, %cst_26 {dimension_numbers = #tpu.dot_dimension_numbers<[1], [1], [0], [0], [0, 0, 1, 0], [], []>} : vector<32x60xbf16>, vector<32x60xbf16>, vector<32x32xf32> -> vector<32x32xf32>
    %cst_27 = arith.constant 1.000000e+00 : f32
    %165 = vector.broadcast %cst_27 : f32 to vector<32x30xf32>
    %166 = arith.subf %165, %119 : vector<32x30xf32>
    %167 = tpu.concatenate %119, %166 in 1 : vector<32x30xf32>, vector<32x30xf32> -> vector<32x60xf32>
    %168 = arith.truncf %167 : vector<32x60xf32> to vector<32x60xbf16>
    %169 = tpu.concatenate %166, %119 in 1 : vector<32x30xf32>, vector<32x30xf32> -> vector<32x60xf32>
    %170 = arith.truncf %169 : vector<32x60xf32> to vector<32x60xbf16>
    %cst_28 = arith.constant dense<0.000000e+00> : vector<32x32xf32>
    %171 = tpu.matmul %168, %170, %cst_28 {dimension_numbers = #tpu.dot_dimension_numbers<[1], [1], [0], [0], [0, 0, 1, 0], [], []>} : vector<32x60xbf16>, vector<32x60xbf16>, vector<32x32xf32> -> vector<32x32xf32>
    %172 = arith.maximumf %164, %171 : vector<32x32xf32>
    %c0_29 = arith.constant 0 : index
    %c0_30 = arith.constant 0 : index
    %173 = vector.load %arg4[%c0_29, %c0_30] : memref<32x2xi32, #tpu.memory_space<vmem>>, vector<32x2xi32>
    %c0_31 = arith.constant 0 : index
    %c0_32 = arith.constant 0 : index
    %174 = vector.load %arg5[%c0_31, %c0_32] : memref<2x32xi32, #tpu.memory_space<vmem>>, vector<2x32xi32>
    %175 = vector.extract_strided_slice %173 {offsets = [0, 0], sizes = [32, 1], strides = [1, 1]} : vector<32x2xi32> to vector<32x1xi32>
    %176 = vector.extract_strided_slice %173 {offsets = [0, 1], sizes = [32, 1], strides = [1, 1]} : vector<32x2xi32> to vector<32x1xi32>
    %177 = vector.extract_strided_slice %174 {offsets = [0, 0], sizes = [1, 32], strides = [1, 1]} : vector<2x32xi32> to vector<1x32xi32>
    %178 = vector.extract_strided_slice %174 {offsets = [1, 0], sizes = [1, 32], strides = [1, 1]} : vector<2x32xi32> to vector<1x32xi32>
    %c-1_i32 = arith.constant -1 : i32
    %179 = vector.broadcast %c-1_i32 : i32 to vector<32x1xi32>
    %180 = arith.cmpi eq, %175, %179 : vector<32x1xi32>
    %181 = arith.extui %180 : vector<32x1xi1> to vector<32x1xi32>
    %182 = arith.sitofp %181 : vector<32x1xi32> to vector<32x1xf32>
    %c-1_i32_33 = arith.constant -1 : i32
    %183 = vector.broadcast %c-1_i32_33 : i32 to vector<1x32xi32>
    %184 = arith.cmpi eq, %177, %183 : vector<1x32xi32>
    %185 = arith.extui %184 : vector<1x32xi1> to vector<1x32xi32>
    %186 = arith.sitofp %185 : vector<1x32xi32> to vector<1x32xf32>
    %187 = vector.broadcast %182 : vector<32x1xf32> to vector<32x32xf32>
    %188 = vector.broadcast %186 : vector<1x32xf32> to vector<32x32xf32>
    %189 = arith.maximumf %187, %188 : vector<32x32xf32>
    %c0_i32_34 = arith.constant 0 : i32
    %190 = vector.broadcast %c0_i32_34 : i32 to vector<32x1xi32>
    %191 = arith.cmpi eq, %175, %190 : vector<32x1xi32>
    %192 = arith.extui %191 : vector<32x1xi1> to vector<32x1xi32>
    %193 = arith.sitofp %192 : vector<32x1xi32> to vector<32x1xf32>
    %c0_i32_35 = arith.constant 0 : i32
    %194 = vector.broadcast %c0_i32_35 : i32 to vector<1x32xi32>
    %195 = arith.cmpi eq, %177, %194 : vector<1x32xi32>
    %196 = arith.extui %195 : vector<1x32xi1> to vector<1x32xi32>
    %197 = arith.sitofp %196 : vector<1x32xi32> to vector<1x32xf32>
    %198 = vector.broadcast %193 : vector<32x1xf32> to vector<32x32xf32>
    %199 = vector.broadcast %197 : vector<1x32xf32> to vector<32x32xf32>
    %200 = arith.maximumf %198, %199 : vector<32x32xf32>
    %cst_36 = arith.constant 1.000000e+02 : f32
    %201 = vector.broadcast %cst_36 : f32 to vector<32x32xf32>
    %202 = arith.mulf %200, %201 : vector<32x32xf32>
    %203 = arith.mulf %189, %172 : vector<32x32xf32>
    %204 = arith.subf %172, %203 : vector<32x32xf32>
    %205 = arith.addf %204, %202 : vector<32x32xf32>
    %c0_i32_37 = arith.constant 0 : i32
    %206 = vector.broadcast %c0_i32_37 : i32 to vector<32x1xi32>
    %207 = arith.cmpi sgt, %175, %206 : vector<32x1xi32>
    %c1_i32 = arith.constant 1 : i32
    %208 = vector.broadcast %c1_i32 : i32 to vector<32x1xi32>
    %209 = arith.andi %175, %208 : vector<32x1xi32>
    %c1_i32_38 = arith.constant 1 : i32
    %210 = vector.broadcast %c1_i32_38 : i32 to vector<32x1xi32>
    %211 = arith.cmpi eq, %209, %210 : vector<32x1xi32>
    %212 = arith.andi %207, %211 : vector<32x1xi1>
    %213 = arith.extui %212 : vector<32x1xi1> to vector<32x1xi32>
    %214 = arith.sitofp %213 : vector<32x1xi32> to vector<32x1xf32>
    %c0_i32_39 = arith.constant 0 : i32
    %215 = vector.broadcast %c0_i32_39 : i32 to vector<1x32xi32>
    %216 = arith.cmpi sgt, %177, %215 : vector<1x32xi32>
    %c1_i32_40 = arith.constant 1 : i32
    %217 = vector.broadcast %c1_i32_40 : i32 to vector<1x32xi32>
    %218 = arith.andi %177, %217 : vector<1x32xi32>
    %c1_i32_41 = arith.constant 1 : i32
    %219 = vector.broadcast %c1_i32_41 : i32 to vector<1x32xi32>
    %220 = arith.cmpi eq, %218, %219 : vector<1x32xi32>
    %221 = arith.andi %216, %220 : vector<1x32xi1>
    %222 = arith.extui %221 : vector<1x32xi1> to vector<1x32xi32>
    %223 = arith.sitofp %222 : vector<1x32xi32> to vector<1x32xf32>
    %224 = vector.broadcast %214 : vector<32x1xf32> to vector<32x32xf32>
    %225 = vector.broadcast %223 : vector<1x32xf32> to vector<32x32xf32>
    %226 = arith.mulf %224, %225 : vector<32x32xf32>
    %cst_42 = arith.constant 1.000000e+00 : f32
    %227 = vector.broadcast %cst_42 : f32 to vector<32x32xf32>
    %228 = arith.subf %227, %226 : vector<32x32xf32>
    %cst_43 = arith.constant 1.000000e+02 : f32
    %229 = vector.broadcast %cst_43 : f32 to vector<32x32xf32>
    %230 = arith.mulf %228, %229 : vector<32x32xf32>
    %cst_44 = arith.constant 1.000000e+00 : f32
    %231 = vector.broadcast %cst_44 : f32 to vector<32x32xf32>
    %232 = arith.addf %230, %231 : vector<32x32xf32>
    %233 = arith.mulf %205, %232 : vector<32x32xf32>
    %234 = vector.broadcast %176 : vector<32x1xi32> to vector<32x32xi32>
    %235 = vector.broadcast %178 : vector<1x32xi32> to vector<32x32xi32>
    %236 = arith.cmpi eq, %234, %235 : vector<32x32xi32>
    %cst_45 = arith.constant 8.000000e+00 : f32
    %237 = vector.broadcast %cst_45 : f32 to vector<32x32xf32>
    %238 = arith.cmpf ole, %233, %237 : vector<32x32xf32>
    %cst_46 = arith.constant 0.000000e+00 : f32
    %cst_47 = arith.constant -1.000000e+04 : f32
    %239 = vector.broadcast %cst_46 : f32 to vector<32x32xf32>
    %240 = vector.broadcast %cst_47 : f32 to vector<32x32xf32>
    %241 = arith.select %238, %239, %240 : vector<32x32xi1>, vector<32x32xf32>
    %cst_48 = arith.constant -1.000000e+09 : f32
    %242 = vector.broadcast %cst_48 : f32 to vector<32x32xf32>
    %243 = arith.select %236, %241, %242 : vector<32x32xi1>, vector<32x32xf32>
    %c0_49 = arith.constant 0 : index
    %c0_50 = arith.constant 0 : index
    %c0_51 = arith.constant 0 : index
    %244 = vector.load %arg14[%c0_49, %c0_50, %c0_51] : memref<2x8x128xf32, #tpu.memory_space<vmem>>, vector<1x8x128xf32>
    %245 = vector.shape_cast %244 : vector<1x8x128xf32> to vector<8x128xf32>
    %246 = vector.extract_strided_slice %245 {offsets = [0, 0], sizes = [1, 96], strides = [1, 1]} : vector<8x128xf32> to vector<1x96xf32>
    %247 = vector.extract_strided_slice %245 {offsets = [1, 0], sizes = [1, 32], strides = [1, 1]} : vector<8x128xf32> to vector<1x32xf32>
    %248 = vector.extract_strided_slice %245 {offsets = [2, 0], sizes = [1, 32], strides = [1, 1]} : vector<8x128xf32> to vector<1x32xf32>
    %249 = vector.extract_strided_slice %245 {offsets = [3, 0], sizes = [1, 32], strides = [1, 1]} : vector<8x128xf32> to vector<1x32xf32>
    %250 = vector.extract_strided_slice %245 {offsets = [4, 0], sizes = [1, 64], strides = [1, 1]} : vector<8x128xf32> to vector<1x64xf32>
    %251 = vector.extract_strided_slice %245 {offsets = [5, 0], sizes = [1, 32], strides = [1, 1]} : vector<8x128xf32> to vector<1x32xf32>
    %252 = vector.extract_strided_slice %245 {offsets = [6, 0], sizes = [1, 32], strides = [1, 1]} : vector<8x128xf32> to vector<1x32xf32>
    %253 = vector.extract_strided_slice %245 {offsets = [7, 0], sizes = [1, 32], strides = [1, 1]} : vector<8x128xf32> to vector<1x32xf32>
    %254 = arith.truncf %157 : vector<32x32xf32> to vector<32x32xbf16>
    %c0_52 = arith.constant 0 : index
    %c0_53 = arith.constant 0 : index
    %c0_54 = arith.constant 0 : index
    %255 = vector.load %arg10[%c0_52, %c0_53, %c0_54] : memref<2x32x96xbf16, #tpu.memory_space<vmem>>, vector<1x32x96xbf16>
    %256 = vector.shape_cast %255 : vector<1x32x96xbf16> to vector<32x96xbf16>
    %cst_55 = arith.constant dense<0.000000e+00> : vector<32x96xf32>
    %257 = tpu.matmul %254, %256, %cst_55 {dimension_numbers = #tpu.dot_dimension_numbers<[1], [0], [0], [1], [0, 0, 1, 1], [], []>} : vector<32x32xbf16>, vector<32x96xbf16>, vector<32x96xf32> -> vector<32x96xf32>
    %258 = vector.broadcast %246 : vector<1x96xf32> to vector<32x96xf32>
    %259 = arith.addf %257, %258 : vector<32x96xf32>
    %c0_56 = arith.constant 0 : index
    %c0_57 = arith.constant 0 : index
    %c0_58 = arith.constant 0 : index
    %260 = vector.load %arg11[%c0_56, %c0_57, %c0_58] : memref<2x32x32xbf16, #tpu.memory_space<vmem>>, vector<1x32x32xbf16>
    %261 = vector.shape_cast %260 : vector<1x32x32xbf16> to vector<32x32xbf16>
    %cst_59 = arith.constant 0.000000e+00 : f32
    %262 = vector.broadcast %cst_59 : f32 to vector<32x32xf32>
    %263 = vector.extract_strided_slice %259 {offsets = [0, 0], sizes = [32, 16], strides = [1, 1]} : vector<32x96xf32> to vector<32x16xf32>
    %264 = vector.extract_strided_slice %259 {offsets = [0, 32], sizes = [32, 16], strides = [1, 1]} : vector<32x96xf32> to vector<32x16xf32>
    %265 = vector.extract_strided_slice %259 {offsets = [0, 64], sizes = [32, 16], strides = [1, 1]} : vector<32x96xf32> to vector<32x16xf32>
    %266 = arith.truncf %263 : vector<32x16xf32> to vector<32x16xbf16>
    %267 = arith.truncf %264 : vector<32x16xf32> to vector<32x16xbf16>
    %cst_60 = arith.constant dense<0.000000e+00> : vector<32x32xf32>
    %268 = tpu.matmul %266, %267, %cst_60 {dimension_numbers = #tpu.dot_dimension_numbers<[1], [1], [0], [0], [0, 0, 1, 0], [], []>} : vector<32x16xbf16>, vector<32x16xbf16>, vector<32x32xf32> -> vector<32x32xf32>
    %269 = arith.addf %268, %243 : vector<32x32xf32>
    %cst_61 = arith.constant dense<0xFF800000> : vector<32xf32>
    %270 = vector.multi_reduction <maximumf>, %269, %cst_61 [1] : vector<32x32xf32> to vector<32xf32>
    %271 = vector.shape_cast %270 : vector<32xf32> to vector<32x1xf32>
    %272 = vector.broadcast %271 : vector<32x1xf32> to vector<32x32xf32>
    %273 = arith.subf %269, %272 : vector<32x32xf32>
    %274 = math.exp %273 : vector<32x32xf32>
    %cst_62 = arith.constant dense<0.000000e+00> : vector<32xf32>
    %275 = vector.multi_reduction <add>, %274, %cst_62 [1] : vector<32x32xf32> to vector<32xf32>
    %276 = vector.shape_cast %275 : vector<32xf32> to vector<32x1xf32>
    %277 = tpu.reciprocal %276 {approx = true} : vector<32x1xf32> -> vector<32x1xf32>
    %278 = vector.broadcast %277 : vector<32x1xf32> to vector<32x32xf32>
    %279 = arith.mulf %274, %278 : vector<32x32xf32>
    %280 = arith.truncf %279 : vector<32x32xf32> to vector<32x32xbf16>
    %281 = arith.truncf %265 : vector<32x16xf32> to vector<32x16xbf16>
    %cst_63 = arith.constant dense<0.000000e+00> : vector<32x16xf32>
    %282 = tpu.matmul %280, %281, %cst_63 {dimension_numbers = #tpu.dot_dimension_numbers<[1], [0], [0], [1], [0, 0, 1, 1], [], []>} : vector<32x32xbf16>, vector<32x16xbf16>, vector<32x16xf32> -> vector<32x16xf32>
    %283 = arith.truncf %282 : vector<32x16xf32> to vector<32x16xbf16>
    %284 = vector.extract_strided_slice %261 {offsets = [0, 0], sizes = [16, 32], strides = [1, 1]} : vector<32x32xbf16> to vector<16x32xbf16>
    %cst_64 = arith.constant dense<0.000000e+00> : vector<32x32xf32>
    %285 = tpu.matmul %283, %284, %cst_64 {dimension_numbers = #tpu.dot_dimension_numbers<[1], [0], [0], [1], [0, 0, 1, 1], [], []>} : vector<32x16xbf16>, vector<16x32xbf16>, vector<32x32xf32> -> vector<32x32xf32>
    %286 = arith.addf %262, %285 : vector<32x32xf32>
    %287 = vector.extract_strided_slice %259 {offsets = [0, 16], sizes = [32, 16], strides = [1, 1]} : vector<32x96xf32> to vector<32x16xf32>
    %288 = vector.extract_strided_slice %259 {offsets = [0, 48], sizes = [32, 16], strides = [1, 1]} : vector<32x96xf32> to vector<32x16xf32>
    %289 = vector.extract_strided_slice %259 {offsets = [0, 80], sizes = [32, 16], strides = [1, 1]} : vector<32x96xf32> to vector<32x16xf32>
    %290 = arith.truncf %287 : vector<32x16xf32> to vector<32x16xbf16>
    %291 = arith.truncf %288 : vector<32x16xf32> to vector<32x16xbf16>
    %cst_65 = arith.constant dense<0.000000e+00> : vector<32x32xf32>
    %292 = tpu.matmul %290, %291, %cst_65 {dimension_numbers = #tpu.dot_dimension_numbers<[1], [1], [0], [0], [0, 0, 1, 0], [], []>} : vector<32x16xbf16>, vector<32x16xbf16>, vector<32x32xf32> -> vector<32x32xf32>
    %293 = arith.addf %292, %243 : vector<32x32xf32>
    %cst_66 = arith.constant dense<0xFF800000> : vector<32xf32>
    %294 = vector.multi_reduction <maximumf>, %293, %cst_66 [1] : vector<32x32xf32> to vector<32xf32>
    %295 = vector.shape_cast %294 : vector<32xf32> to vector<32x1xf32>
    %296 = vector.broadcast %295 : vector<32x1xf32> to vector<32x32xf32>
    %297 = arith.subf %293, %296 : vector<32x32xf32>
    %298 = math.exp %297 : vector<32x32xf32>
    %cst_67 = arith.constant dense<0.000000e+00> : vector<32xf32>
    %299 = vector.multi_reduction <add>, %298, %cst_67 [1] : vector<32x32xf32> to vector<32xf32>
    %300 = vector.shape_cast %299 : vector<32xf32> to vector<32x1xf32>
    %301 = tpu.reciprocal %300 {approx = true} : vector<32x1xf32> -> vector<32x1xf32>
    %302 = vector.broadcast %301 : vector<32x1xf32> to vector<32x32xf32>
    %303 = arith.mulf %298, %302 : vector<32x32xf32>
    %304 = arith.truncf %303 : vector<32x32xf32> to vector<32x32xbf16>
    %305 = arith.truncf %289 : vector<32x16xf32> to vector<32x16xbf16>
    %cst_68 = arith.constant dense<0.000000e+00> : vector<32x16xf32>
    %306 = tpu.matmul %304, %305, %cst_68 {dimension_numbers = #tpu.dot_dimension_numbers<[1], [0], [0], [1], [0, 0, 1, 1], [], []>} : vector<32x32xbf16>, vector<32x16xbf16>, vector<32x16xf32> -> vector<32x16xf32>
    %307 = arith.truncf %306 : vector<32x16xf32> to vector<32x16xbf16>
    %308 = vector.extract_strided_slice %261 {offsets = [16, 0], sizes = [16, 32], strides = [1, 1]} : vector<32x32xbf16> to vector<16x32xbf16>
    %cst_69 = arith.constant dense<0.000000e+00> : vector<32x32xf32>
    %309 = tpu.matmul %307, %308, %cst_69 {dimension_numbers = #tpu.dot_dimension_numbers<[1], [0], [0], [1], [0, 0, 1, 1], [], []>} : vector<32x16xbf16>, vector<16x32xbf16>, vector<32x32xf32> -> vector<32x32xf32>
    %310 = arith.addf %286, %309 : vector<32x32xf32>
    %311 = vector.broadcast %247 : vector<1x32xf32> to vector<32x32xf32>
    %312 = arith.addf %310, %311 : vector<32x32xf32>
    %313 = arith.addf %157, %312 : vector<32x32xf32>
    %cst_70 = arith.constant dense<0.000000e+00> : vector<32xf32>
    %314 = vector.multi_reduction <add>, %313, %cst_70 [1] : vector<32x32xf32> to vector<32xf32>
    %315 = vector.shape_cast %314 : vector<32xf32> to vector<32x1xf32>
    %cst_71 = arith.constant 3.200000e+01 : f32
    %316 = vector.broadcast %cst_71 : f32 to vector<32x1xf32>
    %317 = arith.divf %315, %316 : vector<32x1xf32>
    %318 = vector.broadcast %317 : vector<32x1xf32> to vector<32x32xf32>
    %319 = arith.subf %313, %318 : vector<32x32xf32>
    %320 = arith.mulf %319, %319 : vector<32x32xf32>
    %cst_72 = arith.constant dense<0.000000e+00> : vector<32xf32>
    %321 = vector.multi_reduction <add>, %320, %cst_72 [1] : vector<32x32xf32> to vector<32xf32>
    %322 = vector.shape_cast %321 : vector<32xf32> to vector<32x1xf32>
    %cst_73 = arith.constant 3.200000e+01 : f32
    %323 = vector.broadcast %cst_73 : f32 to vector<32x1xf32>
    %324 = arith.divf %322, %323 : vector<32x1xf32>
    %325 = vector.broadcast %317 : vector<32x1xf32> to vector<32x32xf32>
    %326 = arith.subf %313, %325 : vector<32x32xf32>
    %cst_74 = arith.constant 9.99999997E-7 : f32
    %327 = vector.broadcast %cst_74 : f32 to vector<32x1xf32>
    %328 = arith.addf %324, %327 : vector<32x1xf32>
    %329 = math.rsqrt %328 : vector<32x1xf32>
    %330 = vector.broadcast %329 : vector<32x1xf32> to vector<32x32xf32>
    %331 = arith.mulf %326, %330 : vector<32x32xf32>
    %332 = vector.broadcast %248 : vector<1x32xf32> to vector<32x32xf32>
    %333 = arith.mulf %331, %332 : vector<32x32xf32>
    %334 = vector.broadcast %249 : vector<1x32xf32> to vector<32x32xf32>
    %335 = arith.addf %333, %334 : vector<32x32xf32>
    %336 = arith.truncf %335 : vector<32x32xf32> to vector<32x32xbf16>
    %c0_75 = arith.constant 0 : index
    %c0_76 = arith.constant 0 : index
    %c0_77 = arith.constant 0 : index
    %337 = vector.load %arg12[%c0_75, %c0_76, %c0_77] : memref<2x32x64xbf16, #tpu.memory_space<vmem>>, vector<1x32x64xbf16>
    %338 = vector.shape_cast %337 : vector<1x32x64xbf16> to vector<32x64xbf16>
    %cst_78 = arith.constant dense<0.000000e+00> : vector<32x64xf32>
    %339 = tpu.matmul %336, %338, %cst_78 {dimension_numbers = #tpu.dot_dimension_numbers<[1], [0], [0], [1], [0, 0, 1, 1], [], []>} : vector<32x32xbf16>, vector<32x64xbf16>, vector<32x64xf32> -> vector<32x64xf32>
    %340 = vector.broadcast %250 : vector<1x64xf32> to vector<32x64xf32>
    %341 = arith.addf %339, %340 : vector<32x64xf32>
    %342 = arith.mulf %341, %341 : vector<32x64xf32>
    %343 = arith.mulf %341, %342 : vector<32x64xf32>
    %cst_79 = arith.constant 4.471500e-02 : f32
    %344 = vector.broadcast %cst_79 : f32 to vector<32x64xf32>
    %345 = arith.mulf %344, %343 : vector<32x64xf32>
    %346 = arith.addf %341, %345 : vector<32x64xf32>
    %cst_80 = arith.constant 0.797884583 : f32
    %347 = vector.broadcast %cst_80 : f32 to vector<32x64xf32>
    %348 = arith.mulf %347, %346 : vector<32x64xf32>
    %349 = math.tanh %348 : vector<32x64xf32>
    %cst_81 = arith.constant 1.000000e+00 : f32
    %350 = vector.broadcast %cst_81 : f32 to vector<32x64xf32>
    %351 = arith.addf %350, %349 : vector<32x64xf32>
    %cst_82 = arith.constant 5.000000e-01 : f32
    %352 = vector.broadcast %cst_82 : f32 to vector<32x64xf32>
    %353 = arith.mulf %352, %351 : vector<32x64xf32>
    %354 = arith.mulf %341, %353 : vector<32x64xf32>
    %355 = arith.truncf %354 : vector<32x64xf32> to vector<32x64xbf16>
    %c0_83 = arith.constant 0 : index
    %c0_84 = arith.constant 0 : index
    %c0_85 = arith.constant 0 : index
    %356 = vector.load %arg13[%c0_83, %c0_84, %c0_85] : memref<2x64x32xbf16, #tpu.memory_space<vmem>>, vector<1x64x32xbf16>
    %357 = vector.shape_cast %356 : vector<1x64x32xbf16> to vector<64x32xbf16>
    %cst_86 = arith.constant dense<0.000000e+00> : vector<32x32xf32>
    %358 = tpu.matmul %355, %357, %cst_86 {dimension_numbers = #tpu.dot_dimension_numbers<[1], [0], [0], [1], [0, 0, 1, 1], [], []>} : vector<32x64xbf16>, vector<64x32xbf16>, vector<32x32xf32> -> vector<32x32xf32>
    %359 = vector.broadcast %251 : vector<1x32xf32> to vector<32x32xf32>
    %360 = arith.addf %358, %359 : vector<32x32xf32>
    %361 = arith.addf %335, %360 : vector<32x32xf32>
    %cst_87 = arith.constant dense<0.000000e+00> : vector<32xf32>
    %362 = vector.multi_reduction <add>, %361, %cst_87 [1] : vector<32x32xf32> to vector<32xf32>
    %363 = vector.shape_cast %362 : vector<32xf32> to vector<32x1xf32>
    %cst_88 = arith.constant 3.200000e+01 : f32
    %364 = vector.broadcast %cst_88 : f32 to vector<32x1xf32>
    %365 = arith.divf %363, %364 : vector<32x1xf32>
    %366 = vector.broadcast %365 : vector<32x1xf32> to vector<32x32xf32>
    %367 = arith.subf %361, %366 : vector<32x32xf32>
    %368 = arith.mulf %367, %367 : vector<32x32xf32>
    %cst_89 = arith.constant dense<0.000000e+00> : vector<32xf32>
    %369 = vector.multi_reduction <add>, %368, %cst_89 [1] : vector<32x32xf32> to vector<32xf32>
    %370 = vector.shape_cast %369 : vector<32xf32> to vector<32x1xf32>
    %cst_90 = arith.constant 3.200000e+01 : f32
    %371 = vector.broadcast %cst_90 : f32 to vector<32x1xf32>
    %372 = arith.divf %370, %371 : vector<32x1xf32>
    %373 = vector.broadcast %365 : vector<32x1xf32> to vector<32x32xf32>
    %374 = arith.subf %361, %373 : vector<32x32xf32>
    %cst_91 = arith.constant 9.99999997E-7 : f32
    %375 = vector.broadcast %cst_91 : f32 to vector<32x1xf32>
    %376 = arith.addf %372, %375 : vector<32x1xf32>
    %377 = math.rsqrt %376 : vector<32x1xf32>
    %378 = vector.broadcast %377 : vector<32x1xf32> to vector<32x32xf32>
    %379 = arith.mulf %374, %378 : vector<32x32xf32>
    %380 = vector.broadcast %252 : vector<1x32xf32> to vector<32x32xf32>
    %381 = arith.mulf %379, %380 : vector<32x32xf32>
    %382 = vector.broadcast %253 : vector<1x32xf32> to vector<32x32xf32>
    %383 = arith.addf %381, %382 : vector<32x32xf32>
    %c1 = arith.constant 1 : index
    %c0_92 = arith.constant 0 : index
    %c0_93 = arith.constant 0 : index
    %384 = vector.load %arg14[%c1, %c0_92, %c0_93] : memref<2x8x128xf32, #tpu.memory_space<vmem>>, vector<1x8x128xf32>
    %385 = vector.shape_cast %384 : vector<1x8x128xf32> to vector<8x128xf32>
    %386 = vector.extract_strided_slice %385 {offsets = [0, 0], sizes = [1, 96], strides = [1, 1]} : vector<8x128xf32> to vector<1x96xf32>
    %387 = vector.extract_strided_slice %385 {offsets = [1, 0], sizes = [1, 32], strides = [1, 1]} : vector<8x128xf32> to vector<1x32xf32>
    %388 = vector.extract_strided_slice %385 {offsets = [2, 0], sizes = [1, 32], strides = [1, 1]} : vector<8x128xf32> to vector<1x32xf32>
    %389 = vector.extract_strided_slice %385 {offsets = [3, 0], sizes = [1, 32], strides = [1, 1]} : vector<8x128xf32> to vector<1x32xf32>
    %390 = vector.extract_strided_slice %385 {offsets = [4, 0], sizes = [1, 64], strides = [1, 1]} : vector<8x128xf32> to vector<1x64xf32>
    %391 = vector.extract_strided_slice %385 {offsets = [5, 0], sizes = [1, 32], strides = [1, 1]} : vector<8x128xf32> to vector<1x32xf32>
    %392 = vector.extract_strided_slice %385 {offsets = [6, 0], sizes = [1, 32], strides = [1, 1]} : vector<8x128xf32> to vector<1x32xf32>
    %393 = vector.extract_strided_slice %385 {offsets = [7, 0], sizes = [1, 32], strides = [1, 1]} : vector<8x128xf32> to vector<1x32xf32>
    %394 = arith.truncf %383 : vector<32x32xf32> to vector<32x32xbf16>
    %c1_94 = arith.constant 1 : index
    %c0_95 = arith.constant 0 : index
    %c0_96 = arith.constant 0 : index
    %395 = vector.load %arg10[%c1_94, %c0_95, %c0_96] : memref<2x32x96xbf16, #tpu.memory_space<vmem>>, vector<1x32x96xbf16>
    %396 = vector.shape_cast %395 : vector<1x32x96xbf16> to vector<32x96xbf16>
    %cst_97 = arith.constant dense<0.000000e+00> : vector<32x96xf32>
    %397 = tpu.matmul %394, %396, %cst_97 {dimension_numbers = #tpu.dot_dimension_numbers<[1], [0], [0], [1], [0, 0, 1, 1], [], []>} : vector<32x32xbf16>, vector<32x96xbf16>, vector<32x96xf32> -> vector<32x96xf32>
    %398 = vector.broadcast %386 : vector<1x96xf32> to vector<32x96xf32>
    %399 = arith.addf %397, %398 : vector<32x96xf32>
    %c1_98 = arith.constant 1 : index
    %c0_99 = arith.constant 0 : index
    %c0_100 = arith.constant 0 : index
    %400 = vector.load %arg11[%c1_98, %c0_99, %c0_100] : memref<2x32x32xbf16, #tpu.memory_space<vmem>>, vector<1x32x32xbf16>
    %401 = vector.shape_cast %400 : vector<1x32x32xbf16> to vector<32x32xbf16>
    %cst_101 = arith.constant 0.000000e+00 : f32
    %402 = vector.broadcast %cst_101 : f32 to vector<32x32xf32>
    %403 = vector.extract_strided_slice %399 {offsets = [0, 0], sizes = [32, 16], strides = [1, 1]} : vector<32x96xf32> to vector<32x16xf32>
    %404 = vector.extract_strided_slice %399 {offsets = [0, 32], sizes = [32, 16], strides = [1, 1]} : vector<32x96xf32> to vector<32x16xf32>
    %405 = vector.extract_strided_slice %399 {offsets = [0, 64], sizes = [32, 16], strides = [1, 1]} : vector<32x96xf32> to vector<32x16xf32>
    %406 = arith.truncf %403 : vector<32x16xf32> to vector<32x16xbf16>
    %407 = arith.truncf %404 : vector<32x16xf32> to vector<32x16xbf16>
    %cst_102 = arith.constant dense<0.000000e+00> : vector<32x32xf32>
    %408 = tpu.matmul %406, %407, %cst_102 {dimension_numbers = #tpu.dot_dimension_numbers<[1], [1], [0], [0], [0, 0, 1, 0], [], []>} : vector<32x16xbf16>, vector<32x16xbf16>, vector<32x32xf32> -> vector<32x32xf32>
    %409 = arith.addf %408, %243 : vector<32x32xf32>
    %cst_103 = arith.constant dense<0xFF800000> : vector<32xf32>
    %410 = vector.multi_reduction <maximumf>, %409, %cst_103 [1] : vector<32x32xf32> to vector<32xf32>
    %411 = vector.shape_cast %410 : vector<32xf32> to vector<32x1xf32>
    %412 = vector.broadcast %411 : vector<32x1xf32> to vector<32x32xf32>
    %413 = arith.subf %409, %412 : vector<32x32xf32>
    %414 = math.exp %413 : vector<32x32xf32>
    %cst_104 = arith.constant dense<0.000000e+00> : vector<32xf32>
    %415 = vector.multi_reduction <add>, %414, %cst_104 [1] : vector<32x32xf32> to vector<32xf32>
    %416 = vector.shape_cast %415 : vector<32xf32> to vector<32x1xf32>
    %417 = tpu.reciprocal %416 {approx = true} : vector<32x1xf32> -> vector<32x1xf32>
    %418 = vector.broadcast %417 : vector<32x1xf32> to vector<32x32xf32>
    %419 = arith.mulf %414, %418 : vector<32x32xf32>
    %420 = arith.truncf %419 : vector<32x32xf32> to vector<32x32xbf16>
    %421 = arith.truncf %405 : vector<32x16xf32> to vector<32x16xbf16>
    %cst_105 = arith.constant dense<0.000000e+00> : vector<32x16xf32>
    %422 = tpu.matmul %420, %421, %cst_105 {dimension_numbers = #tpu.dot_dimension_numbers<[1], [0], [0], [1], [0, 0, 1, 1], [], []>} : vector<32x32xbf16>, vector<32x16xbf16>, vector<32x16xf32> -> vector<32x16xf32>
    %423 = arith.truncf %422 : vector<32x16xf32> to vector<32x16xbf16>
    %424 = vector.extract_strided_slice %401 {offsets = [0, 0], sizes = [16, 32], strides = [1, 1]} : vector<32x32xbf16> to vector<16x32xbf16>
    %cst_106 = arith.constant dense<0.000000e+00> : vector<32x32xf32>
    %425 = tpu.matmul %423, %424, %cst_106 {dimension_numbers = #tpu.dot_dimension_numbers<[1], [0], [0], [1], [0, 0, 1, 1], [], []>} : vector<32x16xbf16>, vector<16x32xbf16>, vector<32x32xf32> -> vector<32x32xf32>
    %426 = arith.addf %402, %425 : vector<32x32xf32>
    %427 = vector.extract_strided_slice %399 {offsets = [0, 16], sizes = [32, 16], strides = [1, 1]} : vector<32x96xf32> to vector<32x16xf32>
    %428 = vector.extract_strided_slice %399 {offsets = [0, 48], sizes = [32, 16], strides = [1, 1]} : vector<32x96xf32> to vector<32x16xf32>
    %429 = vector.extract_strided_slice %399 {offsets = [0, 80], sizes = [32, 16], strides = [1, 1]} : vector<32x96xf32> to vector<32x16xf32>
    %430 = arith.truncf %427 : vector<32x16xf32> to vector<32x16xbf16>
    %431 = arith.truncf %428 : vector<32x16xf32> to vector<32x16xbf16>
    %cst_107 = arith.constant dense<0.000000e+00> : vector<32x32xf32>
    %432 = tpu.matmul %430, %431, %cst_107 {dimension_numbers = #tpu.dot_dimension_numbers<[1], [1], [0], [0], [0, 0, 1, 0], [], []>} : vector<32x16xbf16>, vector<32x16xbf16>, vector<32x32xf32> -> vector<32x32xf32>
    %433 = arith.addf %432, %243 : vector<32x32xf32>
    %cst_108 = arith.constant dense<0xFF800000> : vector<32xf32>
    %434 = vector.multi_reduction <maximumf>, %433, %cst_108 [1] : vector<32x32xf32> to vector<32xf32>
    %435 = vector.shape_cast %434 : vector<32xf32> to vector<32x1xf32>
    %436 = vector.broadcast %435 : vector<32x1xf32> to vector<32x32xf32>
    %437 = arith.subf %433, %436 : vector<32x32xf32>
    %438 = math.exp %437 : vector<32x32xf32>
    %cst_109 = arith.constant dense<0.000000e+00> : vector<32xf32>
    %439 = vector.multi_reduction <add>, %438, %cst_109 [1] : vector<32x32xf32> to vector<32xf32>
    %440 = vector.shape_cast %439 : vector<32xf32> to vector<32x1xf32>
    %441 = tpu.reciprocal %440 {approx = true} : vector<32x1xf32> -> vector<32x1xf32>
    %442 = vector.broadcast %441 : vector<32x1xf32> to vector<32x32xf32>
    %443 = arith.mulf %438, %442 : vector<32x32xf32>
    %444 = arith.truncf %443 : vector<32x32xf32> to vector<32x32xbf16>
    %445 = arith.truncf %429 : vector<32x16xf32> to vector<32x16xbf16>
    %cst_110 = arith.constant dense<0.000000e+00> : vector<32x16xf32>
    %446 = tpu.matmul %444, %445, %cst_110 {dimension_numbers = #tpu.dot_dimension_numbers<[1], [0], [0], [1], [0, 0, 1, 1], [], []>} : vector<32x32xbf16>, vector<32x16xbf16>, vector<32x16xf32> -> vector<32x16xf32>
    %447 = arith.truncf %446 : vector<32x16xf32> to vector<32x16xbf16>
    %448 = vector.extract_strided_slice %401 {offsets = [16, 0], sizes = [16, 32], strides = [1, 1]} : vector<32x32xbf16> to vector<16x32xbf16>
    %cst_111 = arith.constant dense<0.000000e+00> : vector<32x32xf32>
    %449 = tpu.matmul %447, %448, %cst_111 {dimension_numbers = #tpu.dot_dimension_numbers<[1], [0], [0], [1], [0, 0, 1, 1], [], []>} : vector<32x16xbf16>, vector<16x32xbf16>, vector<32x32xf32> -> vector<32x32xf32>
    %450 = arith.addf %426, %449 : vector<32x32xf32>
    %451 = vector.broadcast %387 : vector<1x32xf32> to vector<32x32xf32>
    %452 = arith.addf %450, %451 : vector<32x32xf32>
    %453 = arith.addf %383, %452 : vector<32x32xf32>
    %cst_112 = arith.constant dense<0.000000e+00> : vector<32xf32>
    %454 = vector.multi_reduction <add>, %453, %cst_112 [1] : vector<32x32xf32> to vector<32xf32>
    %455 = vector.shape_cast %454 : vector<32xf32> to vector<32x1xf32>
    %cst_113 = arith.constant 3.200000e+01 : f32
    %456 = vector.broadcast %cst_113 : f32 to vector<32x1xf32>
    %457 = arith.divf %455, %456 : vector<32x1xf32>
    %458 = vector.broadcast %457 : vector<32x1xf32> to vector<32x32xf32>
    %459 = arith.subf %453, %458 : vector<32x32xf32>
    %460 = arith.mulf %459, %459 : vector<32x32xf32>
    %cst_114 = arith.constant dense<0.000000e+00> : vector<32xf32>
    %461 = vector.multi_reduction <add>, %460, %cst_114 [1] : vector<32x32xf32> to vector<32xf32>
    %462 = vector.shape_cast %461 : vector<32xf32> to vector<32x1xf32>
    %cst_115 = arith.constant 3.200000e+01 : f32
    %463 = vector.broadcast %cst_115 : f32 to vector<32x1xf32>
    %464 = arith.divf %462, %463 : vector<32x1xf32>
    %465 = vector.broadcast %457 : vector<32x1xf32> to vector<32x32xf32>
    %466 = arith.subf %453, %465 : vector<32x32xf32>
    %cst_116 = arith.constant 9.99999997E-7 : f32
    %467 = vector.broadcast %cst_116 : f32 to vector<32x1xf32>
    %468 = arith.addf %464, %467 : vector<32x1xf32>
    %469 = math.rsqrt %468 : vector<32x1xf32>
    %470 = vector.broadcast %469 : vector<32x1xf32> to vector<32x32xf32>
    %471 = arith.mulf %466, %470 : vector<32x32xf32>
    %472 = vector.broadcast %388 : vector<1x32xf32> to vector<32x32xf32>
    %473 = arith.mulf %471, %472 : vector<32x32xf32>
    %474 = vector.broadcast %389 : vector<1x32xf32> to vector<32x32xf32>
    %475 = arith.addf %473, %474 : vector<32x32xf32>
    %476 = arith.truncf %475 : vector<32x32xf32> to vector<32x32xbf16>
    %c1_117 = arith.constant 1 : index
    %c0_118 = arith.constant 0 : index
    %c0_119 = arith.constant 0 : index
    %477 = vector.load %arg12[%c1_117, %c0_118, %c0_119] : memref<2x32x64xbf16, #tpu.memory_space<vmem>>, vector<1x32x64xbf16>
    %478 = vector.shape_cast %477 : vector<1x32x64xbf16> to vector<32x64xbf16>
    %cst_120 = arith.constant dense<0.000000e+00> : vector<32x64xf32>
    %479 = tpu.matmul %476, %478, %cst_120 {dimension_numbers = #tpu.dot_dimension_numbers<[1], [0], [0], [1], [0, 0, 1, 1], [], []>} : vector<32x32xbf16>, vector<32x64xbf16>, vector<32x64xf32> -> vector<32x64xf32>
    %480 = vector.broadcast %390 : vector<1x64xf32> to vector<32x64xf32>
    %481 = arith.addf %479, %480 : vector<32x64xf32>
    %482 = arith.mulf %481, %481 : vector<32x64xf32>
    %483 = arith.mulf %481, %482 : vector<32x64xf32>
    %cst_121 = arith.constant 4.471500e-02 : f32
    %484 = vector.broadcast %cst_121 : f32 to vector<32x64xf32>
    %485 = arith.mulf %484, %483 : vector<32x64xf32>
    %486 = arith.addf %481, %485 : vector<32x64xf32>
    %cst_122 = arith.constant 0.797884583 : f32
    %487 = vector.broadcast %cst_122 : f32 to vector<32x64xf32>
    %488 = arith.mulf %487, %486 : vector<32x64xf32>
    %489 = math.tanh %488 : vector<32x64xf32>
    %cst_123 = arith.constant 1.000000e+00 : f32
    %490 = vector.broadcast %cst_123 : f32 to vector<32x64xf32>
    %491 = arith.addf %490, %489 : vector<32x64xf32>
    %cst_124 = arith.constant 5.000000e-01 : f32
    %492 = vector.broadcast %cst_124 : f32 to vector<32x64xf32>
    %493 = arith.mulf %492, %491 : vector<32x64xf32>
    %494 = arith.mulf %481, %493 : vector<32x64xf32>
    %495 = arith.truncf %494 : vector<32x64xf32> to vector<32x64xbf16>
    %c1_125 = arith.constant 1 : index
    %c0_126 = arith.constant 0 : index
    %c0_127 = arith.constant 0 : index
    %496 = vector.load %arg13[%c1_125, %c0_126, %c0_127] : memref<2x64x32xbf16, #tpu.memory_space<vmem>>, vector<1x64x32xbf16>
    %497 = vector.shape_cast %496 : vector<1x64x32xbf16> to vector<64x32xbf16>
    %cst_128 = arith.constant dense<0.000000e+00> : vector<32x32xf32>
    %498 = tpu.matmul %495, %497, %cst_128 {dimension_numbers = #tpu.dot_dimension_numbers<[1], [0], [0], [1], [0, 0, 1, 1], [], []>} : vector<32x64xbf16>, vector<64x32xbf16>, vector<32x32xf32> -> vector<32x32xf32>
    %499 = vector.broadcast %391 : vector<1x32xf32> to vector<32x32xf32>
    %500 = arith.addf %498, %499 : vector<32x32xf32>
    %501 = arith.addf %475, %500 : vector<32x32xf32>
    %cst_129 = arith.constant dense<0.000000e+00> : vector<32xf32>
    %502 = vector.multi_reduction <add>, %501, %cst_129 [1] : vector<32x32xf32> to vector<32xf32>
    %503 = vector.shape_cast %502 : vector<32xf32> to vector<32x1xf32>
    %cst_130 = arith.constant 3.200000e+01 : f32
    %504 = vector.broadcast %cst_130 : f32 to vector<32x1xf32>
    %505 = arith.divf %503, %504 : vector<32x1xf32>
    %506 = vector.broadcast %505 : vector<32x1xf32> to vector<32x32xf32>
    %507 = arith.subf %501, %506 : vector<32x32xf32>
    %508 = arith.mulf %507, %507 : vector<32x32xf32>
    %cst_131 = arith.constant dense<0.000000e+00> : vector<32xf32>
    %509 = vector.multi_reduction <add>, %508, %cst_131 [1] : vector<32x32xf32> to vector<32xf32>
    %510 = vector.shape_cast %509 : vector<32xf32> to vector<32x1xf32>
    %cst_132 = arith.constant 3.200000e+01 : f32
    %511 = vector.broadcast %cst_132 : f32 to vector<32x1xf32>
    %512 = arith.divf %510, %511 : vector<32x1xf32>
    %513 = vector.broadcast %505 : vector<32x1xf32> to vector<32x32xf32>
    %514 = arith.subf %501, %513 : vector<32x32xf32>
    %cst_133 = arith.constant 9.99999997E-7 : f32
    %515 = vector.broadcast %cst_133 : f32 to vector<32x1xf32>
    %516 = arith.addf %512, %515 : vector<32x1xf32>
    %517 = math.rsqrt %516 : vector<32x1xf32>
    %518 = vector.broadcast %517 : vector<32x1xf32> to vector<32x32xf32>
    %519 = arith.mulf %514, %518 : vector<32x32xf32>
    %520 = vector.broadcast %392 : vector<1x32xf32> to vector<32x32xf32>
    %521 = arith.mulf %519, %520 : vector<32x32xf32>
    %522 = vector.broadcast %393 : vector<1x32xf32> to vector<32x32xf32>
    %523 = arith.addf %521, %522 : vector<32x32xf32>
    %c0_134 = arith.constant 0 : index
    %c0_135 = arith.constant 0 : index
    %524 = vector.load %arg15[%c0_134, %c0_135] : memref<32x32xf32, #tpu.memory_space<vmem>>, vector<32x32xf32>
    tpu.vector_store %arg15[%c0_134, %c0_135], %523 {strides = array<i32>} : memref<32x32xf32, #tpu.memory_space<vmem>>, vector<32x32xf32>,
    return
  }
}

</mosaic_0001>

<llo_original>
// kernel: bb_for_tuta_explicit_forward.1
$region0: #{bb_for_tuta_explicit_forward.1}
  #allocation0 [shape = 'u32[]', space=smem, size = 0x4, offset = 0x4, fixed_abs, tag = 'smem constant byte address 0x4 - core index']
  #allocation1 [shape = 'u32[72,128]{1,0:T(1,128)}', space=vmem, size = 0x9000, scoped, tag = 'internal scratch']
  %s0 = inlined_call_operand.vmem [shape: s32[32,8], index: 0, kind: input, shape index: {}]
  %s1 = inlined_call_operand.vmem [shape: f32[32,11], index: 1, kind: input, shape index: {}]
  %s2 = inlined_call_operand.vmem [shape: s32[32,4], index: 2, kind: input, shape index: {}]
  %s3 = inlined_call_operand.vmem [shape: s32[32,4], index: 3, kind: input, shape index: {}]
  %s4 = inlined_call_operand.vmem [shape: s32[32,2], index: 4, kind: input, shape index: {}]
  %s5 = inlined_call_operand.vmem [shape: s32[2,32], index: 5, kind: input, shape index: {}]
  %s6 = inlined_call_operand.vmem [shape: bf16[192,32], index: 6, kind: input, shape index: {}]
  %s7 = inlined_call_operand.vmem [shape: bf16[60,32], index: 7, kind: input, shape index: {}]
  %s8 = inlined_call_operand.vmem [shape: bf16[11,32], index: 8, kind: input, shape index: {}]
  %s9 = inlined_call_operand.vmem [shape: f32[2,32], index: 9, kind: input, shape index: {}]
  %s10 = inlined_call_operand.vmem [shape: bf16[2,32,96], index: 10, kind: input, shape index: {}]
  %s11 = inlined_call_operand.vmem [shape: bf16[2,32,32], index: 11, kind: input, shape index: {}]
  %s12 = inlined_call_operand.vmem [shape: bf16[2,32,64], index: 12, kind: input, shape index: {}]
  %s13 = inlined_call_operand.vmem [shape: bf16[2,64,32], index: 13, kind: input, shape index: {}]
  %s14 = inlined_call_operand.vmem [shape: f32[2,8,128], index: 14, kind: input, shape index: {}]
  %s15 = inlined_call_operand.hbm [shape: f32[32,32], index: 15, kind: output, shape index: {}]
  %s16 = sld [smem:[#allocation0]]
  $region70: #{bb_for_tuta_explicit_forward.1} parent=0
    _
  %s18 = ssub.s32 1, %s16
  %s19 = scalar_select 0, %s18, %s16
  $region1: #{bb_for_tuta_explicit_forward.1} parent=0
    #allocation2 [shape = 'u8[16384]{0}', space=vmem, size = 0x4000, scoped, tag = 'output window, operand 0, single buffered']
    #allocation3 [shape = 's32[1]{0}', space=sflag, size = 0x4, scoped, tag = 'scoped memory for bb_for_tuta_explicit_forward.1']
    %20 = vsyncpa [#allocation3], 0
    // Predicated region
    $region2: #{bb_for_tuta_explicit_forward.1} parent=1 // pred_check
      _
    $region3: #{bb_for_tuta_explicit_forward.1} parent=1 // pred_check_branch
      %22 = sbr.rel (0) target = $region5
    $region4: #{bb_for_tuta_explicit_forward.1} parent=1 // pred_region
      _
    $region5: #{bb_for_tuta_explicit_forward.1} parent=1 // pred_fallthru
      _
    // Predicated region
    $region6: #{bb_for_tuta_explicit_forward.1} parent=1 // pred_check
      _
    $region7: #{bb_for_tuta_explicit_forward.1} parent=1 // pred_check_branch
      %24 = sbr.rel (0) target = $region9
    $region8: #{bb_for_tuta_explicit_forward.1} parent=1 // pred_region
      _
    $region9: #{bb_for_tuta_explicit_forward.1} parent=1 // pred_fallthru
      _
    // Predicated region
    $region10: #{bb_for_tuta_explicit_forward.1} parent=1 // pred_check
      _
    $region11: #{bb_for_tuta_explicit_forward.1} parent=1 // pred_check_branch
      %26 = sbr.rel (0) target = $region13
    $region12: #{bb_for_tuta_explicit_forward.1} parent=1 // pred_region
      _
    $region13: #{bb_for_tuta_explicit_forward.1} parent=1 // pred_fallthru
      _
    // Predicated region
    $region14: #{bb_for_tuta_explicit_forward.1} parent=1 // pred_check
      _
    $region15: #{bb_for_tuta_explicit_forward.1} parent=1 // pred_check_branch
      %28 = sbr.rel (0) target = $region17
    $region16: #{bb_for_tuta_explicit_forward.1} parent=1 // pred_region
      _
    $region17: #{bb_for_tuta_explicit_forward.1} parent=1 // pred_fallthru
      _
    // Predicated region
    $region18: #{bb_for_tuta_explicit_forward.1} parent=1 // pred_check
      _
    $region19: #{bb_for_tuta_explicit_forward.1} parent=1 // pred_check_branch
      %30 = sbr.rel (0) target = $region21
    $region20: #{bb_for_tuta_explicit_forward.1} parent=1 // pred_region
      _
    $region21: #{bb_for_tuta_explicit_forward.1} parent=1 // pred_fallthru
      _
    // Predicated region
    $region22: #{bb_for_tuta_explicit_forward.1} parent=1 // pred_check
      _
    $region23: #{bb_for_tuta_explicit_forward.1} parent=1 // pred_check_branch
      %32 = sbr.rel (0) target = $region25
    $region24: #{bb_for_tuta_explicit_forward.1} parent=1 // pred_region
      _
    $region25: #{bb_for_tuta_explicit_forward.1} parent=1 // pred_fallthru
      _
    // Predicated region
    $region26: #{bb_for_tuta_explicit_forward.1} parent=1 // pred_check
      _
    $region27: #{bb_for_tuta_explicit_forward.1} parent=1 // pred_check_branch
      %34 = sbr.rel (0) target = $region29
    $region28: #{bb_for_tuta_explicit_forward.1} parent=1 // pred_region
      _
    $region29: #{bb_for_tuta_explicit_forward.1} parent=1 // pred_fallthru
      _
    // Predicated region
    $region30: #{bb_for_tuta_explicit_forward.1} parent=1 // pred_check
      _
    $region31: #{bb_for_tuta_explicit_forward.1} parent=1 // pred_check_branch
      %36 = sbr.rel (0) target = $region33
    $region32: #{bb_for_tuta_explicit_forward.1} parent=1 // pred_region
      _
    $region33: #{bb_for_tuta_explicit_forward.1} parent=1 // pred_fallthru
      _
    // Predicated region
    $region34: #{bb_for_tuta_explicit_forward.1} parent=1 // pred_check
      _
    $region35: #{bb_for_tuta_explicit_forward.1} parent=1 // pred_check_branch
      %38 = sbr.rel (0) target = $region37
    $region36: #{bb_for_tuta_explicit_forward.1} parent=1 // pred_region
      _
    $region37: #{bb_for_tuta_explicit_forward.1} parent=1 // pred_fallthru
      _
    // Predicated region
    $region38: #{bb_for_tuta_explicit_forward.1} parent=1 // pred_check
      _
    $region39: #{bb_for_tuta_explicit_forward.1} parent=1 // pred_check_branch
      %40 = sbr.rel (0) target = $region41
    $region40: #{bb_for_tuta_explicit_forward.1} parent=1 // pred_region
      _
    $region41: #{bb_for_tuta_explicit_forward.1} parent=1 // pred_fallthru
      _
    // Predicated region
    $region42: #{bb_for_tuta_explicit_forward.1} parent=1 // pred_check
      _
    $region43: #{bb_for_tuta_explicit_forward.1} parent=1 // pred_check_branch
      %42 = sbr.rel (0) target = $region45
    $region44: #{bb_for_tuta_explicit_forward.1} parent=1 // pred_region
      _
    $region45: #{bb_for_tuta_explicit_forward.1} parent=1 // pred_fallthru
      _
    // Predicated region
    $region46: #{bb_for_tuta_explicit_forward.1} parent=1 // pred_check
      _
    $region47: #{bb_for_tuta_explicit_forward.1} parent=1 // pred_check_branch
      %44 = sbr.rel (0) target = $region49
    $region48: #{bb_for_tuta_explicit_forward.1} parent=1 // pred_region
      _
    $region49: #{bb_for_tuta_explicit_forward.1} parent=1 // pred_fallthru
      _
    // Predicated region
    $region50: #{bb_for_tuta_explicit_forward.1} parent=1 // pred_check
      _
    $region51: #{bb_for_tuta_explicit_forward.1} parent=1 // pred_check_branch
      %46 = sbr.rel (0) target = $region53
    $region52: #{bb_for_tuta_explicit_forward.1} parent=1 // pred_region
      _
    $region53: #{bb_for_tuta_explicit_forward.1} parent=1 // pred_fallthru
      _
    // Predicated region
    $region54: #{bb_for_tuta_explicit_forward.1} parent=1 // pred_check
      _
    $region55: #{bb_for_tuta_explicit_forward.1} parent=1 // pred_check_branch
      %48 = sbr.rel (0) target = $region57
    $region56: #{bb_for_tuta_explicit_forward.1} parent=1 // pred_region
      _
    $region57: #{bb_for_tuta_explicit_forward.1} parent=1 // pred_fallthru
      _
    // Predicated region
    $region58: #{bb_for_tuta_explicit_forward.1} parent=1 // pred_check
      _
    $region59: #{bb_for_tuta_explicit_forward.1} parent=1 // pred_check_branch
      %50 = sbr.rel (0) target = $region61
    $region60: #{bb_for_tuta_explicit_forward.1} parent=1 // pred_region
      _
    $region61: #{bb_for_tuta_explicit_forward.1} parent=1 // pred_fallthru
      _
    %v52 = vld [vmem:[%s0] sm:$0xff]
    %v53 = vld [vmem:[%s0 + $0x8] sm:$0xff]
    %v54 = vld [vmem:[%s0 + $0x10] sm:$0xff]
    %v55 = vld [vmem:[%s0 + $0x18] sm:$0xff]
    %v56 = vlaneseq
    %v57 = vand.u32 %v56, 127
    %v58 = vadd.s32 %v57, 128
    %59 = vset.pattern.permute.xlu0 0
    %60 = vperm.xlu0 %59, %v52
    %v61 = vpop.permute.xlu0 %60
    %62 = vset.pattern.permute.xlu0 0
    %63 = vperm.xlu0 %62, %v53
    %v64 = vpop.permute.xlu0 %63
    %65 = vset.pattern.permute.xlu0 0
    %66 = vperm.xlu0 %65, %v54
    %v67 = vpop.permute.xlu0 %66
    %68 = vset.pattern.permute.xlu0 0
    %69 = vperm.xlu0 %68, %v55
    %v70 = vpop.permute.xlu0 %69
    %vm71 = vcmp.eq.s32.totalorder %v57, %v61
    %vm72 = vcmp.eq.s32.totalorder %v58, %v61
    %vm73 = vcmp.eq.s32.totalorder %v57, %v64
    %vm74 = vcmp.eq.s32.totalorder %v58, %v64
    %vm75 = vcmp.eq.s32.totalorder %v57, %v67
    %vm76 = vcmp.eq.s32.totalorder %v58, %v67
    %vm77 = vcmp.eq.s32.totalorder %v57, %v70
    %vm78 = vcmp.eq.s32.totalorder %v58, %v70
    %v79 = vsel %vm71, 1, 0
    %v80 = vsel %vm72, 1, 0
    %v81 = vsel %vm73, 1, 0
    %v82 = vsel %vm74, 1, 0
    %v83 = vsel %vm75, 1, 0
    %v84 = vsel %vm76, 1, 0
    %v85 = vsel %vm77, 1, 0
    %v86 = vsel %vm78, 1, 0
    %v87 = vcvt.s32.f32 %v79
    %v88 = vcvt.s32.f32 %v80
    %v89 = vcvt.s32.f32 %v81
    %v90 = vcvt.s32.f32 %v82
    %v91 = vcvt.s32.f32 %v83
    %v92 = vcvt.s32.f32 %v84
    %v93 = vcvt.s32.f32 %v85
    %v94 = vcvt.s32.f32 %v86
    %v95 = vadd.f32 %v87, 0.0
    %v96 = vadd.f32 %v88, 0.0
    %v97 = vadd.f32 %v89, 0.0
    %v98 = vadd.f32 %v90, 0.0
    %v99 = vadd.f32 %v91, 0.0
    %v100 = vadd.f32 %v92, 0.0
    %v101 = vadd.f32 %v93, 0.0
    %v102 = vadd.f32 %v94, 0.0
    %v103 = vadd.s32 %v52, 64
    %v104 = vadd.s32 %v53, 64
    %v105 = vadd.s32 %v54, 64
    %v106 = vadd.s32 %v55, 64
    %107 = vset.pattern.permute.xlu0 1
    %108 = vperm.xlu0 %107, %v103
    %v109 = vpop.permute.xlu0 %108
    %110 = vset.pattern.permute.xlu0 1
    %111 = vperm.xlu0 %110, %v104
    %v112 = vpop.permute.xlu0 %111
    %113 = vset.pattern.permute.xlu0 1
    %114 = vperm.xlu0 %113, %v105
    %v115 = vpop.permute.xlu0 %114
    %116 = vset.pattern.permute.xlu0 1
    %117 = vperm.xlu0 %116, %v106
    %v118 = vpop.permute.xlu0 %117
    %vm119 = vcmp.eq.s32.totalorder %v57, %v109
    %vm120 = vcmp.eq.s32.totalorder %v58, %v109
    %vm121 = vcmp.eq.s32.totalorder %v57, %v112
    %vm122 = vcmp.eq.s32.totalorder %v58, %v112
    %vm123 = vcmp.eq.s32.totalorder %v57, %v115
    %vm124 = vcmp.eq.s32.totalorder %v58, %v115
    %vm125 = vcmp.eq.s32.totalorder %v57, %v118
    %vm126 = vcmp.eq.s32.totalorder %v58, %v118
    %v127 = vsel %vm119, 1, 0
    %v128 = vsel %vm120, 1, 0
    %v129 = vsel %vm121, 1, 0
    %v130 = vsel %vm122, 1, 0
    %v131 = vsel %vm123, 1, 0
    %v132 = vsel %vm124, 1, 0
    %v133 = vsel %vm125, 1, 0
    %v134 = vsel %vm126, 1, 0
    %v135 = vcvt.s32.f32 %v127
    %v136 = vcvt.s32.f32 %v128
    %v137 = vcvt.s32.f32 %v129
    %v138 = vcvt.s32.f32 %v130
    %v139 = vcvt.s32.f32 %v131
    %v140 = vcvt.s32.f32 %v132
    %v141 = vcvt.s32.f32 %v133
    %v142 = vcvt.s32.f32 %v134
    %v143 = vadd.f32 %v95, %v135
    %v144 = vadd.f32 %v96, %v136
    %v145 = vadd.f32 %v97, %v137
    %v146 = vadd.f32 %v98, %v138
    %v147 = vadd.f32 %v99, %v139
    %v148 = vadd.f32 %v100, %v140
    %v149 = vadd.f32 %v101, %v141
    %v150 = vadd.f32 %v102, %v142
    %v151 = vadd.s32 %v52, 76
    %v152 = vadd.s32 %v53, 76
    %v153 = vadd.s32 %v54, 76
    %v154 = vadd.s32 %v55, 76
    %155 = vset.pattern.permute.xlu0 2
    %156 = vperm.xlu0 %155, %v151
    %v157 = vpop.permute.xlu0 %156
    %158 = vset.pattern.permute.xlu0 2
    %159 = vperm.xlu0 %158, %v152
    %v160 = vpop.permute.xlu0 %159
    %161 = vset.pattern.permute.xlu0 2
    %162 = vperm.xlu0 %161, %v153
    %v163 = vpop.permute.xlu0 %162
    %164 = vset.pattern.permute.xlu0 2
    %165 = vperm.xlu0 %164, %v154
    %v166 = vpop.permute.xlu0 %165
    %vm167 = vcmp.eq.s32.totalorder %v57, %v157
    %vm168 = vcmp.eq.s32.totalorder %v58, %v157
    %vm169 = vcmp.eq.s32.totalorder %v57, %v160
    %vm170 = vcmp.eq.s32.totalorder %v58, %v160
    %vm171 = vcmp.eq.s32.totalorder %v57, %v163
    %vm172 = vcmp.eq.s32.totalorder %v58, %v163
    %vm173 = vcmp.eq.s32.totalorder %v57, %v166
    %vm174 = vcmp.eq.s32.totalorder %v58, %v166
    %v175 = vsel %vm167, 1, 0
    %v176 = vsel %vm168, 1, 0
    %v177 = vsel %vm169, 1, 0
    %v178 = vsel %vm170, 1, 0
    %v179 = vsel %vm171, 1, 0
    %v180 = vsel %vm172, 1, 0
    %v181 = vsel %vm173, 1, 0
    %v182 = vsel %vm174, 1, 0
    %v183 = vcvt.s32.f32 %v175
    %v184 = vcvt.s32.f32 %v176
    %v185 = vcvt.s32.f32 %v177
    %v186 = vcvt.s32.f32 %v178
    %v187 = vcvt.s32.f32 %v179
    %v188 = vcvt.s32.f32 %v180
    %v189 = vcvt.s32.f32 %v181
    %v190 = vcvt.s32.f32 %v182
    %v191 = vadd.f32 %v143, %v183
    %v192 = vadd.f32 %v144, %v184
    %v193 = vadd.f32 %v145, %v185
    %v194 = vadd.f32 %v146, %v186
    %v195 = vadd.f32 %v147, %v187
    %v196 = vadd.f32 %v148, %v188
    %v197 = vadd.f32 %v149, %v189
    %v198 = vadd.f32 %v150, %v190
    %v199 = vadd.s32 %v52, 88
    %v200 = vadd.s32 %v53, 88
    %v201 = vadd.s32 %v54, 88
    %v202 = vadd.s32 %v55, 88
    %203 = vset.pattern.permute.xlu0 3
    %204 = vperm.xlu0 %203, %v199
    %v205 = vpop.permute.xlu0 %204
    %206 = vset.pattern.permute.xlu0 3
    %207 = vperm.xlu0 %206, %v200
    %v208 = vpop.permute.xlu0 %207
    %209 = vset.pattern.permute.xlu0 3
    %210 = vperm.xlu0 %209, %v201
    %v211 = vpop.permute.xlu0 %210
    %212 = vset.pattern.permute.xlu0 3
    %213 = vperm.xlu0 %212, %v202
    %v214 = vpop.permute.xlu0 %213
    %vm215 = vcmp.eq.s32.totalorder %v57, %v205
    %vm216 = vcmp.eq.s32.totalorder %v58, %v205
    %vm217 = vcmp.eq.s32.totalorder %v57, %v208
    %vm218 = vcmp.eq.s32.totalorder %v58, %v208
    %vm219 = vcmp.eq.s32.totalorder %v57, %v211
    %vm220 = vcmp.eq.s32.totalorder %v58, %v211
    %vm221 = vcmp.eq.s32.totalorder %v57, %v214
    %vm222 = vcmp.eq.s32.totalorder %v58, %v214
    %v223 = vsel %vm215, 1, 0
    %v224 = vsel %vm216, 1, 0
    %v225 = vsel %vm217, 1, 0
    %v226 = vsel %vm218, 1, 0
    %v227 = vsel %vm219, 1, 0
    %v228 = vsel %vm220, 1, 0
    %v229 = vsel %vm221, 1, 0
    %v230 = vsel %vm222, 1, 0
    %v231 = vcvt.s32.f32 %v223
    %v232 = vcvt.s32.f32 %v224
    %v233 = vcvt.s32.f32 %v225
    %v234 = vcvt.s32.f32 %v226
    %v235 = vcvt.s32.f32 %v227
    %v236 = vcvt.s32.f32 %v228
    %v237 = vcvt.s32.f32 %v229
    %v238 = vcvt.s32.f32 %v230
    %v239 = vadd.f32 %v191, %v231
    %v240 = vadd.f32 %v192, %v232
    %v241 = vadd.f32 %v193, %v233
    %v242 = vadd.f32 %v194, %v234
    %v243 = vadd.f32 %v195, %v235
    %v244 = vadd.f32 %v196, %v236
    %v245 = vadd.f32 %v197, %v237
    %v246 = vadd.f32 %v198, %v238
    %v247 = vadd.s32 %v52, 100
    %v248 = vadd.s32 %v53, 100
    %v249 = vadd.s32 %v54, 100
    %v250 = vadd.s32 %v55, 100
    %251 = vset.pattern.permute.xlu0 4
    %252 = vperm.xlu0 %251, %v247
    %v253 = vpop.permute.xlu0 %252
    %254 = vset.pattern.permute.xlu0 4
    %255 = vperm.xlu0 %254, %v248
    %v256 = vpop.permute.xlu0 %255
    %257 = vset.pattern.permute.xlu0 4
    %258 = vperm.xlu0 %257, %v249
    %v259 = vpop.permute.xlu0 %258
    %260 = vset.pattern.permute.xlu0 4
    %261 = vperm.xlu0 %260, %v250
    %v262 = vpop.permute.xlu0 %261
    %vm263 = vcmp.eq.s32.totalorder %v57, %v253
    %vm264 = vcmp.eq.s32.totalorder %v58, %v253
    %vm265 = vcmp.eq.s32.totalorder %v57, %v256
    %vm266 = vcmp.eq.s32.totalorder %v58, %v256
    %vm267 = vcmp.eq.s32.totalorder %v57, %v259
    %vm268 = vcmp.eq.s32.totalorder %v58, %v259
    %vm269 = vcmp.eq.s32.totalorder %v57, %v262
    %vm270 = vcmp.eq.s32.totalorder %v58, %v262
    %v271 = vsel %vm263, 1, 0
    %v272 = vsel %vm264, 1, 0
    %v273 = vsel %vm265, 1, 0
    %v274 = vsel %vm266, 1, 0
    %v275 = vsel %vm267, 1, 0
    %v276 = vsel %vm268, 1, 0
    %v277 = vsel %vm269, 1, 0
    %v278 = vsel %vm270, 1, 0
    %v279 = vcvt.s32.f32 %v271
    %v280 = vcvt.s32.f32 %v272
    %v281 = vcvt.s32.f32 %v273
    %v282 = vcvt.s32.f32 %v274
    %v283 = vcvt.s32.f32 %v275
    %v284 = vcvt.s32.f32 %v276
    %v285 = vcvt.s32.f32 %v277
    %v286 = vcvt.s32.f32 %v278
    %v287 = vadd.f32 %v239, %v279
    %v288 = vadd.f32 %v240, %v280
    %v289 = vadd.f32 %v241, %v281
    %v290 = vadd.f32 %v242, %v282
    %v291 = vadd.f32 %v243, %v283
    %v292 = vadd.f32 %v244, %v284
    %v293 = vadd.f32 %v245, %v285
    %v294 = vadd.f32 %v246, %v286
    %v295 = vadd.s32 %v52, 112
    %v296 = vadd.s32 %v53, 112
    %v297 = vadd.s32 %v54, 112
    %v298 = vadd.s32 %v55, 112
    %299 = vset.pattern.permute.xlu0 5
    %300 = vperm.xlu0 %299, %v295
    %v301 = vpop.permute.xlu0 %300
    %302 = vset.pattern.permute.xlu0 5
    %303 = vperm.xlu0 %302, %v296
    %v304 = vpop.permute.xlu0 %303
    %305 = vset.pattern.permute.xlu0 5
    %306 = vperm.xlu0 %305, %v297
    %v307 = vpop.permute.xlu0 %306
    %308 = vset.pattern.permute.xlu0 5
    %309 = vperm.xlu0 %308, %v298
    %v310 = vpop.permute.xlu0 %309
    %vm311 = vcmp.eq.s32.totalorder %v57, %v301
    %vm312 = vcmp.eq.s32.totalorder %v58, %v301
    %vm313 = vcmp.eq.s32.totalorder %v57, %v304
    %vm314 = vcmp.eq.s32.totalorder %v58, %v304
    %vm315 = vcmp.eq.s32.totalorder %v57, %v307
    %vm316 = vcmp.eq.s32.totalorder %v58, %v307
    %vm317 = vcmp.eq.s32.totalorder %v57, %v310
    %vm318 = vcmp.eq.s32.totalorder %v58, %v310
    %v319 = vsel %vm311, 1, 0
    %v320 = vsel %vm312, 1, 0
    %v321 = vsel %vm313, 1, 0
    %v322 = vsel %vm314, 1, 0
    %v323 = vsel %vm315, 1, 0
    %v324 = vsel %vm316, 1, 0
    %v325 = vsel %vm317, 1, 0
    %v326 = vsel %vm318, 1, 0
    %v327 = vcvt.s32.f32 %v319
    %v328 = vcvt.s32.f32 %v320
    %v329 = vcvt.s32.f32 %v321
    %v330 = vcvt.s32.f32 %v322
    %v331 = vcvt.s32.f32 %v323
    %v332 = vcvt.s32.f32 %v324
    %v333 = vcvt.s32.f32 %v325
    %v334 = vcvt.s32.f32 %v326
    %v335 = vadd.f32 %v287, %v327
    %v336 = vadd.f32 %v288, %v328
    %v337 = vadd.f32 %v289, %v329
    %v338 = vadd.f32 %v290, %v330
    %v339 = vadd.f32 %v291, %v331
    %v340 = vadd.f32 %v292, %v332
    %v341 = vadd.f32 %v293, %v333
    %v342 = vadd.f32 %v294, %v334
    %v343 = vadd.s32 %v52, 128
    %v344 = vadd.s32 %v53, 128
    %v345 = vadd.s32 %v54, 128
    %v346 = vadd.s32 %v55, 128
    %347 = vset.pattern.permute.xlu0 6
    %348 = vperm.xlu0 %347, %v343
    %v349 = vpop.permute.xlu0 %348
    %350 = vset.pattern.permute.xlu0 6
    %351 = vperm.xlu0 %350, %v344
    %v352 = vpop.permute.xlu0 %351
    %353 = vset.pattern.permute.xlu0 6
    %354 = vperm.xlu0 %353, %v345
    %v355 = vpop.permute.xlu0 %354
    %356 = vset.pattern.permute.xlu0 6
    %357 = vperm.xlu0 %356, %v346
    %v358 = vpop.permute.xlu0 %357
    %vm359 = vcmp.eq.s32.totalorder %v57, %v349
    %vm360 = vcmp.eq.s32.totalorder %v58, %v349
    %vm361 = vcmp.eq.s32.totalorder %v57, %v352
    %vm362 = vcmp.eq.s32.totalorder %v58, %v352
    %vm363 = vcmp.eq.s32.totalorder %v57, %v355
    %vm364 = vcmp.eq.s32.totalorder %v58, %v355
    %vm365 = vcmp.eq.s32.totalorder %v57, %v358
    %vm366 = vcmp.eq.s32.totalorder %v58, %v358
    %v367 = vsel %vm359, 1, 0
    %v368 = vsel %vm360, 1, 0
    %v369 = vsel %vm361, 1, 0
    %v370 = vsel %vm362, 1, 0
    %v371 = vsel %vm363, 1, 0
    %v372 = vsel %vm364, 1, 0
    %v373 = vsel %vm365, 1, 0
    %v374 = vsel %vm366, 1, 0
    %v375 = vcvt.s32.f32 %v367
    %v376 = vcvt.s32.f32 %v368
    %v377 = vcvt.s32.f32 %v369
    %v378 = vcvt.s32.f32 %v370
    %v379 = vcvt.s32.f32 %v371
    %v380 = vcvt.s32.f32 %v372
    %v381 = vcvt.s32.f32 %v373
    %v382 = vcvt.s32.f32 %v374
    %v383 = vadd.f32 %v335, %v375
    %v384 = vadd.f32 %v336, %v376
    %v385 = vadd.f32 %v337, %v377
    %v386 = vadd.f32 %v338, %v378
    %v387 = vadd.f32 %v339, %v379
    %v388 = vadd.f32 %v340, %v380
    %v389 = vadd.f32 %v341, %v381
    %v390 = vadd.f32 %v342, %v382
    %v391 = vadd.s32 %v52, 160
    %v392 = vadd.s32 %v53, 160
    %v393 = vadd.s32 %v54, 160
    %v394 = vadd.s32 %v55, 160
    %395 = vset.pattern.permute.xlu0 7
    %396 = vperm.xlu0 %395, %v391
    %v397 = vpop.permute.xlu0 %396
    %398 = vset.pattern.permute.xlu0 7
    %399 = vperm.xlu0 %398, %v392
    %v400 = vpop.permute.xlu0 %399
    %401 = vset.pattern.permute.xlu0 7
    %402 = vperm.xlu0 %401, %v393
    %v403 = vpop.permute.xlu0 %402
    %404 = vset.pattern.permute.xlu0 7
    %405 = vperm.xlu0 %404, %v394
    %v406 = vpop.permute.xlu0 %405
    %vm407 = vcmp.eq.s32.totalorder %v57, %v397
    %vm408 = vcmp.eq.s32.totalorder %v58, %v397
    %vm409 = vcmp.eq.s32.totalorder %v57, %v400
    %vm410 = vcmp.eq.s32.totalorder %v58, %v400
    %vm411 = vcmp.eq.s32.totalorder %v57, %v403
    %vm412 = vcmp.eq.s32.totalorder %v58, %v403
    %vm413 = vcmp.eq.s32.totalorder %v57, %v406
    %vm414 = vcmp.eq.s32.totalorder %v58, %v406
    %v415 = vsel %vm407, 1, 0
    %v416 = vsel %vm408, 1, 0
    %v417 = vsel %vm409, 1, 0
    %v418 = vsel %vm410, 1, 0
    %v419 = vsel %vm411, 1, 0
    %v420 = vsel %vm412, 1, 0
    %v421 = vsel %vm413, 1, 0
    %v422 = vsel %vm414, 1, 0
    %v423 = vcvt.s32.f32 %v415
    %v424 = vcvt.s32.f32 %v416
    %v425 = vcvt.s32.f32 %v417
    %v426 = vcvt.s32.f32 %v418
    %v427 = vcvt.s32.f32 %v419
    %v428 = vcvt.s32.f32 %v420
    %v429 = vcvt.s32.f32 %v421
    %v430 = vcvt.s32.f32 %v422
    %v431 = vadd.f32 %v383, %v423
    %v432 = vadd.f32 %v384, %v424
    %v433 = vadd.f32 %v385, %v425
    %v434 = vadd.f32 %v386, %v426
    %v435 = vadd.f32 %v387, %v427
    %v436 = vadd.f32 %v388, %v428
    %v437 = vadd.f32 %v389, %v429
    %v438 = vadd.f32 %v390, %v430
    %v439 = vld [vmem:[%s2] sm:$0xff]
    %v440 = vld [vmem:[%s2 + $0x8] sm:$0xff]
    %v441 = vld [vmem:[%s2 + $0x10] sm:$0xff]
    %v442 = vld [vmem:[%s2 + $0x18] sm:$0xff]
    %443 = vset.pattern.permute.xlu0 0
    %444 = vperm.xlu0 %443, %v439
    %v445 = vpop.permute.xlu0 %444
    %446 = vset.pattern.permute.xlu0 0
    %447 = vperm.xlu0 %446, %v440
    %v448 = vpop.permute.xlu0 %447
    %449 = vset.pattern.permute.xlu0 0
    %450 = vperm.xlu0 %449, %v441
    %v451 = vpop.permute.xlu0 %450
    %452 = vset.pattern.permute.xlu0 0
    %453 = vperm.xlu0 %452, %v442
    %v454 = vpop.permute.xlu0 %453
    %vm455 = vcmp.eq.s32.totalorder %v57, %v445
    %vm456 = vcmp.eq.s32.totalorder %v57, %v448
    %vm457 = vcmp.eq.s32.totalorder %v57, %v451
    %vm458 = vcmp.eq.s32.totalorder %v57, %v454
    %v459 = vsel %vm455, 1, 0
    %v460 = vsel %vm456, 1, 0
    %v461 = vsel %vm457, 1, 0
    %v462 = vsel %vm458, 1, 0
    %v463 = vcvt.s32.f32 %v459
    %v464 = vcvt.s32.f32 %v460
    %v465 = vcvt.s32.f32 %v461
    %v466 = vcvt.s32.f32 %v462
    %v467 = vmax.f32 %v463, 0.0
    %v468 = vmax.f32 %v464, 0.0
    %v469 = vmax.f32 %v465, 0.0
    %v470 = vmax.f32 %v466, 0.0
    %471 = vset.pattern.permute.xlu0 1
    %472 = vperm.xlu0 %471, %v439
    %v473 = vpop.permute.xlu0 %472
    %474 = vset.pattern.permute.xlu0 1
    %475 = vperm.xlu0 %474, %v440
    %v476 = vpop.permute.xlu0 %475
    %477 = vset.pattern.permute.xlu0 1
    %478 = vperm.xlu0 %477, %v441
    %v479 = vpop.permute.xlu0 %478
    %480 = vset.pattern.permute.xlu0 1
    %481 = vperm.xlu0 %480, %v442
    %v482 = vpop.permute.xlu0 %481
    %vm483 = vcmp.eq.s32.totalorder %v57, %v473
    %vm484 = vcmp.eq.s32.totalorder %v57, %v476
    %vm485 = vcmp.eq.s32.totalorder %v57, %v479
    %vm486 = vcmp.eq.s32.totalorder %v57, %v482
    %v487 = vsel %vm483, 1, 0
    %v488 = vsel %vm484, 1, 0
    %v489 = vsel %vm485, 1, 0
    %v490 = vsel %vm486, 1, 0
    %v491 = vcvt.s32.f32 %v487
    %v492 = vcvt.s32.f32 %v488
    %v493 = vcvt.s32.f32 %v489
    %v494 = vcvt.s32.f32 %v490
    %v495 = vmax.f32 %v467, %v491
    %v496 = vmax.f32 %v468, %v492
    %v497 = vmax.f32 %v469, %v493
    %v498 = vmax.f32 %v470, %v494
    %499 = vset.pattern.permute.xlu0 2
    %500 = vperm.xlu0 %499, %v439
    %v501 = vpop.permute.xlu0 %500
    %502 = vset.pattern.permute.xlu0 2
    %503 = vperm.xlu0 %502, %v440
    %v504 = vpop.permute.xlu0 %503
    %505 = vset.pattern.permute.xlu0 2
    %506 = vperm.xlu0 %505, %v441
    %v507 = vpop.permute.xlu0 %506
    %508 = vset.pattern.permute.xlu0 2
    %509 = vperm.xlu0 %508, %v442
    %v510 = vpop.permute.xlu0 %509
    %vm511 = vcmp.eq.s32.totalorder %v57, %v501
    %vm512 = vcmp.eq.s32.totalorder %v57, %v504
    %vm513 = vcmp.eq.s32.totalorder %v57, %v507
    %vm514 = vcmp.eq.s32.totalorder %v57, %v510
    %v515 = vsel %vm511, 1, 0
    %v516 = vsel %vm512, 1, 0
    %v517 = vsel %vm513, 1, 0
    %v518 = vsel %vm514, 1, 0
    %v519 = vcvt.s32.f32 %v515
    %v520 = vcvt.s32.f32 %v516
    %v521 = vcvt.s32.f32 %v517
    %v522 = vcvt.s32.f32 %v518
    %v523 = vmax.f32 %v495, %v519
    %v524 = vmax.f32 %v496, %v520
    %v525 = vmax.f32 %v497, %v521
    %v526 = vmax.f32 %v498, %v522
    %527 = vset.pattern.permute.xlu0 3
    %528 = vperm.xlu0 %527, %v439
    %v529 = vpop.permute.xlu0 %528
    %530 = vset.pattern.permute.xlu0 3
    %531 = vperm.xlu0 %530, %v440
    %v532 = vpop.permute.xlu0 %531
    %533 = vset.pattern.permute.xlu0 3
    %534 = vperm.xlu0 %533, %v441
    %v535 = vpop.permute.xlu0 %534
    %536 = vset.pattern.permute.xlu0 3
    %537 = vperm.xlu0 %536, %v442
    %v538 = vpop.permute.xlu0 %537
    %vm539 = vcmp.eq.s32.totalorder %v57, %v529
    %vm540 = vcmp.eq.s32.totalorder %v57, %v532
    %vm541 = vcmp.eq.s32.totalorder %v57, %v535
    %vm542 = vcmp.eq.s32.totalorder %v57, %v538
    %v543 = vsel %vm539, 1, 0
    %v544 = vsel %vm540, 1, 0
    %v545 = vsel %vm541, 1, 0
    %v546 = vsel %vm542, 1, 0
    %v547 = vcvt.s32.f32 %v543
    %v548 = vcvt.s32.f32 %v544
    %v549 = vcvt.s32.f32 %v545
    %v550 = vcvt.s32.f32 %v546
    %v551 = vmax.f32 %v523, %v547
    %v552 = vmax.f32 %v524, %v548
    %v553 = vmax.f32 %v525, %v549
    %v554 = vmax.f32 %v526, %v550
    %v555 = vld [vmem:[%s3] sm:$0xff]
    %v556 = vld [vmem:[%s3 + $0x8] sm:$0xff]
    %v557 = vld [vmem:[%s3 + $0x10] sm:$0xff]
    %v558 = vld [vmem:[%s3 + $0x18] sm:$0xff]
    %559 = vset.pattern.permute.xlu0 0
    %560 = vperm.xlu0 %559, %v555
    %v561 = vpop.permute.xlu0 %560
    %562 = vset.pattern.permute.xlu0 0
    %563 = vperm.xlu0 %562, %v556
    %v564 = vpop.permute.xlu0 %563
    %565 = vset.pattern.permute.xlu0 0
    %566 = vperm.xlu0 %565, %v557
    %v567 = vpop.permute.xlu0 %566
    %568 = vset.pattern.permute.xlu0 0
    %569 = vperm.xlu0 %568, %v558
    %v570 = vpop.permute.xlu0 %569
    %vm571 = vcmp.eq.s32.totalorder %v57, %v561
    %vm572 = vcmp.eq.s32.totalorder %v57, %v564
    %vm573 = vcmp.eq.s32.totalorder %v57, %v567
    %vm574 = vcmp.eq.s32.totalorder %v57, %v570
    %v575 = vsel %vm571, 1, 0
    %v576 = vsel %vm572, 1, 0
    %v577 = vsel %vm573, 1, 0
    %v578 = vsel %vm574, 1, 0
    %v579 = vcvt.s32.f32 %v575
    %v580 = vcvt.s32.f32 %v576
    %v581 = vcvt.s32.f32 %v577
    %v582 = vcvt.s32.f32 %v578
    %v583 = vmax.f32 %v579, 0.0
    %v584 = vmax.f32 %v580, 0.0
    %v585 = vmax.f32 %v581, 0.0
    %v586 = vmax.f32 %v582, 0.0
    %587 = vset.pattern.permute.xlu0 1
    %588 = vperm.xlu0 %587, %v555
    %v589 = vpop.permute.xlu0 %588
    %590 = vset.pattern.permute.xlu0 1
    %591 = vperm.xlu0 %590, %v556
    %v592 = vpop.permute.xlu0 %591
    %593 = vset.pattern.permute.xlu0 1
    %594 = vperm.xlu0 %593, %v557
    %v595 = vpop.permute.xlu0 %594
    %596 = vset.pattern.permute.xlu0 1
    %597 = vperm.xlu0 %596, %v558
    %v598 = vpop.permute.xlu0 %597
    %vm599 = vcmp.eq.s32.totalorder %v57, %v589
    %vm600 = vcmp.eq.s32.totalorder %v57, %v592
    %vm601 = vcmp.eq.s32.totalorder %v57, %v595
    %vm602 = vcmp.eq.s32.totalorder %v57, %v598
    %v603 = vsel %vm599, 1, 0
    %v604 = vsel %vm600, 1, 0
    %v605 = vsel %vm601, 1, 0
    %v606 = vsel %vm602, 1, 0
    %v607 = vcvt.s32.f32 %v603
    %v608 = vcvt.s32.f32 %v604
    %v609 = vcvt.s32.f32 %v605
    %v610 = vcvt.s32.f32 %v606
    %v611 = vmax.f32 %v583, %v607
    %v612 = vmax.f32 %v584, %v608
    %v613 = vmax.f32 %v585, %v609
    %v614 = vmax.f32 %v586, %v610
    %615 = vset.pattern.permute.xlu0 2
    %616 = vperm.xlu0 %615, %v555
    %v617 = vpop.permute.xlu0 %616
    %618 = vset.pattern.permute.xlu0 2
    %619 = vperm.xlu0 %618, %v556
    %v620 = vpop.permute.xlu0 %619
    %621 = vset.pattern.permute.xlu0 2
    %622 = vperm.xlu0 %621, %v557
    %v623 = vpop.permute.xlu0 %622
    %624 = vset.pattern.permute.xlu0 2
    %625 = vperm.xlu0 %624, %v558
    %v626 = vpop.permute.xlu0 %625
    %vm627 = vcmp.eq.s32.totalorder %v57, %v617
    %vm628 = vcmp.eq.s32.totalorder %v57, %v620
    %vm629 = vcmp.eq.s32.totalorder %v57, %v623
    %vm630 = vcmp.eq.s32.totalorder %v57, %v626
    %v631 = vsel %vm627, 1, 0
    %v632 = vsel %vm628, 1, 0
    %v633 = vsel %vm629, 1, 0
    %v634 = vsel %vm630, 1, 0
    %v635 = vcvt.s32.f32 %v631
    %v636 = vcvt.s32.f32 %v632
    %v637 = vcvt.s32.f32 %v633
    %v638 = vcvt.s32.f32 %v634
    %v639 = vmax.f32 %v611, %v635
    %v640 = vmax.f32 %v612, %v636
    %v641 = vmax.f32 %v613, %v637
    %v642 = vmax.f32 %v614, %v638
    %643 = vset.pattern.permute.xlu0 3
    %644 = vperm.xlu0 %643, %v555
    %v645 = vpop.permute.xlu0 %644
    %646 = vset.pattern.permute.xlu0 3
    %647 = vperm.xlu0 %646, %v556
    %v648 = vpop.permute.xlu0 %647
    %649 = vset.pattern.permute.xlu0 3
    %650 = vperm.xlu0 %649, %v557
    %v651 = vpop.permute.xlu0 %650
    %652 = vset.pattern.permute.xlu0 3
    %653 = vperm.xlu0 %652, %v558
    %v654 = vpop.permute.xlu0 %653
    %vm655 = vcmp.eq.s32.totalorder %v57, %v645
    %vm656 = vcmp.eq.s32.totalorder %v57, %v648
    %vm657 = vcmp.eq.s32.totalorder %v57, %v651
    %vm658 = vcmp.eq.s32.totalorder %v57, %v654
    %v659 = vsel %vm655, 1, 0
    %v660 = vsel %vm656, 1, 0
    %v661 = vsel %vm657, 1, 0
    %v662 = vsel %vm658, 1, 0
    %v663 = vcvt.s32.f32 %v659
    %v664 = vcvt.s32.f32 %v660
    %v665 = vcvt.s32.f32 %v661
    %v666 = vcvt.s32.f32 %v662
    %v667 = vmax.f32 %v639, %v663
    %v668 = vmax.f32 %v640, %v664
    %v669 = vmax.f32 %v641, %v665
    %v670 = vmax.f32 %v642, %v666
    %675 = vrot.lane.b32.xlu0 %v667, 30
    %v676 = vpop.permute.xlu0 %675
    %677 = vrot.lane.b32.xlu0 %v668, 30
    %v678 = vpop.permute.xlu0 %677
    %679 = vrot.lane.b32.xlu0 %v669, 30
    %v680 = vpop.permute.xlu0 %679
    %681 = vrot.lane.b32.xlu0 %v670, 30
    %v682 = vpop.permute.xlu0 %681
    %vm687 = vcmask 244736
    %v688 = vsel %vm687, %v551, %v676
    %v689 = vsel %vm687, %v552, %v678
    %v690 = vsel %vm687, %v553, %v680
    %v691 = vsel %vm687, %v554, %v682
    %v692 = vpack.c.bf16 %v433, %v431
    %v693 = vpack.c.bf16 %v434, %v432
    %v694 = vpack.c.bf16 %v437, %v435
    %v695 = vpack.c.bf16 %v438, %v436
    %v696 = vld [vmem:[%s6] sm:$0xf]
    %v697 = vld [vmem:[%s6 + $0x4] sm:$0xf]
    %v698 = vld [vmem:[%s6 + $0x8] sm:$0xf]
    %v699 = vld [vmem:[%s6 + $0xc] sm:$0xf]
    %v700 = vld [vmem:[%s6 + $0x10] sm:$0xf]
    %v701 = vld [vmem:[%s6 + $0x14] sm:$0xf]
    %v702 = vld [vmem:[%s6 + $0x18] sm:$0xf]
    %v703 = vld [vmem:[%s6 + $0x1c] sm:$0xf]
    %v704 = vld [vmem:[%s6 + $0x20] sm:$0xf]
    %v705 = vld [vmem:[%s6 + $0x24] sm:$0xf]
    %v706 = vld [vmem:[%s6 + $0x28] sm:$0xf]
    %v707 = vld [vmem:[%s6 + $0x2c] sm:$0xf]
    %v708 = vld [vmem:[%s6 + $0x30] sm:$0xf]
    %v709 = vld [vmem:[%s6 + $0x34] sm:$0xf]
    %v710 = vld [vmem:[%s6 + $0x38] sm:$0xf]
    %v711 = vld [vmem:[%s6 + $0x3c] sm:$0xf]
    %v712 = vld [vmem:[%s6 + $0x40] sm:$0xf]
    %v713 = vld [vmem:[%s6 + $0x44] sm:$0xf]
    %v714 = vld [vmem:[%s6 + $0x48] sm:$0xf]
    %v715 = vld [vmem:[%s6 + $0x4c] sm:$0xf]
    %v716 = vld [vmem:[%s6 + $0x50] sm:$0xf]
    %v717 = vld [vmem:[%s6 + $0x54] sm:$0xf]
    %v718 = vld [vmem:[%s6 + $0x58] sm:$0xf]
    %v719 = vld [vmem:[%s6 + $0x5c] sm:$0xf]
    %v720 = vpack.c.bf16 %v689, %v688
    %v721 = vpack.c.bf16 %v691, %v690
    %v722 = vld [vmem:[%s7] sm:$0xf]
    %v723 = vld [vmem:[%s7 + $0x4] sm:$0xf]
    %v724 = vld [vmem:[%s7 + $0x8] sm:$0xf]
    %v725 = vld [vmem:[%s7 + $0xc] sm:$0xf]
    %v726 = vld [vmem:[%s7 + $0x10] sm:$0xf]
    %v727 = vld [vmem:[%s7 + $0x14] sm:$0xf]
    %v728 = vld [vmem:[%s7 + $0x18] sm:$0xf]
    %v729 = vld [vmem:[%s7 + $0x1c] sm:$0x3]
    %v738 = vunpack.c.l.b16 %v722
    %v739 = vunpack.c.l.b16 %v723
    %v740 = vunpack.c.l.b16 %v724
    %v741 = vunpack.c.l.b16 %v725
    %v742 = vunpack.c.l.b16 %v726
    %v743 = vunpack.c.l.b16 %v727
    %v744 = vunpack.c.l.b16 %v728
    %v745 = vunpack.c.l.b16 %v729
    %v746 = vpack.c.b16 %v739, %v738
    %v747 = vpack.c.b16 %v741, %v740
    %v748 = vpack.c.b16 %v743, %v742
    %v749 = vpack.c.b16 %v745, %v744
    %vm753 = vcmask 490496
    %v755 = vsel %vm753, %v720, 0
    %v758 = vsel %vm753, %v721, 0
    %vm760 = vcmask 1045504
    %v762 = vsel %vm760, %v749, 0
    %764 = vmatpush.bf16.msra.mxu0 0
    %765 = vmatpush.bf16.msra.mxu0 0
    %766 = vmatpush.bf16.msra.mxu0 0
    %767 = vmatpush.bf16.msra.mxu0 0
    %768 = vmatpush.bf16.msra.mxu0 %v762
    %769 = vmatpush.bf16.msra.mxu0 %v748
    %770 = vmatpush.bf16.msra.mxu0 %v747
    %771 = vmatpush.bf16.msra.mxu0 %v746
    %772 = vmatmul.bf16.gmra.mxu0 %v755
    %v773 = vpop.f32.mrf.mxu0
    %v774 = vadd.f32 0.0, %v773
    %v775 = vpop.f32.mrf.mxu0
    %v776 = vadd.f32 0.0, %v775
    %777 = vmatmul.bf16.gmra.mxu0 %v758
    %v778 = vpop.f32.mrf.mxu0
    %v779 = vadd.f32 0.0, %v778
    %v780 = vpop.f32.mrf.mxu0
    %v781 = vadd.f32 0.0, %v780
    %782 = vdwg.mxu0
    %v807 = vunpack.c.l.b16 %v696
    %v808 = vunpack.c.l.b16 %v697
    %v809 = vunpack.c.l.b16 %v698
    %v810 = vunpack.c.l.b16 %v699
    %v811 = vunpack.c.l.b16 %v700
    %v812 = vunpack.c.l.b16 %v701
    %v813 = vunpack.c.l.b16 %v702
    %v814 = vunpack.c.l.b16 %v703
    %v815 = vunpack.c.l.b16 %v704
    %v816 = vunpack.c.l.b16 %v705
    %v817 = vunpack.c.l.b16 %v706
    %v818 = vunpack.c.l.b16 %v707
    %v819 = vunpack.c.l.b16 %v708
    %v820 = vunpack.c.l.b16 %v709
    %v821 = vunpack.c.l.b16 %v710
    %v822 = vunpack.c.l.b16 %v711
    %v823 = vunpack.c.l.b16 %v712
    %v824 = vunpack.c.l.b16 %v713
    %v825 = vunpack.c.l.b16 %v714
    %v826 = vunpack.c.l.b16 %v715
    %v827 = vunpack.c.l.b16 %v716
    %v828 = vunpack.c.l.b16 %v717
    %v829 = vunpack.c.l.b16 %v718
    %v830 = vunpack.c.l.b16 %v719
    %v831 = vpack.c.b16 %v808, %v807
    %v832 = vpack.c.b16 %v810, %v809
    %v833 = vpack.c.b16 %v812, %v811
    %v834 = vpack.c.b16 %v814, %v813
    %v835 = vpack.c.b16 %v816, %v815
    %v836 = vpack.c.b16 %v818, %v817
    %v837 = vpack.c.b16 %v820, %v819
    %v838 = vpack.c.b16 %v822, %v821
    %v839 = vpack.c.b16 %v824, %v823
    %v840 = vpack.c.b16 %v826, %v825
    %v841 = vpack.c.b16 %v828, %v827
    %v842 = vpack.c.b16 %v830, %v829
    %vm855 = vcmask 523264
    %v857 = vsel %vm855, %v693, 0
    %v860 = vsel %vm855, %v695, 0
    %862 = vmatpush.bf16.msra.mxu0 %v838
    %863 = vmatpush.bf16.msra.mxu0 %v837
    %864 = vmatpush.bf16.msra.mxu0 %v836
    %865 = vmatpush.bf16.msra.mxu0 %v835
    %866 = vmatpush.bf16.msra.mxu0 %v834
    %867 = vmatpush.bf16.msra.mxu0 %v833
    %868 = vmatpush.bf16.msra.mxu0 %v832
    %869 = vmatpush.bf16.msra.mxu0 %v831
    %870 = vmatmul.bf16.gmra.mxu0 %v692
    %v871 = vpop.f32.mrf.mxu0
    %v872 = vadd.f32 %v774, %v871
    %v873 = vpop.f32.mrf.mxu0
    %v874 = vadd.f32 %v776, %v873
    %875 = vmatmul.bf16.gmra.mxu0 %v694
    %v876 = vpop.f32.mrf.mxu0
    %v877 = vadd.f32 %v779, %v876
    %v878 = vpop.f32.mrf.mxu0
    %v879 = vadd.f32 %v781, %v878
    %880 = vdwg.mxu0
    %881 = vmatpush.bf16.msra.mxu0 0
    %882 = vmatpush.bf16.msra.mxu0 0
    %883 = vmatpush.bf16.msra.mxu0 0
    %884 = vmatpush.bf16.msra.mxu0 0
    %885 = vmatpush.bf16.msra.mxu0 %v842
    %886 = vmatpush.bf16.msra.mxu0 %v841
    %887 = vmatpush.bf16.msra.mxu0 %v840
    %888 = vmatpush.bf16.msra.mxu0 %v839
    %889 = vmatmul.bf16.gmra.mxu0 %v857
    %v890 = vpop.f32.mrf.mxu0
    %v891 = vadd.f32 %v872, %v890
    %v892 = vpop.f32.mrf.mxu0
    %v893 = vadd.f32 %v874, %v892
    %894 = vmatmul.bf16.gmra.mxu0 %v860
    %v895 = vpop.f32.mrf.mxu0
    %v896 = vadd.f32 %v877, %v895
    %v897 = vpop.f32.mrf.mxu0
    %v898 = vadd.f32 %v879, %v897
    %899 = vdwg.mxu0
    %v900 = vld [vmem:[%s1] sm:$0xff]
    %v901 = vld [vmem:[%s1 + $0x8] sm:$0xff]
    %v902 = vld [vmem:[%s1 + $0x10] sm:$0xff]
    %v903 = vld [vmem:[%s1 + $0x18] sm:$0xff]
    %v904 = vpack.c.bf16 %v901, %v900
    %v905 = vpack.c.bf16 %v903, %v902
    %v906 = vld [vmem:[%s8] sm:$0xf]
    %v907 = vld [vmem:[%s8 + $0x4] sm:$0x3]
    %v910 = vunpack.c.l.b16 %v906
    %v911 = vunpack.c.l.b16 %v907
    %v912 = vpack.c.b16 %v911, %v910
    %vm913 = vcmask 89088
    %v915 = vsel %vm913, %v904, 0
    %v918 = vsel %vm913, %v905, 0
    %vm920 = vcmask 1044480
    %v921 = vsel %vm920, 4294967295, 65535
    %v922 = vsel %vm760, %v921, 0
    %v924 = vand.u32 %v912, %v922
    %926 = vmatpush.bf16.msra.mxu0 0
    %927 = vmatpush.bf16.msra.mxu0 0
    %928 = vmatpush.bf16.msra.mxu0 0
    %929 = vmatpush.bf16.msra.mxu0 0
    %930 = vmatpush.bf16.msra.mxu0 0
    %931 = vmatpush.bf16.msra.mxu0 0
    %932 = vmatpush.bf16.msra.mxu0 0
    %933 = vmatpush.bf16.msra.mxu0 %v924
    %934 = vmatmul.bf16.gmra.mxu0 %v915
    %v935 = vpop.f32.mrf.mxu0
    %v936 = vadd.f32 0.0, %v935
    %v937 = vpop.f32.mrf.mxu0
    %v938 = vadd.f32 0.0, %v937
    %939 = vmatmul.bf16.gmra.mxu0 %v918
    %v940 = vpop.f32.mrf.mxu0
    %v941 = vadd.f32 0.0, %v940
    %v942 = vpop.f32.mrf.mxu0
    %v943 = vadd.f32 0.0, %v942
    %944 = vdwg.mxu0
    %v945 = vadd.f32 %v891, %v936
    %v946 = vadd.f32 %v893, %v938
    %v947 = vadd.f32 %v896, %v941
    %v948 = vadd.f32 %v898, %v943
    %v949 = vld [vmem:[%s9] sm:$0x3]
    %vm950 = vcmask 261120
    %v951 = vsel %vm950, %v945, 0.0
    %952 = vadd.xlane.f32.xlu0 %v951
    %v953 = vpop.xlane.xlu0 %952
    %v954 = vsel %vm950, %v946, 0.0
    %955 = vadd.xlane.f32.xlu0 %v954
    %v956 = vpop.xlane.xlu0 %955
    %v957 = vsel %vm950, %v947, 0.0
    %958 = vadd.xlane.f32.xlu0 %v957
    %v959 = vpop.xlane.xlu0 %958
    %v960 = vsel %vm950, %v948, 0.0
    %961 = vadd.xlane.f32.xlu0 %v960
    %v962 = vpop.xlane.xlu0 %961
    %v963 = vrcp.pop 32.0
    %v964 = vmul.f32 32.0, %v963
    %v965 = vsub.f32 1.0, %v964
    %v966 = vmul.f32 %v963, %v965
    %v967 = vadd.f32 %v963, %v966
    %vm968 = vweird.f32 %v963
    %v969 = vsel %vm968, %v963, %v967
    %v970 = vmul.f32 %v953, %v969
    %v971 = vmul.f32 %v956, %v969
    %v972 = vmul.f32 %v959, %v969
    %v973 = vmul.f32 %v962, %v969
    %v974 = vsub.f32 %v945, %v970
    %v975 = vsub.f32 %v946, %v971
    %v976 = vsub.f32 %v947, %v972
    %v977 = vsub.f32 %v948, %v973
    %v978 = vmul.f32 %v974, %v974
    %v979 = vmul.f32 %v975, %v975
    %v980 = vmul.f32 %v976, %v976
    %v981 = vmul.f32 %v977, %v977
    %v982 = vsel %vm950, %v978, 0.0
    %983 = vadd.xlane.f32.xlu0 %v982
    %v984 = vpop.xlane.xlu0 %983
    %v985 = vsel %vm950, %v979, 0.0
    %986 = vadd.xlane.f32.xlu0 %v985
    %v987 = vpop.xlane.xlu0 %986
    %v988 = vsel %vm950, %v980, 0.0
    %989 = vadd.xlane.f32.xlu0 %v988
    %v990 = vpop.xlane.xlu0 %989
    %v991 = vsel %vm950, %v981, 0.0
    %992 = vadd.xlane.f32.xlu0 %v991
    %v993 = vpop.xlane.xlu0 %992
    %v994 = vmul.f32 %v984, %v969
    %v995 = vmul.f32 %v987, %v969
    %v996 = vmul.f32 %v990, %v969
    %v997 = vmul.f32 %v993, %v969
    %v998 = vadd.f32 %v994, 1e-06
    %v999 = vadd.f32 %v995, 1e-06
    %v1000 = vadd.f32 %v996, 1e-06
    %v1001 = vadd.f32 %v997, 1e-06
    %v1002 = vrsqrt.pop %v998
    %v1003 = vmul.f32 %v1002, %v998
    %v1004 = vmul.f32 %v1003, %v1002
    %v1005 = vmul.f32 0.5, %v1004
    %v1006 = vsub.f32 1.5, %v1005
    %v1007 = vmul.f32 %v1002, %v1006
    %vm1008 = vweird.f32 %v998
    %vm1009 = vweird.f32 %v1002
    %vm1010 = vmor %vm1008, %vm1009
    %v1011 = vsel %vm1010, %v1002, %v1007
    %v1012 = vrsqrt.pop %v999
    %v1013 = vmul.f32 %v1012, %v999
    %v1014 = vmul.f32 %v1013, %v1012
    %v1015 = vmul.f32 0.5, %v1014
    %v1016 = vsub.f32 1.5, %v1015
    %v1017 = vmul.f32 %v1012, %v1016
    %vm1018 = vweird.f32 %v999
    %vm1019 = vweird.f32 %v1012
    %vm1020 = vmor %vm1018, %vm1019
    %v1021 = vsel %vm1020, %v1012, %v1017
    %v1022 = vrsqrt.pop %v1000
    %v1023 = vmul.f32 %v1022, %v1000
    %v1024 = vmul.f32 %v1023, %v1022
    %v1025 = vmul.f32 0.5, %v1024
    %v1026 = vsub.f32 1.5, %v1025
    %v1027 = vmul.f32 %v1022, %v1026
    %vm1028 = vweird.f32 %v1000
    %vm1029 = vweird.f32 %v1022
    %vm1030 = vmor %vm1028, %vm1029
    %v1031 = vsel %vm1030, %v1022, %v1027
    %v1032 = vrsqrt.pop %v1001
    %v1033 = vmul.f32 %v1032, %v1001
    %v1034 = vmul.f32 %v1033, %v1032
    %v1035 = vmul.f32 0.5, %v1034
    %v1036 = vsub.f32 1.5, %v1035
    %v1037 = vmul.f32 %v1032, %v1036
    %vm1038 = vweird.f32 %v1001
    %vm1039 = vweird.f32 %v1032
    %vm1040 = vmor %vm1038, %vm1039
    %v1041 = vsel %vm1040, %v1032, %v1037
    %v1042 = vmul.f32 %v974, %v1011
    %v1043 = vmul.f32 %v975, %v1021
    %v1044 = vmul.f32 %v976, %v1031
    %v1045 = vmul.f32 %v977, %v1041
    %v1046 = vperm.slane %v949, 0
    %v1047 = vmul.f32 %v1042, %v1046
    %v1048 = vmul.f32 %v1043, %v1046
    %v1049 = vmul.f32 %v1044, %v1046
    %v1050 = vmul.f32 %v1045, %v1046
    %v1051 = vperm.slane %v949, 1
    %v1052 = vadd.f32 %v1047, %v1051
    %v1053 = vadd.f32 %v1048, %v1051
    %v1054 = vadd.f32 %v1049, %v1051
    %v1055 = vadd.f32 %v1050, %v1051
    %v1056 = vsub.f32 1.0, %v551
    %v1057 = vsub.f32 1.0, %v552
    %v1058 = vsub.f32 1.0, %v553
    %v1059 = vsub.f32 1.0, %v554
    %1064 = vrot.lane.b32.xlu0 %v1056, 30
    %v1065 = vpop.permute.xlu0 %1064
    %1066 = vrot.lane.b32.xlu0 %v1057, 30
    %v1067 = vpop.permute.xlu0 %1066
    %1068 = vrot.lane.b32.xlu0 %v1058, 30
    %v1069 = vpop.permute.xlu0 %1068
    %1070 = vrot.lane.b32.xlu0 %v1059, 30
    %v1071 = vpop.permute.xlu0 %1070
    %v1076 = vsel %vm687, %v551, %v1065
    %v1077 = vsel %vm687, %v552, %v1067
    %v1078 = vsel %vm687, %v553, %v1069
    %v1079 = vsel %vm687, %v554, %v1071
    %v1080 = vpack.c.bf16 %v1077, %v1076
    %v1081 = vpack.c.bf16 %v1079, %v1078
    %1086 = vrot.lane.b32.xlu0 %v551, 30
    %v1087 = vpop.permute.xlu0 %1086
    %1088 = vrot.lane.b32.xlu0 %v552, 30
    %v1089 = vpop.permute.xlu0 %1088
    %1090 = vrot.lane.b32.xlu0 %v553, 30
    %v1091 = vpop.permute.xlu0 %1090
    %1092 = vrot.lane.b32.xlu0 %v554, 30
    %v1093 = vpop.permute.xlu0 %1092
    %v1098 = vsel %vm687, %v1056, %v1087
    %v1099 = vsel %vm687, %v1057, %v1089
    %v1100 = vsel %vm687, %v1058, %v1091
    %v1101 = vsel %vm687, %v1059, %v1093
    %v1102 = vpack.c.bf16 %v1099, %v1098
    %v1103 = vpack.c.bf16 %v1101, %v1100
    %v1105 = vsel %vm753, %v1080, 0
    %v1108 = vsel %vm753, %v1081, 0
    %v1111 = vsel %vm753, %v1102, 0
    %v1114 = vsel %vm753, %v1103, 0
    %1116 = vmatpush.bf16.xpose.msra.mxu0 0
    %1117 = vmatpush.bf16.xpose.msra.mxu0 0
    %1118 = vmatpush.bf16.xpose.msra.mxu0 0
    %1119 = vmatpush.bf16.xpose.msra.mxu0 0
    %1120 = vmatpush.bf16.xpose.msra.mxu0 0
    %1121 = vmatpush.bf16.xpose.msra.mxu0 0
    %1122 = vmatpush.bf16.xpose.msra.mxu0 %v1114
    %1123 = vmatpush.bf16.xpose.msra.mxu0 %v1111
    %1124 = vmatmul.bf16.gmra.mxu0 %v1105
    %v1125 = vpop.f32.mrf.mxu0
    %v1126 = vadd.f32 0.0, %v1125
    %v1127 = vpop.f32.mrf.mxu0
    %v1128 = vadd.f32 0.0, %v1127
    %1129 = vmatmul.bf16.gmra.mxu0 %v1108
    %v1130 = vpop.f32.mrf.mxu0
    %v1131 = vadd.f32 0.0, %v1130
    %v1132 = vpop.f32.mrf.mxu0
    %v1133 = vadd.f32 0.0, %v1132
    %1134 = vdwg.mxu0
    %v1135 = vsub.f32 1.0, %v667
    %v1136 = vsub.f32 1.0, %v668
    %v1137 = vsub.f32 1.0, %v669
    %v1138 = vsub.f32 1.0, %v670
    %1143 = vrot.lane.b32.xlu0 %v1135, 30
    %v1144 = vpop.permute.xlu0 %1143
    %1145 = vrot.lane.b32.xlu0 %v1136, 30
    %v1146 = vpop.permute.xlu0 %1145
    %1147 = vrot.lane.b32.xlu0 %v1137, 30
    %v1148 = vpop.permute.xlu0 %1147
    %1149 = vrot.lane.b32.xlu0 %v1138, 30
    %v1150 = vpop.permute.xlu0 %1149
    %v1155 = vsel %vm687, %v667, %v1144
    %v1156 = vsel %vm687, %v668, %v1146
    %v1157 = vsel %vm687, %v669, %v1148
    %v1158 = vsel %vm687, %v670, %v1150
    %v1159 = vpack.c.bf16 %v1156, %v1155
    %v1160 = vpack.c.bf16 %v1158, %v1157
    %v1161 = vsel %vm687, %v1135, %v676
    %v1162 = vsel %vm687, %v1136, %v678
    %v1163 = vsel %vm687, %v1137, %v680
    %v1164 = vsel %vm687, %v1138, %v682
    %v1165 = vpack.c.bf16 %v1162, %v1161
    %v1166 = vpack.c.bf16 %v1164, %v1163
    %v1168 = vsel %vm753, %v1159, 0
    %v1171 = vsel %vm753, %v1160, 0
    %v1174 = vsel %vm753, %v1165, 0
    %v1177 = vsel %vm753, %v1166, 0
    %1179 = vmatpush.bf16.xpose.msra.mxu0 0
    %1180 = vmatpush.bf16.xpose.msra.mxu0 0
    %1181 = vmatpush.bf16.xpose.msra.mxu0 0
    %1182 = vmatpush.bf16.xpose.msra.mxu0 0
    %1183 = vmatpush.bf16.xpose.msra.mxu0 0
    %1184 = vmatpush.bf16.xpose.msra.mxu0 0
    %1185 = vmatpush.bf16.xpose.msra.mxu0 %v1177
    %1186 = vmatpush.bf16.xpose.msra.mxu0 %v1174
    %1187 = vmatmul.bf16.gmra.mxu0 %v1168
    %v1188 = vpop.f32.mrf.mxu0
    %v1189 = vadd.f32 0.0, %v1188
    %v1190 = vpop.f32.mrf.mxu0
    %v1191 = vadd.f32 0.0, %v1190
    %1192 = vmatmul.bf16.gmra.mxu0 %v1171
    %v1193 = vpop.f32.mrf.mxu0
    %v1194 = vadd.f32 0.0, %v1193
    %v1195 = vpop.f32.mrf.mxu0
    %v1196 = vadd.f32 0.0, %v1195
    %1197 = vdwg.mxu0
    %v1198 = vmax.f32 %v1126, %v1189
    %v1199 = vmax.f32 %v1128, %v1191
    %v1200 = vmax.f32 %v1131, %v1194
    %v1201 = vmax.f32 %v1133, %v1196
    %v1202 = vld [vmem:[%s4] sm:$0xff]
    %v1203 = vld [vmem:[%s4 + $0x8] sm:$0xff]
    %v1204 = vld [vmem:[%s4 + $0x10] sm:$0xff]
    %v1205 = vld [vmem:[%s4 + $0x18] sm:$0xff]
    %v1206 = vld [vmem:[%s5] sm:$0x3]
    %vm1207 = vcmp.eq.s32.totalorder %v1202, 4294967295
    %vm1208 = vcmp.eq.s32.totalorder %v1203, 4294967295
    %vm1209 = vcmp.eq.s32.totalorder %v1204, 4294967295
    %vm1210 = vcmp.eq.s32.totalorder %v1205, 4294967295
    %v1211 = vsel %vm1207, 1, 0
    %v1212 = vsel %vm1208, 1, 0
    %v1213 = vsel %vm1209, 1, 0
    %v1214 = vsel %vm1210, 1, 0
    %v1215 = vcvt.s32.f32 %v1211
    %v1216 = vcvt.s32.f32 %v1212
    %v1217 = vcvt.s32.f32 %v1213
    %v1218 = vcvt.s32.f32 %v1214
    %vm1219 = vcmp.eq.s32.totalorder %v1206, 4294967295
    %v1220 = vsel %vm1219, 1, 0
    %v1221 = vcvt.s32.f32 %v1220
    %1223 = vset.pattern.permute.xlu0 0
    %1224 = vperm.xlu0 %1223, %v1215
    %v1225 = vpop.permute.xlu0 %1224
    %1228 = vset.pattern.permute.xlu0 0
    %1229 = vperm.xlu0 %1228, %v1216
    %v1230 = vpop.permute.xlu0 %1229
    %1233 = vset.pattern.permute.xlu0 0
    %1234 = vperm.xlu0 %1233, %v1217
    %v1235 = vpop.permute.xlu0 %1234
    %1238 = vset.pattern.permute.xlu0 0
    %1239 = vperm.xlu0 %1238, %v1218
    %v1240 = vpop.permute.xlu0 %1239
    %v1242 = vperm.slane %v1221, 0
    %v1243 = vmax.f32 %v1225, %v1242
    %v1244 = vmax.f32 %v1230, %v1242
    %v1245 = vmax.f32 %v1235, %v1242
    %v1246 = vmax.f32 %v1240, %v1242
    %vm1247 = vcmp.eq.s32.totalorder %v1202, 0
    %vm1248 = vcmp.eq.s32.totalorder %v1203, 0
    %vm1249 = vcmp.eq.s32.totalorder %v1204, 0
    %vm1250 = vcmp.eq.s32.totalorder %v1205, 0
    %v1251 = vsel %vm1247, 1, 0
    %v1252 = vsel %vm1248, 1, 0
    %v1253 = vsel %vm1249, 1, 0
    %v1254 = vsel %vm1250, 1, 0
    %v1255 = vcvt.s32.f32 %v1251
    %v1256 = vcvt.s32.f32 %v1252
    %v1257 = vcvt.s32.f32 %v1253
    %v1258 = vcvt.s32.f32 %v1254
    %vm1259 = vcmp.eq.s32.totalorder %v1206, 0
    %v1260 = vsel %vm1259, 1, 0
    %v1261 = vcvt.s32.f32 %v1260
    %1263 = vset.pattern.permute.xlu0 0
    %1264 = vperm.xlu0 %1263, %v1255
    %v1265 = vpop.permute.xlu0 %1264
    %1268 = vset.pattern.permute.xlu0 0
    %1269 = vperm.xlu0 %1268, %v1256
    %v1270 = vpop.permute.xlu0 %1269
    %1273 = vset.pattern.permute.xlu0 0
    %1274 = vperm.xlu0 %1273, %v1257
    %v1275 = vpop.permute.xlu0 %1274
    %1278 = vset.pattern.permute.xlu0 0
    %1279 = vperm.xlu0 %1278, %v1258
    %v1280 = vpop.permute.xlu0 %1279
    %v1282 = vperm.slane %v1261, 0
    %v1283 = vmax.f32 %v1265, %v1282
    %v1284 = vmax.f32 %v1270, %v1282
    %v1285 = vmax.f32 %v1275, %v1282
    %v1286 = vmax.f32 %v1280, %v1282
    %v1287 = vmul.f32 %v1283, 100.0
    %v1288 = vmul.f32 %v1284, 100.0
    %v1289 = vmul.f32 %v1285, 100.0
    %v1290 = vmul.f32 %v1286, 100.0
    %v1291 = vmul.f32 %v1243, %v1198
    %v1292 = vmul.f32 %v1244, %v1199
    %v1293 = vmul.f32 %v1245, %v1200
    %v1294 = vmul.f32 %v1246, %v1201
    %v1295 = vsub.f32 %v1198, %v1291
    %v1296 = vsub.f32 %v1199, %v1292
    %v1297 = vsub.f32 %v1200, %v1293
    %v1298 = vsub.f32 %v1201, %v1294
    %v1299 = vadd.f32 %v1295, %v1287
    %v1300 = vadd.f32 %v1296, %v1288
    %v1301 = vadd.f32 %v1297, %v1289
    %v1302 = vadd.f32 %v1298, %v1290
    %vm1303 = vcmp.gt.s32.totalorder %v1202, 0
    %vm1304 = vcmp.gt.s32.totalorder %v1203, 0
    %vm1305 = vcmp.gt.s32.totalorder %v1204, 0
    %vm1306 = vcmp.gt.s32.totalorder %v1205, 0
    %v1307 = vand.u32 %v1202, 1
    %v1308 = vand.u32 %v1203, 1
    %v1309 = vand.u32 %v1204, 1
    %v1310 = vand.u32 %v1205, 1
    %vm1311 = vcmp.eq.s32.totalorder %v1307, 1
    %vm1312 = vcmp.eq.s32.totalorder %v1308, 1
    %vm1313 = vcmp.eq.s32.totalorder %v1309, 1
    %vm1314 = vcmp.eq.s32.totalorder %v1310, 1
    %vm1315 = vmand %vm1303, %vm1311
    %vm1316 = vmand %vm1304, %vm1312
    %vm1317 = vmand %vm1305, %vm1313
    %vm1318 = vmand %vm1306, %vm1314
    %v1319 = vsel %vm1315, 1, 0
    %v1320 = vsel %vm1316, 1, 0
    %v1321 = vsel %vm1317, 1, 0
    %v1322 = vsel %vm1318, 1, 0
    %v1323 = vcvt.s32.f32 %v1319
    %v1324 = vcvt.s32.f32 %v1320
    %v1325 = vcvt.s32.f32 %v1321
    %v1326 = vcvt.s32.f32 %v1322
    %vm1327 = vcmp.gt.s32.totalorder %v1206, 0
    %v1328 = vand.u32 %v1206, 1
    %vm1329 = vcmp.eq.s32.totalorder %v1328, 1
    %vm1330 = vmand %vm1327, %vm1329
    %v1331 = vsel %vm1330, 1, 0
    %v1332 = vcvt.s32.f32 %v1331
    %1334 = vset.pattern.permute.xlu0 0
    %1335 = vperm.xlu0 %1334, %v1323
    %v1336 = vpop.permute.xlu0 %1335
    %1339 = vset.pattern.permute.xlu0 0
    %1340 = vperm.xlu0 %1339, %v1324
    %v1341 = vpop.permute.xlu0 %1340
    %1344 = vset.pattern.permute.xlu0 0
    %1345 = vperm.xlu0 %1344, %v1325
    %v1346 = vpop.permute.xlu0 %1345
    %1349 = vset.pattern.permute.xlu0 0
    %1350 = vperm.xlu0 %1349, %v1326
    %v1351 = vpop.permute.xlu0 %1350
    %v1353 = vperm.slane %v1332, 0
    %v1354 = vmul.f32 %v1336, %v1353
    %v1355 = vmul.f32 %v1341, %v1353
    %v1356 = vmul.f32 %v1346, %v1353
    %v1357 = vmul.f32 %v1351, %v1353
    %v1358 = vsub.f32 1.0, %v1354
    %v1359 = vsub.f32 1.0, %v1355
    %v1360 = vsub.f32 1.0, %v1356
    %v1361 = vsub.f32 1.0, %v1357
    %v1362 = vmul.f32 %v1358, 100.0
    %v1363 = vmul.f32 %v1359, 100.0
    %v1364 = vmul.f32 %v1360, 100.0
    %v1365 = vmul.f32 %v1361, 100.0
    %v1366 = vadd.f32 %v1362, 1.0
    %v1367 = vadd.f32 %v1363, 1.0
    %v1368 = vadd.f32 %v1364, 1.0
    %v1369 = vadd.f32 %v1365, 1.0
    %v1370 = vmul.f32 %v1299, %v1366
    %v1371 = vmul.f32 %v1300, %v1367
    %v1372 = vmul.f32 %v1301, %v1368
    %v1373 = vmul.f32 %v1302, %v1369
    %1374 = vset.pattern.permute.xlu0 1
    %1375 = vperm.xlu0 %1374, %v1202
    %v1376 = vpop.permute.xlu0 %1375
    %1377 = vset.pattern.permute.xlu0 1
    %1378 = vperm.xlu0 %1377, %v1203
    %v1379 = vpop.permute.xlu0 %1378
    %1380 = vset.pattern.permute.xlu0 1
    %1381 = vperm.xlu0 %1380, %v1204
    %v1382 = vpop.permute.xlu0 %1381
    %1383 = vset.pattern.permute.xlu0 1
    %1384 = vperm.xlu0 %1383, %v1205
    %v1385 = vpop.permute.xlu0 %1384
    %v1386 = vperm.slane %v1206, 1
    %vm1387 = vcmp.eq.s32.totalorder %v1376, %v1386
    %vm1388 = vcmp.eq.s32.totalorder %v1379, %v1386
    %vm1389 = vcmp.eq.s32.totalorder %v1382, %v1386
    %vm1390 = vcmp.eq.s32.totalorder %v1385, %v1386
    %vm1391 = vcmp.le.f32.partialorder %v1370, 8.0
    %vm1392 = vcmp.le.f32.partialorder %v1371, 8.0
    %vm1393 = vcmp.le.f32.partialorder %v1372, 8.0
    %vm1394 = vcmp.le.f32.partialorder %v1373, 8.0
    %v1395 = vsel %vm1391, 0.0, -10000.0
    %v1396 = vsel %vm1392, 0.0, -10000.0
    %v1397 = vsel %vm1393, 0.0, -10000.0
    %v1398 = vsel %vm1394, 0.0, -10000.0
    %v1399 = vsel %vm1387, %v1395, -1e+09
    %v1400 = vsel %vm1388, %v1396, -1e+09
    %v1401 = vsel %vm1389, %v1397, -1e+09
    %v1402 = vsel %vm1390, %v1398, -1e+09
    %v1403 = vld [vmem:[%s14] sm:$0xff]
    %v1404 = vpack.c.bf16 %v1053, %v1052
    %v1405 = vpack.c.bf16 %v1055, %v1054
    %v1406 = vld [vmem:[%s10] sm:$0xf]
    %v1407 = vld [vmem:[%s10 + $0x4] sm:$0xf]
    %v1408 = vld [vmem:[%s10 + $0x8] sm:$0xf]
    %v1409 = vld [vmem:[%s10 + $0xc] sm:$0xf]
    %v1410 = vperm.slane %v1403, 0
    %v1415 = vunpack.c.l.b16 %v1406
    %v1416 = vunpack.c.l.b16 %v1407
    %v1417 = vunpack.c.l.b16 %v1408
    %v1418 = vunpack.c.l.b16 %v1409
    %v1419 = vpack.c.b16 %v1416, %v1415
    %v1420 = vpack.c.b16 %v1418, %v1417
    %v1424 = vsel %vm950, %v1404, 0
    %v1427 = vsel %vm950, %v1405, 0
    %1429 = vmatpush.bf16.msra.mxu0 0
    %1430 = vmatpush.bf16.msra.mxu0 0
    %1431 = vmatpush.bf16.msra.mxu0 0
    %1432 = vmatpush.bf16.msra.mxu0 0
    %1433 = vmatpush.bf16.msra.mxu0 0
    %1434 = vmatpush.bf16.msra.mxu0 0
    %1435 = vmatpush.bf16.msra.mxu0 %v1420
    %1436 = vmatpush.bf16.msra.mxu0 %v1419
    %1437 = vmatmul.bf16.gmra.mxu0 %v1424
    %v1438 = vpop.f32.mrf.mxu0
    %v1439 = vadd.f32 %v1410, %v1438
    %v1440 = vpop.f32.mrf.mxu0
    %v1441 = vadd.f32 %v1410, %v1440
    %1442 = vmatmul.bf16.gmra.mxu0 %v1427
    %v1443 = vpop.f32.mrf.mxu0
    %v1444 = vadd.f32 %v1410, %v1443
    %v1445 = vpop.f32.mrf.mxu0
    %v1446 = vadd.f32 %v1410, %v1445
    %1447 = vdwg.mxu0
    %v1448 = vld [vmem:[%s11] sm:$0xf]
    %v1449 = vld [vmem:[%s11 + $0x4] sm:$0xf]
    %v1450 = vld [vmem:[%s11 + $0x8] sm:$0xf]
    %v1451 = vld [vmem:[%s11 + $0xc] sm:$0xf]
    %v1452 = vpack.c.bf16 %v1441, %v1439
    %v1453 = vpack.c.bf16 %v1446, %v1444
    %1456 = vrot.lane.b32.xlu0 %v1452, 96
    %v1457 = vpop.permute.xlu0 %1456
    %1458 = vrot.lane.b32.xlu0 %v1453, 96
    %v1459 = vpop.permute.xlu0 %1458
    %vm1460 = vcmask 130048
    %v1462 = vsel %vm1460, %v1452, 0
    %v1465 = vsel %vm1460, %v1453, 0
    %v1468 = vsel %vm1460, %v1457, 0
    %v1471 = vsel %vm1460, %v1459, 0
    %1473 = vmatpush.bf16.xpose.msra.mxu0 0
    %1474 = vmatpush.bf16.xpose.msra.mxu0 0
    %1475 = vmatpush.bf16.xpose.msra.mxu0 0
    %1476 = vmatpush.bf16.xpose.msra.mxu0 0
    %1477 = vmatpush.bf16.xpose.msra.mxu0 0
    %1478 = vmatpush.bf16.xpose.msra.mxu0 0
    %1479 = vmatpush.bf16.xpose.msra.mxu0 %v1471
    %1480 = vmatpush.bf16.xpose.msra.mxu0 %v1468
    %1481 = vmatmul.bf16.gmra.mxu0 %v1462
    %v1482 = vpop.f32.mrf.mxu0
    %v1483 = vadd.f32 %v1399, %v1482
    %v1484 = vpop.f32.mrf.mxu0
    %v1485 = vadd.f32 %v1400, %v1484
    %1486 = vmatmul.bf16.gmra.mxu0 %v1465
    %v1487 = vpop.f32.mrf.mxu0
    %v1488 = vadd.f32 %v1401, %v1487
    %v1489 = vpop.f32.mrf.mxu0
    %v1490 = vadd.f32 %v1402, %v1489
    %1491 = vdwg.mxu0
    %v1492 = vsel %vm950, %v1483, -inf
    %1493 = vmax.xlane.f32.xlu0 %v1492
    %v1494 = vpop.xlane.xlu0 %1493
    %v1495 = vsel %vm950, %v1485, -inf
    %1496 = vmax.xlane.f32.xlu0 %v1495
    %v1497 = vpop.xlane.xlu0 %1496
    %v1498 = vsel %vm950, %v1488, -inf
    %1499 = vmax.xlane.f32.xlu0 %v1498
    %v1500 = vpop.xlane.xlu0 %1499
    %v1501 = vsel %vm950, %v1490, -inf
    %1502 = vmax.xlane.f32.xlu0 %v1501
    %v1503 = vpop.xlane.xlu0 %1502
    %v1504 = vsub.f32 %v1483, %v1494
    %v1505 = vsub.f32 %v1485, %v1497
    %v1506 = vsub.f32 %v1488, %v1500
    %v1507 = vsub.f32 %v1490, %v1503
    %v1508 = vmul.f32 %v1504, 1.442695
    %v1509 = vpow.pop %v1508
    %v1510 = vmul.f32 %v1505, 1.442695
    %v1511 = vpow.pop %v1510
    %v1512 = vmul.f32 %v1506, 1.442695
    %v1513 = vpow.pop %v1512
    %v1514 = vmul.f32 %v1507, 1.442695
    %v1515 = vpow.pop %v1514
    %v1516 = vsel %vm950, %v1509, 0.0
    %1517 = vadd.xlane.f32.xlu0 %v1516
    %v1518 = vpop.xlane.xlu0 %1517
    %v1519 = vsel %vm950, %v1511, 0.0
    %1520 = vadd.xlane.f32.xlu0 %v1519
    %v1521 = vpop.xlane.xlu0 %1520
    %v1522 = vsel %vm950, %v1513, 0.0
    %1523 = vadd.xlane.f32.xlu0 %v1522
    %v1524 = vpop.xlane.xlu0 %1523
    %v1525 = vsel %vm950, %v1515, 0.0
    %1526 = vadd.xlane.f32.xlu0 %v1525
    %v1527 = vpop.xlane.xlu0 %1526
    %v1528 = vrcp.pop %v1518
    %v1529 = vrcp.pop %v1521
    %v1530 = vrcp.pop %v1524
    %v1531 = vrcp.pop %v1527
    %v1532 = vmul.f32 %v1509, %v1528
    %v1533 = vmul.f32 %v1511, %v1529
    %v1534 = vmul.f32 %v1513, %v1530
    %v1535 = vmul.f32 %v1515, %v1531
    %v1536 = vpack.c.bf16 %v1533, %v1532
    %v1537 = vpack.c.bf16 %v1535, %v1534
    %1538 = vrot.lane.b32.xlu0 %v1452, 64
    %v1539 = vpop.permute.xlu0 %1538
    %1540 = vrot.lane.b32.xlu0 %v1453, 64
    %v1541 = vpop.permute.xlu0 %1540
    %v1545 = vsel %vm950, %v1536, 0
    %v1548 = vsel %vm950, %v1537, 0
    %1550 = vmatpush.bf16.msra.mxu0 0
    %1551 = vmatpush.bf16.msra.mxu0 0
    %1552 = vmatpush.bf16.msra.mxu0 0
    %1553 = vmatpush.bf16.msra.mxu0 0
    %1554 = vmatpush.bf16.msra.mxu0 0
    %1555 = vmatpush.bf16.msra.mxu0 0
    %1556 = vmatpush.bf16.msra.mxu0 %v1541
    %1557 = vmatpush.bf16.msra.mxu0 %v1539
    %1558 = vmatmul.bf16.gmra.mxu0 %v1545
    %v1559 = vpop.f32.mrf.mxu0
    %v1560 = vadd.f32 0.0, %v1559
    %v1561 = vpop.f32.mrf.mxu0
    %v1562 = vadd.f32 0.0, %v1561
    %1563 = vmatmul.bf16.gmra.mxu0 %v1548
    %v1564 = vpop.f32.mrf.mxu0
    %v1565 = vadd.f32 0.0, %v1564
    %v1566 = vpop.f32.mrf.mxu0
    %v1567 = vadd.f32 0.0, %v1566
    %1568 = vdwg.mxu0
    %v1569 = vpack.c.bf16 %v1562, %v1560
    %v1570 = vpack.c.bf16 %v1567, %v1565
    %1571 = vrot.lane.b32.xlu0 %v1452, 112
    %v1572 = vpop.permute.xlu0 %1571
    %1573 = vrot.lane.b32.xlu0 %v1453, 112
    %v1574 = vpop.permute.xlu0 %1573
    %1575 = vrot.lane.b32.xlu0 %v1452, 80
    %v1576 = vpop.permute.xlu0 %1575
    %1577 = vrot.lane.b32.xlu0 %v1453, 80
    %v1578 = vpop.permute.xlu0 %1577
    %v1580 = vsel %vm1460, %v1572, 0
    %v1583 = vsel %vm1460, %v1574, 0
    %v1586 = vsel %vm1460, %v1576, 0
    %v1589 = vsel %vm1460, %v1578, 0
    %1591 = vmatpush.bf16.xpose.msra.mxu0 0
    %1592 = vmatpush.bf16.xpose.msra.mxu0 0
    %1593 = vmatpush.bf16.xpose.msra.mxu0 0
    %1594 = vmatpush.bf16.xpose.msra.mxu0 0
    %1595 = vmatpush.bf16.xpose.msra.mxu0 0
    %1596 = vmatpush.bf16.xpose.msra.mxu0 0
    %1597 = vmatpush.bf16.xpose.msra.mxu0 %v1589
    %1598 = vmatpush.bf16.xpose.msra.mxu0 %v1586
    %1599 = vmatmul.bf16.gmra.mxu0 %v1580
    %v1600 = vpop.f32.mrf.mxu0
    %v1601 = vadd.f32 %v1399, %v1600
    %v1602 = vpop.f32.mrf.mxu0
    %v1603 = vadd.f32 %v1400, %v1602
    %1604 = vmatmul.bf16.gmra.mxu0 %v1583
    %v1605 = vpop.f32.mrf.mxu0
    %v1606 = vadd.f32 %v1401, %v1605
    %v1607 = vpop.f32.mrf.mxu0
    %v1608 = vadd.f32 %v1402, %v1607
    %1609 = vdwg.mxu0
    %v1610 = vsel %vm950, %v1601, -inf
    %1611 = vmax.xlane.f32.xlu0 %v1610
    %v1612 = vpop.xlane.xlu0 %1611
    %v1613 = vsel %vm950, %v1603, -inf
    %1614 = vmax.xlane.f32.xlu0 %v1613
    %v1615 = vpop.xlane.xlu0 %1614
    %v1616 = vsel %vm950, %v1606, -inf
    %1617 = vmax.xlane.f32.xlu0 %v1616
    %v1618 = vpop.xlane.xlu0 %1617
    %v1619 = vsel %vm950, %v1608, -inf
    %1620 = vmax.xlane.f32.xlu0 %v1619
    %v1621 = vpop.xlane.xlu0 %1620
    %v1622 = vsub.f32 %v1601, %v1612
    %v1623 = vsub.f32 %v1603, %v1615
    %v1624 = vsub.f32 %v1606, %v1618
    %v1625 = vsub.f32 %v1608, %v1621
    %v1626 = vmul.f32 %v1622, 1.442695
    %v1627 = vpow.pop %v1626
    %v1628 = vmul.f32 %v1623, 1.442695
    %v1629 = vpow.pop %v1628
    %v1630 = vmul.f32 %v1624, 1.442695
    %v1631 = vpow.pop %v1630
    %v1632 = vmul.f32 %v1625, 1.442695
    %v1633 = vpow.pop %v1632
    %v1634 = vsel %vm950, %v1627, 0.0
    %1635 = vadd.xlane.f32.xlu0 %v1634
    %v1636 = vpop.xlane.xlu0 %1635
    %v1637 = vsel %vm950, %v1629, 0.0
    %1638 = vadd.xlane.f32.xlu0 %v1637
    %v1639 = vpop.xlane.xlu0 %1638
    %v1640 = vsel %vm950, %v1631, 0.0
    %1641 = vadd.xlane.f32.xlu0 %v1640
    %v1642 = vpop.xlane.xlu0 %1641
    %v1643 = vsel %vm950, %v1633, 0.0
    %1644 = vadd.xlane.f32.xlu0 %v1643
    %v1645 = vpop.xlane.xlu0 %1644
    %v1646 = vrcp.pop %v1636
    %v1647 = vrcp.pop %v1639
    %v1648 = vrcp.pop %v1642
    %v1649 = vrcp.pop %v1645
    %v1650 = vmul.f32 %v1627, %v1646
    %v1651 = vmul.f32 %v1629, %v1647
    %v1652 = vmul.f32 %v1631, %v1648
    %v1653 = vmul.f32 %v1633, %v1649
    %v1654 = vpack.c.bf16 %v1651, %v1650
    %v1655 = vpack.c.bf16 %v1653, %v1652
    %1656 = vrot.lane.b32.xlu0 %v1452, 48
    %v1657 = vpop.permute.xlu0 %1656
    %1658 = vrot.lane.b32.xlu0 %v1453, 48
    %v1659 = vpop.permute.xlu0 %1658
    %v1663 = vsel %vm950, %v1654, 0
    %v1666 = vsel %vm950, %v1655, 0
    %1668 = vmatpush.bf16.msra.mxu0 0
    %1669 = vmatpush.bf16.msra.mxu0 0
    %1670 = vmatpush.bf16.msra.mxu0 0
    %1671 = vmatpush.bf16.msra.mxu0 0
    %1672 = vmatpush.bf16.msra.mxu0 0
    %1673 = vmatpush.bf16.msra.mxu0 0
    %1674 = vmatpush.bf16.msra.mxu0 %v1659
    %1675 = vmatpush.bf16.msra.mxu0 %v1657
    %1676 = vmatmul.bf16.gmra.mxu0 %v1663
    %v1677 = vpop.f32.mrf.mxu0
    %v1678 = vadd.f32 0.0, %v1677
    %v1679 = vpop.f32.mrf.mxu0
    %v1680 = vadd.f32 0.0, %v1679
    %1681 = vmatmul.bf16.gmra.mxu0 %v1666
    %v1682 = vpop.f32.mrf.mxu0
    %v1683 = vadd.f32 0.0, %v1682
    %v1684 = vpop.f32.mrf.mxu0
    %v1685 = vadd.f32 0.0, %v1684
    %1686 = vdwg.mxu0
    %v1687 = vpack.c.bf16 %v1680, %v1678
    %v1688 = vpack.c.bf16 %v1685, %v1683
    %v1691 = vunpack.c.l.b16 %v1450
    %v1692 = vunpack.c.l.b16 %v1451
    %v1693 = vpack.c.b16 %v1692, %v1691
    %v1696 = vsel %vm1460, %v1687, 0
    %v1699 = vsel %vm1460, %v1688, 0
    %1701 = vmatpush.bf16.msra.mxu0 0
    %1702 = vmatpush.bf16.msra.mxu0 0
    %1703 = vmatpush.bf16.msra.mxu0 0
    %1704 = vmatpush.bf16.msra.mxu0 0
    %1705 = vmatpush.bf16.msra.mxu0 0
    %1706 = vmatpush.bf16.msra.mxu0 0
    %1707 = vmatpush.bf16.msra.mxu0 0
    %1708 = vmatpush.bf16.msra.mxu0 %v1693
    %1709 = vmatmul.bf16.gmra.mxu0 %v1696
    %v1710 = vpop.f32.mrf.mxu0
    %v1711 = vadd.f32 0.0, %v1710
    %v1712 = vpop.f32.mrf.mxu0
    %v1713 = vadd.f32 0.0, %v1712
    %1714 = vmatmul.bf16.gmra.mxu0 %v1699
    %v1715 = vpop.f32.mrf.mxu0
    %v1716 = vadd.f32 0.0, %v1715
    %v1717 = vpop.f32.mrf.mxu0
    %v1718 = vadd.f32 0.0, %v1717
    %1719 = vdwg.mxu0
    %v1722 = vunpack.c.l.b16 %v1448
    %v1723 = vunpack.c.l.b16 %v1449
    %v1724 = vpack.c.b16 %v1723, %v1722
    %v1727 = vsel %vm1460, %v1569, 0
    %v1730 = vsel %vm1460, %v1570, 0
    %1732 = vmatpush.bf16.msra.mxu0 0
    %1733 = vmatpush.bf16.msra.mxu0 0
    %1734 = vmatpush.bf16.msra.mxu0 0
    %1735 = vmatpush.bf16.msra.mxu0 0
    %1736 = vmatpush.bf16.msra.mxu0 0
    %1737 = vmatpush.bf16.msra.mxu0 0
    %1738 = vmatpush.bf16.msra.mxu0 0
    %1739 = vmatpush.bf16.msra.mxu0 %v1724
    %1740 = vmatmul.bf16.gmra.mxu0 %v1727
    %v1741 = vpop.f32.mrf.mxu0
    %v1742 = vadd.f32 %v1711, %v1741
    %v1743 = vpop.f32.mrf.mxu0
    %v1744 = vadd.f32 %v1713, %v1743
    %1745 = vmatmul.bf16.gmra.mxu0 %v1730
    %v1746 = vpop.f32.mrf.mxu0
    %v1747 = vadd.f32 %v1716, %v1746
    %v1748 = vpop.f32.mrf.mxu0
    %v1749 = vadd.f32 %v1718, %v1748
    %1750 = vdwg.mxu0
    %v1751 = vperm.slane %v1403, 1
    %v1752 = vadd.f32 %v1742, %v1751
    %v1753 = vadd.f32 %v1744, %v1751
    %v1754 = vadd.f32 %v1747, %v1751
    %v1755 = vadd.f32 %v1749, %v1751
    %v1756 = vadd.f32 %v1052, %v1752
    %v1757 = vadd.f32 %v1053, %v1753
    %v1758 = vadd.f32 %v1054, %v1754
    %v1759 = vadd.f32 %v1055, %v1755
    %v1760 = vsel %vm950, %v1756, 0.0
    %1761 = vadd.xlane.f32.xlu0 %v1760
    %v1762 = vpop.xlane.xlu0 %1761
    %v1763 = vsel %vm950, %v1757, 0.0
    %1764 = vadd.xlane.f32.xlu0 %v1763
    %v1765 = vpop.xlane.xlu0 %1764
    %v1766 = vsel %vm950, %v1758, 0.0
    %1767 = vadd.xlane.f32.xlu0 %v1766
    %v1768 = vpop.xlane.xlu0 %1767
    %v1769 = vsel %vm950, %v1759, 0.0
    %1770 = vadd.xlane.f32.xlu0 %v1769
    %v1771 = vpop.xlane.xlu0 %1770
    %v1772 = vmul.f32 %v1762, %v969
    %v1773 = vmul.f32 %v1765, %v969
    %v1774 = vmul.f32 %v1768, %v969
    %v1775 = vmul.f32 %v1771, %v969
    %v1776 = vsub.f32 %v1756, %v1772
    %v1777 = vsub.f32 %v1757, %v1773
    %v1778 = vsub.f32 %v1758, %v1774
    %v1779 = vsub.f32 %v1759, %v1775
    %v1780 = vmul.f32 %v1776, %v1776
    %v1781 = vmul.f32 %v1777, %v1777
    %v1782 = vmul.f32 %v1778, %v1778
    %v1783 = vmul.f32 %v1779, %v1779
    %v1784 = vsel %vm950, %v1780, 0.0
    %1785 = vadd.xlane.f32.xlu0 %v1784
    %v1786 = vpop.xlane.xlu0 %1785
    %v1787 = vsel %vm950, %v1781, 0.0
    %1788 = vadd.xlane.f32.xlu0 %v1787
    %v1789 = vpop.xlane.xlu0 %1788
    %v1790 = vsel %vm950, %v1782, 0.0
    %1791 = vadd.xlane.f32.xlu0 %v1790
    %v1792 = vpop.xlane.xlu0 %1791
    %v1793 = vsel %vm950, %v1783, 0.0
    %1794 = vadd.xlane.f32.xlu0 %v1793
    %v1795 = vpop.xlane.xlu0 %1794
    %v1796 = vmul.f32 %v1786, %v969
    %v1797 = vmul.f32 %v1789, %v969
    %v1798 = vmul.f32 %v1792, %v969
    %v1799 = vmul.f32 %v1795, %v969
    %v1800 = vadd.f32 %v1796, 1e-06
    %v1801 = vadd.f32 %v1797, 1e-06
    %v1802 = vadd.f32 %v1798, 1e-06
    %v1803 = vadd.f32 %v1799, 1e-06
    %v1804 = vrsqrt.pop %v1800
    %v1805 = vmul.f32 %v1804, %v1800
    %v1806 = vmul.f32 %v1805, %v1804
    %v1807 = vmul.f32 0.5, %v1806
    %v1808 = vsub.f32 1.5, %v1807
    %v1809 = vmul.f32 %v1804, %v1808
    %vm1810 = vweird.f32 %v1800
    %vm1811 = vweird.f32 %v1804
    %vm1812 = vmor %vm1810, %vm1811
    %v1813 = vsel %vm1812, %v1804, %v1809
    %v1814 = vrsqrt.pop %v1801
    %v1815 = vmul.f32 %v1814, %v1801
    %v1816 = vmul.f32 %v1815, %v1814
    %v1817 = vmul.f32 0.5, %v1816
    %v1818 = vsub.f32 1.5, %v1817
    %v1819 = vmul.f32 %v1814, %v1818
    %vm1820 = vweird.f32 %v1801
    %vm1821 = vweird.f32 %v1814
    %vm1822 = vmor %vm1820, %vm1821
    %v1823 = vsel %vm1822, %v1814, %v1819
    %v1824 = vrsqrt.pop %v1802
    %v1825 = vmul.f32 %v1824, %v1802
    %v1826 = vmul.f32 %v1825, %v1824
    %v1827 = vmul.f32 0.5, %v1826
    %v1828 = vsub.f32 1.5, %v1827
    %v1829 = vmul.f32 %v1824, %v1828
    %vm1830 = vweird.f32 %v1802
    %vm1831 = vweird.f32 %v1824
    %vm1832 = vmor %vm1830, %vm1831
    %v1833 = vsel %vm1832, %v1824, %v1829
    %v1834 = vrsqrt.pop %v1803
    %v1835 = vmul.f32 %v1834, %v1803
    %v1836 = vmul.f32 %v1835, %v1834
    %v1837 = vmul.f32 0.5, %v1836
    %v1838 = vsub.f32 1.5, %v1837
    %v1839 = vmul.f32 %v1834, %v1838
    %vm1840 = vweird.f32 %v1803
    %vm1841 = vweird.f32 %v1834
    %vm1842 = vmor %vm1840, %vm1841
    %v1843 = vsel %vm1842, %v1834, %v1839
    %v1844 = vmul.f32 %v1776, %v1813
    %v1845 = vmul.f32 %v1777, %v1823
    %v1846 = vmul.f32 %v1778, %v1833
    %v1847 = vmul.f32 %v1779, %v1843
    %v1848 = vperm.slane %v1403, 2
    %v1849 = vmul.f32 %v1844, %v1848
    %v1850 = vmul.f32 %v1845, %v1848
    %v1851 = vmul.f32 %v1846, %v1848
    %v1852 = vmul.f32 %v1847, %v1848
    %v1853 = vperm.slane %v1403, 3
    %v1854 = vadd.f32 %v1849, %v1853
    %v1855 = vadd.f32 %v1850, %v1853
    %v1856 = vadd.f32 %v1851, %v1853
    %v1857 = vadd.f32 %v1852, %v1853
    %v1858 = vpack.c.bf16 %v1855, %v1854
    %v1859 = vpack.c.bf16 %v1857, %v1856
    %v1860 = vld [vmem:[%s12] sm:$0xf]
    %v1861 = vld [vmem:[%s12 + $0x4] sm:$0xf]
    %v1862 = vld [vmem:[%s12 + $0x8] sm:$0xf]
    %v1863 = vld [vmem:[%s12 + $0xc] sm:$0xf]
    %v1864 = vperm.slane %v1403, 4
    %v1869 = vunpack.c.l.b16 %v1860
    %v1870 = vunpack.c.l.b16 %v1861
    %v1871 = vunpack.c.l.b16 %v1862
    %v1872 = vunpack.c.l.b16 %v1863
    %v1873 = vpack.c.b16 %v1870, %v1869
    %v1874 = vpack.c.b16 %v1872, %v1871
    %v1878 = vsel %vm950, %v1858, 0
    %v1881 = vsel %vm950, %v1859, 0
    %1883 = vmatpush.bf16.msra.mxu0 0
    %1884 = vmatpush.bf16.msra.mxu0 0
    %1885 = vmatpush.bf16.msra.mxu0 0
    %1886 = vmatpush.bf16.msra.mxu0 0
    %1887 = vmatpush.bf16.msra.mxu0 0
    %1888 = vmatpush.bf16.msra.mxu0 0
    %1889 = vmatpush.bf16.msra.mxu0 %v1874
    %1890 = vmatpush.bf16.msra.mxu0 %v1873
    %1891 = vmatmul.bf16.gmra.mxu0 %v1878
    %v1892 = vpop.f32.mrf.mxu0
    %v1893 = vadd.f32 %v1864, %v1892
    %v1894 = vpop.f32.mrf.mxu0
    %v1895 = vadd.f32 %v1864, %v1894
    %1896 = vmatmul.bf16.gmra.mxu0 %v1881
    %v1897 = vpop.f32.mrf.mxu0
    %v1898 = vadd.f32 %v1864, %v1897
    %v1899 = vpop.f32.mrf.mxu0
    %v1900 = vadd.f32 %v1864, %v1899
    %1901 = vdwg.mxu0
    %v1902 = vmul.f32 %v1893, %v1893
    %v1903 = vmul.f32 %v1895, %v1895
    %v1904 = vmul.f32 %v1898, %v1898
    %v1905 = vmul.f32 %v1900, %v1900
    %v1906 = vmul.f32 %v1893, %v1902
    %v1907 = vmul.f32 %v1895, %v1903
    %v1908 = vmul.f32 %v1898, %v1904
    %v1909 = vmul.f32 %v1900, %v1905
    %v1910 = vmul.f32 %v1906, 0.044715
    %v1911 = vmul.f32 %v1907, 0.044715
    %v1912 = vmul.f32 %v1908, 0.044715
    %v1913 = vmul.f32 %v1909, 0.044715
    %v1914 = vadd.f32 %v1893, %v1910
    %v1915 = vadd.f32 %v1895, %v1911
    %v1916 = vadd.f32 %v1898, %v1912
    %v1917 = vadd.f32 %v1900, %v1913
    %v1918 = vmul.f32 %v1914, 0.7978846
    %v1919 = vmul.f32 %v1915, 0.7978846
    %v1920 = vmul.f32 %v1916, 0.7978846
    %v1921 = vmul.f32 %v1917, 0.7978846
    %v1922 = vtanh.pop %v1918
    %v1923 = vtanh.pop %v1919
    %v1924 = vtanh.pop %v1920
    %v1925 = vtanh.pop %v1921
    %v1926 = vadd.f32 %v1922, 1.0
    %v1927 = vadd.f32 %v1923, 1.0
    %v1928 = vadd.f32 %v1924, 1.0
    %v1929 = vadd.f32 %v1925, 1.0
    %v1930 = vmul.f32 %v1926, 0.5
    %v1931 = vmul.f32 %v1927, 0.5
    %v1932 = vmul.f32 %v1928, 0.5
    %v1933 = vmul.f32 %v1929, 0.5
    %v1934 = vmul.f32 %v1893, %v1930
    %v1935 = vmul.f32 %v1895, %v1931
    %v1936 = vmul.f32 %v1898, %v1932
    %v1937 = vmul.f32 %v1900, %v1933
    %v1938 = vpack.c.bf16 %v1935, %v1934
    %v1939 = vpack.c.bf16 %v1937, %v1936
    %v1940 = vld [vmem:[%s13] sm:$0xf]
    %v1941 = vld [vmem:[%s13 + $0x4] sm:$0xf]
    %v1942 = vld [vmem:[%s13 + $0x8] sm:$0xf]
    %v1943 = vld [vmem:[%s13 + $0xc] sm:$0xf]
    %v1944 = vld [vmem:[%s13 + $0x10] sm:$0xf]
    %v1945 = vld [vmem:[%s13 + $0x14] sm:$0xf]
    %v1946 = vld [vmem:[%s13 + $0x18] sm:$0xf]
    %v1947 = vld [vmem:[%s13 + $0x1c] sm:$0xf]
    %v1948 = vperm.slane %v1403, 5
    %v1957 = vunpack.c.l.b16 %v1940
    %v1958 = vunpack.c.l.b16 %v1941
    %v1959 = vunpack.c.l.b16 %v1942
    %v1960 = vunpack.c.l.b16 %v1943
    %v1961 = vunpack.c.l.b16 %v1944
    %v1962 = vunpack.c.l.b16 %v1945
    %v1963 = vunpack.c.l.b16 %v1946
    %v1964 = vunpack.c.l.b16 %v1947
    %v1965 = vpack.c.b16 %v1958, %v1957
    %v1966 = vpack.c.b16 %v1960, %v1959
    %v1967 = vpack.c.b16 %v1962, %v1961
    %v1968 = vpack.c.b16 %v1964, %v1963
    %v1974 = vsel %vm855, %v1938, 0
    %v1977 = vsel %vm855, %v1939, 0
    %1979 = vmatpush.bf16.msra.mxu0 0
    %1980 = vmatpush.bf16.msra.mxu0 0
    %1981 = vmatpush.bf16.msra.mxu0 0
    %1982 = vmatpush.bf16.msra.mxu0 0
    %1983 = vmatpush.bf16.msra.mxu0 %v1968
    %1984 = vmatpush.bf16.msra.mxu0 %v1967
    %1985 = vmatpush.bf16.msra.mxu0 %v1966
    %1986 = vmatpush.bf16.msra.mxu0 %v1965
    %1987 = vmatmul.bf16.gmra.mxu0 %v1974
    %v1988 = vpop.f32.mrf.mxu0
    %v1989 = vadd.f32 %v1948, %v1988
    %v1990 = vpop.f32.mrf.mxu0
    %v1991 = vadd.f32 %v1948, %v1990
    %1992 = vmatmul.bf16.gmra.mxu0 %v1977
    %v1993 = vpop.f32.mrf.mxu0
    %v1994 = vadd.f32 %v1948, %v1993
    %v1995 = vpop.f32.mrf.mxu0
    %v1996 = vadd.f32 %v1948, %v1995
    %1997 = vdwg.mxu0
    %v1998 = vadd.f32 %v1854, %v1989
    %v1999 = vadd.f32 %v1855, %v1991
    %v2000 = vadd.f32 %v1856, %v1994
    %v2001 = vadd.f32 %v1857, %v1996
    %v2002 = vsel %vm950, %v1998, 0.0
    %2003 = vadd.xlane.f32.xlu0 %v2002
    %v2004 = vpop.xlane.xlu0 %2003
    %v2005 = vsel %vm950, %v1999, 0.0
    %2006 = vadd.xlane.f32.xlu0 %v2005
    %v2007 = vpop.xlane.xlu0 %2006
    %v2008 = vsel %vm950, %v2000, 0.0
    %2009 = vadd.xlane.f32.xlu0 %v2008
    %v2010 = vpop.xlane.xlu0 %2009
    %v2011 = vsel %vm950, %v2001, 0.0
    %2012 = vadd.xlane.f32.xlu0 %v2011
    %v2013 = vpop.xlane.xlu0 %2012
    %v2014 = vmul.f32 %v2004, %v969
    %v2015 = vmul.f32 %v2007, %v969
    %v2016 = vmul.f32 %v2010, %v969
    %v2017 = vmul.f32 %v2013, %v969
    %v2018 = vsub.f32 %v1998, %v2014
    %v2019 = vsub.f32 %v1999, %v2015
    %v2020 = vsub.f32 %v2000, %v2016
    %v2021 = vsub.f32 %v2001, %v2017
    %v2022 = vmul.f32 %v2018, %v2018
    %v2023 = vmul.f32 %v2019, %v2019
    %v2024 = vmul.f32 %v2020, %v2020
    %v2025 = vmul.f32 %v2021, %v2021
    %v2026 = vsel %vm950, %v2022, 0.0
    %2027 = vadd.xlane.f32.xlu0 %v2026
    %v2028 = vpop.xlane.xlu0 %2027
    %v2029 = vsel %vm950, %v2023, 0.0
    %2030 = vadd.xlane.f32.xlu0 %v2029
    %v2031 = vpop.xlane.xlu0 %2030
    %v2032 = vsel %vm950, %v2024, 0.0
    %2033 = vadd.xlane.f32.xlu0 %v2032
    %v2034 = vpop.xlane.xlu0 %2033
    %v2035 = vsel %vm950, %v2025, 0.0
    %2036 = vadd.xlane.f32.xlu0 %v2035
    %v2037 = vpop.xlane.xlu0 %2036
    %v2038 = vmul.f32 %v2028, %v969
    %v2039 = vmul.f32 %v2031, %v969
    %v2040 = vmul.f32 %v2034, %v969
    %v2041 = vmul.f32 %v2037, %v969
    %v2042 = vadd.f32 %v2038, 1e-06
    %v2043 = vadd.f32 %v2039, 1e-06
    %v2044 = vadd.f32 %v2040, 1e-06
    %v2045 = vadd.f32 %v2041, 1e-06
    %v2046 = vrsqrt.pop %v2042
    %v2047 = vmul.f32 %v2046, %v2042
    %v2048 = vmul.f32 %v2047, %v2046
    %v2049 = vmul.f32 0.5, %v2048
    %v2050 = vsub.f32 1.5, %v2049
    %v2051 = vmul.f32 %v2046, %v2050
    %vm2052 = vweird.f32 %v2042
    %vm2053 = vweird.f32 %v2046
    %vm2054 = vmor %vm2052, %vm2053
    %v2055 = vsel %vm2054, %v2046, %v2051
    %v2056 = vrsqrt.pop %v2043
    %v2057 = vmul.f32 %v2056, %v2043
    %v2058 = vmul.f32 %v2057, %v2056
    %v2059 = vmul.f32 0.5, %v2058
    %v2060 = vsub.f32 1.5, %v2059
    %v2061 = vmul.f32 %v2056, %v2060
    %vm2062 = vweird.f32 %v2043
    %vm2063 = vweird.f32 %v2056
    %vm2064 = vmor %vm2062, %vm2063
    %v2065 = vsel %vm2064, %v2056, %v2061
    %v2066 = vrsqrt.pop %v2044
    %v2067 = vmul.f32 %v2066, %v2044
    %v2068 = vmul.f32 %v2067, %v2066
    %v2069 = vmul.f32 0.5, %v2068
    %v2070 = vsub.f32 1.5, %v2069
    %v2071 = vmul.f32 %v2066, %v2070
    %vm2072 = vweird.f32 %v2044
    %vm2073 = vweird.f32 %v2066
    %vm2074 = vmor %vm2072, %vm2073
    %v2075 = vsel %vm2074, %v2066, %v2071
    %v2076 = vrsqrt.pop %v2045
    %v2077 = vmul.f32 %v2076, %v2045
    %v2078 = vmul.f32 %v2077, %v2076
    %v2079 = vmul.f32 0.5, %v2078
    %v2080 = vsub.f32 1.5, %v2079
    %v2081 = vmul.f32 %v2076, %v2080
    %vm2082 = vweird.f32 %v2045
    %vm2083 = vweird.f32 %v2076
    %vm2084 = vmor %vm2082, %vm2083
    %v2085 = vsel %vm2084, %v2076, %v2081
    %v2086 = vmul.f32 %v2018, %v2055
    %v2087 = vmul.f32 %v2019, %v2065
    %v2088 = vmul.f32 %v2020, %v2075
    %v2089 = vmul.f32 %v2021, %v2085
    %v2090 = vperm.slane %v1403, 6
    %v2091 = vmul.f32 %v2086, %v2090
    %v2092 = vmul.f32 %v2087, %v2090
    %v2093 = vmul.f32 %v2088, %v2090
    %v2094 = vmul.f32 %v2089, %v2090
    %v2095 = vperm.slane %v1403, 7
    %v2096 = vadd.f32 %v2091, %v2095
    %v2097 = vadd.f32 %v2092, %v2095
    %v2098 = vadd.f32 %v2093, %v2095
    %v2099 = vadd.f32 %v2094, %v2095
    %s2100 = scalar_lea.vmem %s14, 8
    %v2101 = vld [vmem:[%s2100] sm:$0xff]
    %v2102 = vpack.c.bf16 %v2097, %v2096
    %v2103 = vpack.c.bf16 %v2099, %v2098
    %s2104 = scalar_lea.vmem %s10, 16
    %v2105 = vld [vmem:[%s2104] sm:$0xf]
    %v2106 = vld [vmem:[%s2104 + $0x4] sm:$0xf]
    %v2107 = vld [vmem:[%s2104 + $0x8] sm:$0xf]
    %v2108 = vld [vmem:[%s2104 + $0xc] sm:$0xf]
    %v2109 = vperm.slane %v2101, 0
    %v2114 = vunpack.c.l.b16 %v2105
    %v2115 = vunpack.c.l.b16 %v2106
    %v2116 = vunpack.c.l.b16 %v2107
    %v2117 = vunpack.c.l.b16 %v2108
    %v2118 = vpack.c.b16 %v2115, %v2114
    %v2119 = vpack.c.b16 %v2117, %v2116
    %v2123 = vsel %vm950, %v2102, 0
    %v2126 = vsel %vm950, %v2103, 0
    %2128 = vmatpush.bf16.msra.mxu0 0
    %2129 = vmatpush.bf16.msra.mxu0 0
    %2130 = vmatpush.bf16.msra.mxu0 0
    %2131 = vmatpush.bf16.msra.mxu0 0
    %2132 = vmatpush.bf16.msra.mxu0 0
    %2133 = vmatpush.bf16.msra.mxu0 0
    %2134 = vmatpush.bf16.msra.mxu0 %v2119
    %2135 = vmatpush.bf16.msra.mxu0 %v2118
    %2136 = vmatmul.bf16.gmra.mxu0 %v2123
    %v2137 = vpop.f32.mrf.mxu0
    %v2138 = vadd.f32 %v2109, %v2137
    %v2139 = vpop.f32.mrf.mxu0
    %v2140 = vadd.f32 %v2109, %v2139
    %2141 = vmatmul.bf16.gmra.mxu0 %v2126
    %v2142 = vpop.f32.mrf.mxu0
    %v2143 = vadd.f32 %v2109, %v2142
    %v2144 = vpop.f32.mrf.mxu0
    %v2145 = vadd.f32 %v2109, %v2144
    %2146 = vdwg.mxu0
    %s2147 = scalar_lea.vmem %s11, 16
    %v2148 = vld [vmem:[%s2147] sm:$0xf]
    %v2149 = vld [vmem:[%s2147 + $0x4] sm:$0xf]
    %v2150 = vld [vmem:[%s2147 + $0x8] sm:$0xf]
    %v2151 = vld [vmem:[%s2147 + $0xc] sm:$0xf]
    %v2152 = vpack.c.bf16 %v2140, %v2138
    %v2153 = vpack.c.bf16 %v2145, %v2143
    %2156 = vrot.lane.b32.xlu0 %v2152, 96
    %v2157 = vpop.permute.xlu0 %2156
    %2158 = vrot.lane.b32.xlu0 %v2153, 96
    %v2159 = vpop.permute.xlu0 %2158
    %v2161 = vsel %vm1460, %v2152, 0
    %v2164 = vsel %vm1460, %v2153, 0
    %v2167 = vsel %vm1460, %v2157, 0
    %v2170 = vsel %vm1460, %v2159, 0
    %2172 = vmatpush.bf16.xpose.msra.mxu0 0
    %2173 = vmatpush.bf16.xpose.msra.mxu0 0
    %2174 = vmatpush.bf16.xpose.msra.mxu0 0
    %2175 = vmatpush.bf16.xpose.msra.mxu0 0
    %2176 = vmatpush.bf16.xpose.msra.mxu0 0
    %2177 = vmatpush.bf16.xpose.msra.mxu0 0
    %2178 = vmatpush.bf16.xpose.msra.mxu0 %v2170
    %2179 = vmatpush.bf16.xpose.msra.mxu0 %v2167
    %2180 = vmatmul.bf16.gmra.mxu0 %v2161
    %v2181 = vpop.f32.mrf.mxu0
    %v2182 = vadd.f32 %v1399, %v2181
    %v2183 = vpop.f32.mrf.mxu0
    %v2184 = vadd.f32 %v1400, %v2183
    %2185 = vmatmul.bf16.gmra.mxu0 %v2164
    %v2186 = vpop.f32.mrf.mxu0
    %v2187 = vadd.f32 %v1401, %v2186
    %v2188 = vpop.f32.mrf.mxu0
    %v2189 = vadd.f32 %v1402, %v2188
    %2190 = vdwg.mxu0
    %v2191 = vsel %vm950, %v2182, -inf
    %2192 = vmax.xlane.f32.xlu0 %v2191
    %v2193 = vpop.xlane.xlu0 %2192
    %v2194 = vsel %vm950, %v2184, -inf
    %2195 = vmax.xlane.f32.xlu0 %v2194
    %v2196 = vpop.xlane.xlu0 %2195
    %v2197 = vsel %vm950, %v2187, -inf
    %2198 = vmax.xlane.f32.xlu0 %v2197
    %v2199 = vpop.xlane.xlu0 %2198
    %v2200 = vsel %vm950, %v2189, -inf
    %2201 = vmax.xlane.f32.xlu0 %v2200
    %v2202 = vpop.xlane.xlu0 %2201
    %v2203 = vsub.f32 %v2182, %v2193
    %v2204 = vsub.f32 %v2184, %v2196
    %v2205 = vsub.f32 %v2187, %v2199
    %v2206 = vsub.f32 %v2189, %v2202
    %v2207 = vmul.f32 %v2203, 1.442695
    %v2208 = vpow.pop %v2207
    %v2209 = vmul.f32 %v2204, 1.442695
    %v2210 = vpow.pop %v2209
    %v2211 = vmul.f32 %v2205, 1.442695
    %v2212 = vpow.pop %v2211
    %v2213 = vmul.f32 %v2206, 1.442695
    %v2214 = vpow.pop %v2213
    %v2215 = vsel %vm950, %v2208, 0.0
    %2216 = vadd.xlane.f32.xlu0 %v2215
    %v2217 = vpop.xlane.xlu0 %2216
    %v2218 = vsel %vm950, %v2210, 0.0
    %2219 = vadd.xlane.f32.xlu0 %v2218
    %v2220 = vpop.xlane.xlu0 %2219
    %v2221 = vsel %vm950, %v2212, 0.0
    %2222 = vadd.xlane.f32.xlu0 %v2221
    %v2223 = vpop.xlane.xlu0 %2222
    %v2224 = vsel %vm950, %v2214, 0.0
    %2225 = vadd.xlane.f32.xlu0 %v2224
    %v2226 = vpop.xlane.xlu0 %2225
    %v2227 = vrcp.pop %v2217
    %v2228 = vrcp.pop %v2220
    %v2229 = vrcp.pop %v2223
    %v2230 = vrcp.pop %v2226
    %v2231 = vmul.f32 %v2208, %v2227
    %v2232 = vmul.f32 %v2210, %v2228
    %v2233 = vmul.f32 %v2212, %v2229
    %v2234 = vmul.f32 %v2214, %v2230
    %v2235 = vpack.c.bf16 %v2232, %v2231
    %v2236 = vpack.c.bf16 %v2234, %v2233
    %2237 = vrot.lane.b32.xlu0 %v2152, 64
    %v2238 = vpop.permute.xlu0 %2237
    %2239 = vrot.lane.b32.xlu0 %v2153, 64
    %v2240 = vpop.permute.xlu0 %2239
    %v2244 = vsel %vm950, %v2235, 0
    %v2247 = vsel %vm950, %v2236, 0
    %2249 = vmatpush.bf16.msra.mxu0 0
    %2250 = vmatpush.bf16.msra.mxu0 0
    %2251 = vmatpush.bf16.msra.mxu0 0
    %2252 = vmatpush.bf16.msra.mxu0 0
    %2253 = vmatpush.bf16.msra.mxu0 0
    %2254 = vmatpush.bf16.msra.mxu0 0
    %2255 = vmatpush.bf16.msra.mxu0 %v2240
    %2256 = vmatpush.bf16.msra.mxu0 %v2238
    %2257 = vmatmul.bf16.gmra.mxu0 %v2244
    %v2258 = vpop.f32.mrf.mxu0
    %v2259 = vadd.f32 0.0, %v2258
    %v2260 = vpop.f32.mrf.mxu0
    %v2261 = vadd.f32 0.0, %v2260
    %2262 = vmatmul.bf16.gmra.mxu0 %v2247
    %v2263 = vpop.f32.mrf.mxu0
    %v2264 = vadd.f32 0.0, %v2263
    %v2265 = vpop.f32.mrf.mxu0
    %v2266 = vadd.f32 0.0, %v2265
    %2267 = vdwg.mxu0
    %v2268 = vpack.c.bf16 %v2261, %v2259
    %v2269 = vpack.c.bf16 %v2266, %v2264
    %2270 = vrot.lane.b32.xlu0 %v2152, 112
    %v2271 = vpop.permute.xlu0 %2270
    %2272 = vrot.lane.b32.xlu0 %v2153, 112
    %v2273 = vpop.permute.xlu0 %2272
    %2274 = vrot.lane.b32.xlu0 %v2152, 80
    %v2275 = vpop.permute.xlu0 %2274
    %2276 = vrot.lane.b32.xlu0 %v2153, 80
    %v2277 = vpop.permute.xlu0 %2276
    %v2279 = vsel %vm1460, %v2271, 0
    %v2282 = vsel %vm1460, %v2273, 0
    %v2285 = vsel %vm1460, %v2275, 0
    %v2288 = vsel %vm1460, %v2277, 0
    %2290 = vmatpush.bf16.xpose.msra.mxu0 0
    %2291 = vmatpush.bf16.xpose.msra.mxu0 0
    %2292 = vmatpush.bf16.xpose.msra.mxu0 0
    %2293 = vmatpush.bf16.xpose.msra.mxu0 0
    %2294 = vmatpush.bf16.xpose.msra.mxu0 0
    %2295 = vmatpush.bf16.xpose.msra.mxu0 0
    %2296 = vmatpush.bf16.xpose.msra.mxu0 %v2288
    %2297 = vmatpush.bf16.xpose.msra.mxu0 %v2285
    %2298 = vmatmul.bf16.gmra.mxu0 %v2279
    %v2299 = vpop.f32.mrf.mxu0
    %v2300 = vadd.f32 %v1399, %v2299
    %v2301 = vpop.f32.mrf.mxu0
    %v2302 = vadd.f32 %v1400, %v2301
    %2303 = vmatmul.bf16.gmra.mxu0 %v2282
    %v2304 = vpop.f32.mrf.mxu0
    %v2305 = vadd.f32 %v1401, %v2304
    %v2306 = vpop.f32.mrf.mxu0
    %v2307 = vadd.f32 %v1402, %v2306
    %2308 = vdwg.mxu0
    %v2309 = vsel %vm950, %v2300, -inf
    %2310 = vmax.xlane.f32.xlu0 %v2309
    %v2311 = vpop.xlane.xlu0 %2310
    %v2312 = vsel %vm950, %v2302, -inf
    %2313 = vmax.xlane.f32.xlu0 %v2312
    %v2314 = vpop.xlane.xlu0 %2313
    %v2315 = vsel %vm950, %v2305, -inf
    %2316 = vmax.xlane.f32.xlu0 %v2315
    %v2317 = vpop.xlane.xlu0 %2316
    %v2318 = vsel %vm950, %v2307, -inf
    %2319 = vmax.xlane.f32.xlu0 %v2318
    %v2320 = vpop.xlane.xlu0 %2319
    %v2321 = vsub.f32 %v2300, %v2311
    %v2322 = vsub.f32 %v2302, %v2314
    %v2323 = vsub.f32 %v2305, %v2317
    %v2324 = vsub.f32 %v2307, %v2320
    %v2325 = vmul.f32 %v2321, 1.442695
    %v2326 = vpow.pop %v2325
    %v2327 = vmul.f32 %v2322, 1.442695
    %v2328 = vpow.pop %v2327
    %v2329 = vmul.f32 %v2323, 1.442695
    %v2330 = vpow.pop %v2329
    %v2331 = vmul.f32 %v2324, 1.442695
    %v2332 = vpow.pop %v2331
    %v2333 = vsel %vm950, %v2326, 0.0
    %2334 = vadd.xlane.f32.xlu0 %v2333
    %v2335 = vpop.xlane.xlu0 %2334
    %v2336 = vsel %vm950, %v2328, 0.0
    %2337 = vadd.xlane.f32.xlu0 %v2336
    %v2338 = vpop.xlane.xlu0 %2337
    %v2339 = vsel %vm950, %v2330, 0.0
    %2340 = vadd.xlane.f32.xlu0 %v2339
    %v2341 = vpop.xlane.xlu0 %2340
    %v2342 = vsel %vm950, %v2332, 0.0
    %2343 = vadd.xlane.f32.xlu0 %v2342
    %v2344 = vpop.xlane.xlu0 %2343
    %v2345 = vrcp.pop %v2335
    %v2346 = vrcp.pop %v2338
    %v2347 = vrcp.pop %v2341
    %v2348 = vrcp.pop %v2344
    %v2349 = vmul.f32 %v2326, %v2345
    %v2350 = vmul.f32 %v2328, %v2346
    %v2351 = vmul.f32 %v2330, %v2347
    %v2352 = vmul.f32 %v2332, %v2348
    %v2353 = vpack.c.bf16 %v2350, %v2349
    %v2354 = vpack.c.bf16 %v2352, %v2351
    %2355 = vrot.lane.b32.xlu0 %v2152, 48
    %v2356 = vpop.permute.xlu0 %2355
    %2357 = vrot.lane.b32.xlu0 %v2153, 48
    %v2358 = vpop.permute.xlu0 %2357
    %v2362 = vsel %vm950, %v2353, 0
    %v2365 = vsel %vm950, %v2354, 0
    %2367 = vmatpush.bf16.msra.mxu0 0
    %2368 = vmatpush.bf16.msra.mxu0 0
    %2369 = vmatpush.bf16.msra.mxu0 0
    %2370 = vmatpush.bf16.msra.mxu0 0
    %2371 = vmatpush.bf16.msra.mxu0 0
    %2372 = vmatpush.bf16.msra.mxu0 0
    %2373 = vmatpush.bf16.msra.mxu0 %v2358
    %2374 = vmatpush.bf16.msra.mxu0 %v2356
    %2375 = vmatmul.bf16.gmra.mxu0 %v2362
    %v2376 = vpop.f32.mrf.mxu0
    %v2377 = vadd.f32 0.0, %v2376
    %v2378 = vpop.f32.mrf.mxu0
    %v2379 = vadd.f32 0.0, %v2378
    %2380 = vmatmul.bf16.gmra.mxu0 %v2365
    %v2381 = vpop.f32.mrf.mxu0
    %v2382 = vadd.f32 0.0, %v2381
    %v2383 = vpop.f32.mrf.mxu0
    %v2384 = vadd.f32 0.0, %v2383
    %2385 = vdwg.mxu0
    %v2386 = vpack.c.bf16 %v2379, %v2377
    %v2387 = vpack.c.bf16 %v2384, %v2382
    %v2390 = vunpack.c.l.b16 %v2150
    %v2391 = vunpack.c.l.b16 %v2151
    %v2392 = vpack.c.b16 %v2391, %v2390
    %v2395 = vsel %vm1460, %v2386, 0
    %v2398 = vsel %vm1460, %v2387, 0
    %2400 = vmatpush.bf16.msra.mxu0 0
    %2401 = vmatpush.bf16.msra.mxu0 0
    %2402 = vmatpush.bf16.msra.mxu0 0
    %2403 = vmatpush.bf16.msra.mxu0 0
    %2404 = vmatpush.bf16.msra.mxu0 0
    %2405 = vmatpush.bf16.msra.mxu0 0
    %2406 = vmatpush.bf16.msra.mxu0 0
    %2407 = vmatpush.bf16.msra.mxu0 %v2392
    %2408 = vmatmul.bf16.gmra.mxu0 %v2395
    %v2409 = vpop.f32.mrf.mxu0
    %v2410 = vadd.f32 0.0, %v2409
    %v2411 = vpop.f32.mrf.mxu0
    %v2412 = vadd.f32 0.0, %v2411
    %2413 = vmatmul.bf16.gmra.mxu0 %v2398
    %v2414 = vpop.f32.mrf.mxu0
    %v2415 = vadd.f32 0.0, %v2414
    %v2416 = vpop.f32.mrf.mxu0
    %v2417 = vadd.f32 0.0, %v2416
    %2418 = vdwg.mxu0
    %v2421 = vunpack.c.l.b16 %v2148
    %v2422 = vunpack.c.l.b16 %v2149
    %v2423 = vpack.c.b16 %v2422, %v2421
    %v2426 = vsel %vm1460, %v2268, 0
    %v2429 = vsel %vm1460, %v2269, 0
    %2431 = vmatpush.bf16.msra.mxu0 0
    %2432 = vmatpush.bf16.msra.mxu0 0
    %2433 = vmatpush.bf16.msra.mxu0 0
    %2434 = vmatpush.bf16.msra.mxu0 0
    %2435 = vmatpush.bf16.msra.mxu0 0
    %2436 = vmatpush.bf16.msra.mxu0 0
    %2437 = vmatpush.bf16.msra.mxu0 0
    %2438 = vmatpush.bf16.msra.mxu0 %v2423
    %2439 = vmatmul.bf16.gmra.mxu0 %v2426
    %v2440 = vpop.f32.mrf.mxu0
    %v2441 = vadd.f32 %v2410, %v2440
    %v2442 = vpop.f32.mrf.mxu0
    %v2443 = vadd.f32 %v2412, %v2442
    %2444 = vmatmul.bf16.gmra.mxu0 %v2429
    %v2445 = vpop.f32.mrf.mxu0
    %v2446 = vadd.f32 %v2415, %v2445
    %v2447 = vpop.f32.mrf.mxu0
    %v2448 = vadd.f32 %v2417, %v2447
    %2449 = vdwg.mxu0
    %v2450 = vperm.slane %v2101, 1
    %v2451 = vadd.f32 %v2441, %v2450
    %v2452 = vadd.f32 %v2443, %v2450
    %v2453 = vadd.f32 %v2446, %v2450
    %v2454 = vadd.f32 %v2448, %v2450
    %v2455 = vadd.f32 %v2096, %v2451
    %v2456 = vadd.f32 %v2097, %v2452
    %v2457 = vadd.f32 %v2098, %v2453
    %v2458 = vadd.f32 %v2099, %v2454
    %v2459 = vsel %vm950, %v2455, 0.0
    %2460 = vadd.xlane.f32.xlu0 %v2459
    %v2461 = vpop.xlane.xlu0 %2460
    %v2462 = vsel %vm950, %v2456, 0.0
    %2463 = vadd.xlane.f32.xlu0 %v2462
    %v2464 = vpop.xlane.xlu0 %2463
    %v2465 = vsel %vm950, %v2457, 0.0
    %2466 = vadd.xlane.f32.xlu0 %v2465
    %v2467 = vpop.xlane.xlu0 %2466
    %v2468 = vsel %vm950, %v2458, 0.0
    %2469 = vadd.xlane.f32.xlu0 %v2468
    %v2470 = vpop.xlane.xlu0 %2469
    %v2471 = vmul.f32 %v2461, %v969
    %v2472 = vmul.f32 %v2464, %v969
    %v2473 = vmul.f32 %v2467, %v969
    %v2474 = vmul.f32 %v2470, %v969
    %v2475 = vsub.f32 %v2455, %v2471
    %v2476 = vsub.f32 %v2456, %v2472
    %v2477 = vsub.f32 %v2457, %v2473
    %v2478 = vsub.f32 %v2458, %v2474
    %v2479 = vmul.f32 %v2475, %v2475
    %v2480 = vmul.f32 %v2476, %v2476
    %v2481 = vmul.f32 %v2477, %v2477
    %v2482 = vmul.f32 %v2478, %v2478
    %v2483 = vsel %vm950, %v2479, 0.0
    %2484 = vadd.xlane.f32.xlu0 %v2483
    %v2485 = vpop.xlane.xlu0 %2484
    %v2486 = vsel %vm950, %v2480, 0.0
    %2487 = vadd.xlane.f32.xlu0 %v2486
    %v2488 = vpop.xlane.xlu0 %2487
    %v2489 = vsel %vm950, %v2481, 0.0
    %2490 = vadd.xlane.f32.xlu0 %v2489
    %v2491 = vpop.xlane.xlu0 %2490
    %v2492 = vsel %vm950, %v2482, 0.0
    %2493 = vadd.xlane.f32.xlu0 %v2492
    %v2494 = vpop.xlane.xlu0 %2493
    %v2495 = vmul.f32 %v2485, %v969
    %v2496 = vmul.f32 %v2488, %v969
    %v2497 = vmul.f32 %v2491, %v969
    %v2498 = vmul.f32 %v2494, %v969
    %v2499 = vadd.f32 %v2495, 1e-06
    %v2500 = vadd.f32 %v2496, 1e-06
    %v2501 = vadd.f32 %v2497, 1e-06
    %v2502 = vadd.f32 %v2498, 1e-06
    %v2503 = vrsqrt.pop %v2499
    %v2504 = vmul.f32 %v2503, %v2499
    %v2505 = vmul.f32 %v2504, %v2503
    %v2506 = vmul.f32 0.5, %v2505
    %v2507 = vsub.f32 1.5, %v2506
    %v2508 = vmul.f32 %v2503, %v2507
    %vm2509 = vweird.f32 %v2499
    %vm2510 = vweird.f32 %v2503
    %vm2511 = vmor %vm2509, %vm2510
    %v2512 = vsel %vm2511, %v2503, %v2508
    %v2513 = vrsqrt.pop %v2500
    %v2514 = vmul.f32 %v2513, %v2500
    %v2515 = vmul.f32 %v2514, %v2513
    %v2516 = vmul.f32 0.5, %v2515
    %v2517 = vsub.f32 1.5, %v2516
    %v2518 = vmul.f32 %v2513, %v2517
    %vm2519 = vweird.f32 %v2500
    %vm2520 = vweird.f32 %v2513
    %vm2521 = vmor %vm2519, %vm2520
    %v2522 = vsel %vm2521, %v2513, %v2518
    %v2523 = vrsqrt.pop %v2501
    %v2524 = vmul.f32 %v2523, %v2501
    %v2525 = vmul.f32 %v2524, %v2523
    %v2526 = vmul.f32 0.5, %v2525
    %v2527 = vsub.f32 1.5, %v2526
    %v2528 = vmul.f32 %v2523, %v2527
    %vm2529 = vweird.f32 %v2501
    %vm2530 = vweird.f32 %v2523
    %vm2531 = vmor %vm2529, %vm2530
    %v2532 = vsel %vm2531, %v2523, %v2528
    %v2533 = vrsqrt.pop %v2502
    %v2534 = vmul.f32 %v2533, %v2502
    %v2535 = vmul.f32 %v2534, %v2533
    %v2536 = vmul.f32 0.5, %v2535
    %v2537 = vsub.f32 1.5, %v2536
    %v2538 = vmul.f32 %v2533, %v2537
    %vm2539 = vweird.f32 %v2502
    %vm2540 = vweird.f32 %v2533
    %vm2541 = vmor %vm2539, %vm2540
    %v2542 = vsel %vm2541, %v2533, %v2538
    %v2543 = vmul.f32 %v2475, %v2512
    %v2544 = vmul.f32 %v2476, %v2522
    %v2545 = vmul.f32 %v2477, %v2532
    %v2546 = vmul.f32 %v2478, %v2542
    %v2547 = vperm.slane %v2101, 2
    %v2548 = vmul.f32 %v2543, %v2547
    %v2549 = vmul.f32 %v2544, %v2547
    %v2550 = vmul.f32 %v2545, %v2547
    %v2551 = vmul.f32 %v2546, %v2547
    %v2552 = vperm.slane %v2101, 3
    %v2553 = vadd.f32 %v2548, %v2552
    %v2554 = vadd.f32 %v2549, %v2552
    %v2555 = vadd.f32 %v2550, %v2552
    %v2556 = vadd.f32 %v2551, %v2552
    %v2557 = vpack.c.bf16 %v2554, %v2553
    %v2558 = vpack.c.bf16 %v2556, %v2555
    %s2559 = scalar_lea.vmem %s12, 16
    %v2560 = vld [vmem:[%s2559] sm:$0xf]
    %v2561 = vld [vmem:[%s2559 + $0x4] sm:$0xf]
    %v2562 = vld [vmem:[%s2559 + $0x8] sm:$0xf]
    %v2563 = vld [vmem:[%s2559 + $0xc] sm:$0xf]
    %v2564 = vperm.slane %v2101, 4
    %v2569 = vunpack.c.l.b16 %v2560
    %v2570 = vunpack.c.l.b16 %v2561
    %v2571 = vunpack.c.l.b16 %v2562
    %v2572 = vunpack.c.l.b16 %v2563
    %v2573 = vpack.c.b16 %v2570, %v2569
    %v2574 = vpack.c.b16 %v2572, %v2571
    %v2578 = vsel %vm950, %v2557, 0
    %v2581 = vsel %vm950, %v2558, 0
    %2583 = vmatpush.bf16.msra.mxu0 0
    %2584 = vmatpush.bf16.msra.mxu0 0
    %2585 = vmatpush.bf16.msra.mxu0 0
    %2586 = vmatpush.bf16.msra.mxu0 0
    %2587 = vmatpush.bf16.msra.mxu0 0
    %2588 = vmatpush.bf16.msra.mxu0 0
    %2589 = vmatpush.bf16.msra.mxu0 %v2574
    %2590 = vmatpush.bf16.msra.mxu0 %v2573
    %2591 = vmatmul.bf16.gmra.mxu0 %v2578
    %v2592 = vpop.f32.mrf.mxu0
    %v2593 = vadd.f32 %v2564, %v2592
    %v2594 = vpop.f32.mrf.mxu0
    %v2595 = vadd.f32 %v2564, %v2594
    %2596 = vmatmul.bf16.gmra.mxu0 %v2581
    %v2597 = vpop.f32.mrf.mxu0
    %v2598 = vadd.f32 %v2564, %v2597
    %v2599 = vpop.f32.mrf.mxu0
    %v2600 = vadd.f32 %v2564, %v2599
    %2601 = vdwg.mxu0
    %v2602 = vmul.f32 %v2593, %v2593
    %v2603 = vmul.f32 %v2595, %v2595
    %v2604 = vmul.f32 %v2598, %v2598
    %v2605 = vmul.f32 %v2600, %v2600
    %v2606 = vmul.f32 %v2593, %v2602
    %v2607 = vmul.f32 %v2595, %v2603
    %v2608 = vmul.f32 %v2598, %v2604
    %v2609 = vmul.f32 %v2600, %v2605
    %v2610 = vmul.f32 %v2606, 0.044715
    %v2611 = vmul.f32 %v2607, 0.044715
    %v2612 = vmul.f32 %v2608, 0.044715
    %v2613 = vmul.f32 %v2609, 0.044715
    %v2614 = vadd.f32 %v2593, %v2610
    %v2615 = vadd.f32 %v2595, %v2611
    %v2616 = vadd.f32 %v2598, %v2612
    %v2617 = vadd.f32 %v2600, %v2613
    %v2618 = vmul.f32 %v2614, 0.7978846
    %v2619 = vmul.f32 %v2615, 0.7978846
    %v2620 = vmul.f32 %v2616, 0.7978846
    %v2621 = vmul.f32 %v2617, 0.7978846
    %v2622 = vtanh.pop %v2618
    %v2623 = vtanh.pop %v2619
    %v2624 = vtanh.pop %v2620
    %v2625 = vtanh.pop %v2621
    %v2626 = vadd.f32 %v2622, 1.0
    %v2627 = vadd.f32 %v2623, 1.0
    %v2628 = vadd.f32 %v2624, 1.0
    %v2629 = vadd.f32 %v2625, 1.0
    %v2630 = vmul.f32 %v2626, 0.5
    %v2631 = vmul.f32 %v2627, 0.5
    %v2632 = vmul.f32 %v2628, 0.5
    %v2633 = vmul.f32 %v2629, 0.5
    %v2634 = vmul.f32 %v2593, %v2630
    %v2635 = vmul.f32 %v2595, %v2631
    %v2636 = vmul.f32 %v2598, %v2632
    %v2637 = vmul.f32 %v2600, %v2633
    %v2638 = vpack.c.bf16 %v2635, %v2634
    %v2639 = vpack.c.bf16 %v2637, %v2636
    %s2640 = scalar_lea.vmem %s13, 32
    %v2641 = vld [vmem:[%s2640] sm:$0xf]
    %v2642 = vld [vmem:[%s2640 + $0x4] sm:$0xf]
    %v2643 = vld [vmem:[%s2640 + $0x8] sm:$0xf]
    %v2644 = vld [vmem:[%s2640 + $0xc] sm:$0xf]
    %v2645 = vld [vmem:[%s2640 + $0x10] sm:$0xf]
    %v2646 = vld [vmem:[%s2640 + $0x14] sm:$0xf]
    %v2647 = vld [vmem:[%s2640 + $0x18] sm:$0xf]
    %v2648 = vld [vmem:[%s2640 + $0x1c] sm:$0xf]
    %v2649 = vperm.slane %v2101, 5
    %v2658 = vunpack.c.l.b16 %v2641
    %v2659 = vunpack.c.l.b16 %v2642
    %v2660 = vunpack.c.l.b16 %v2643
    %v2661 = vunpack.c.l.b16 %v2644
    %v2662 = vunpack.c.l.b16 %v2645
    %v2663 = vunpack.c.l.b16 %v2646
    %v2664 = vunpack.c.l.b16 %v2647
    %v2665 = vunpack.c.l.b16 %v2648
    %v2666 = vpack.c.b16 %v2659, %v2658
    %v2667 = vpack.c.b16 %v2661, %v2660
    %v2668 = vpack.c.b16 %v2663, %v2662
    %v2669 = vpack.c.b16 %v2665, %v2664
    %v2675 = vsel %vm855, %v2638, 0
    %v2678 = vsel %vm855, %v2639, 0
    %2680 = vmatpush.bf16.msra.mxu0 0
    %2681 = vmatpush.bf16.msra.mxu0 0
    %2682 = vmatpush.bf16.msra.mxu0 0
    %2683 = vmatpush.bf16.msra.mxu0 0
    %2684 = vmatpush.bf16.msra.mxu0 %v2669
    %2685 = vmatpush.bf16.msra.mxu0 %v2668
    %2686 = vmatpush.bf16.msra.mxu0 %v2667
    %2687 = vmatpush.bf16.msra.mxu0 %v2666
    %2688 = vmatmul.bf16.gmra.mxu0 %v2675
    %v2689 = vpop.f32.mrf.mxu0
    %v2690 = vadd.f32 %v2649, %v2689
    %v2691 = vpop.f32.mrf.mxu0
    %v2692 = vadd.f32 %v2649, %v2691
    %2693 = vmatmul.bf16.gmra.mxu0 %v2678
    %v2694 = vpop.f32.mrf.mxu0
    %v2695 = vadd.f32 %v2649, %v2694
    %v2696 = vpop.f32.mrf.mxu0
    %v2697 = vadd.f32 %v2649, %v2696
    %2698 = vdwg.mxu0
    %v2699 = vadd.f32 %v2553, %v2690
    %v2700 = vadd.f32 %v2554, %v2692
    %v2701 = vadd.f32 %v2555, %v2695
    %v2702 = vadd.f32 %v2556, %v2697
    %v2703 = vsel %vm950, %v2699, 0.0
    %2704 = vadd.xlane.f32.xlu0 %v2703
    %v2705 = vpop.xlane.xlu0 %2704
    %v2706 = vsel %vm950, %v2700, 0.0
    %2707 = vadd.xlane.f32.xlu0 %v2706
    %v2708 = vpop.xlane.xlu0 %2707
    %v2709 = vsel %vm950, %v2701, 0.0
    %2710 = vadd.xlane.f32.xlu0 %v2709
    %v2711 = vpop.xlane.xlu0 %2710
    %v2712 = vsel %vm950, %v2702, 0.0
    %2713 = vadd.xlane.f32.xlu0 %v2712
    %v2714 = vpop.xlane.xlu0 %2713
    %v2715 = vmul.f32 %v2705, %v969
    %v2716 = vmul.f32 %v2708, %v969
    %v2717 = vmul.f32 %v2711, %v969
    %v2718 = vmul.f32 %v2714, %v969
    %v2719 = vsub.f32 %v2699, %v2715
    %v2720 = vsub.f32 %v2700, %v2716
    %v2721 = vsub.f32 %v2701, %v2717
    %v2722 = vsub.f32 %v2702, %v2718
    %v2723 = vmul.f32 %v2719, %v2719
    %v2724 = vmul.f32 %v2720, %v2720
    %v2725 = vmul.f32 %v2721, %v2721
    %v2726 = vmul.f32 %v2722, %v2722
    %v2727 = vsel %vm950, %v2723, 0.0
    %2728 = vadd.xlane.f32.xlu0 %v2727
    %v2729 = vpop.xlane.xlu0 %2728
    %v2730 = vsel %vm950, %v2724, 0.0
    %2731 = vadd.xlane.f32.xlu0 %v2730
    %v2732 = vpop.xlane.xlu0 %2731
    %v2733 = vsel %vm950, %v2725, 0.0
    %2734 = vadd.xlane.f32.xlu0 %v2733
    %v2735 = vpop.xlane.xlu0 %2734
    %v2736 = vsel %vm950, %v2726, 0.0
    %2737 = vadd.xlane.f32.xlu0 %v2736
    %v2738 = vpop.xlane.xlu0 %2737
    %v2739 = vmul.f32 %v2729, %v969
    %v2740 = vmul.f32 %v2732, %v969
    %v2741 = vmul.f32 %v2735, %v969
    %v2742 = vmul.f32 %v2738, %v969
    %v2743 = vadd.f32 %v2739, 1e-06
    %v2744 = vadd.f32 %v2740, 1e-06
    %v2745 = vadd.f32 %v2741, 1e-06
    %v2746 = vadd.f32 %v2742, 1e-06
    %v2747 = vrsqrt.pop %v2743
    %v2748 = vmul.f32 %v2747, %v2743
    %v2749 = vmul.f32 %v2748, %v2747
    %v2750 = vmul.f32 0.5, %v2749
    %v2751 = vsub.f32 1.5, %v2750
    %v2752 = vmul.f32 %v2747, %v2751
    %vm2753 = vweird.f32 %v2743
    %vm2754 = vweird.f32 %v2747
    %vm2755 = vmor %vm2753, %vm2754
    %v2756 = vsel %vm2755, %v2747, %v2752
    %v2757 = vrsqrt.pop %v2744
    %v2758 = vmul.f32 %v2757, %v2744
    %v2759 = vmul.f32 %v2758, %v2757
    %v2760 = vmul.f32 0.5, %v2759
    %v2761 = vsub.f32 1.5, %v2760
    %v2762 = vmul.f32 %v2757, %v2761
    %vm2763 = vweird.f32 %v2744
    %vm2764 = vweird.f32 %v2757
    %vm2765 = vmor %vm2763, %vm2764
    %v2766 = vsel %vm2765, %v2757, %v2762
    %v2767 = vrsqrt.pop %v2745
    %v2768 = vmul.f32 %v2767, %v2745
    %v2769 = vmul.f32 %v2768, %v2767
    %v2770 = vmul.f32 0.5, %v2769
    %v2771 = vsub.f32 1.5, %v2770
    %v2772 = vmul.f32 %v2767, %v2771
    %vm2773 = vweird.f32 %v2745
    %vm2774 = vweird.f32 %v2767
    %vm2775 = vmor %vm2773, %vm2774
    %v2776 = vsel %vm2775, %v2767, %v2772
    %v2777 = vrsqrt.pop %v2746
    %v2778 = vmul.f32 %v2777, %v2746
    %v2779 = vmul.f32 %v2778, %v2777
    %v2780 = vmul.f32 0.5, %v2779
    %v2781 = vsub.f32 1.5, %v2780
    %v2782 = vmul.f32 %v2777, %v2781
    %vm2783 = vweird.f32 %v2746
    %vm2784 = vweird.f32 %v2777
    %vm2785 = vmor %vm2783, %vm2784
    %v2786 = vsel %vm2785, %v2777, %v2782
    %v2787 = vmul.f32 %v2719, %v2756
    %v2788 = vmul.f32 %v2720, %v2766
    %v2789 = vmul.f32 %v2721, %v2776
    %v2790 = vmul.f32 %v2722, %v2786
    %v2791 = vperm.slane %v2101, 6
    %v2792 = vmul.f32 %v2787, %v2791
    %v2793 = vmul.f32 %v2788, %v2791
    %v2794 = vmul.f32 %v2789, %v2791
    %v2795 = vmul.f32 %v2790, %v2791
    %v2796 = vperm.slane %v2101, 7
    %v2797 = vadd.f32 %v2792, %v2796
    %v2798 = vadd.f32 %v2793, %v2796
    %v2799 = vadd.f32 %v2794, %v2796
    %v2800 = vadd.f32 %v2795, %v2796
    %2801 = vst.msk [vmem:[#allocation2] sm:$0xff] %vm950, %v2797
    %2802 = vst.msk [vmem:[#allocation2 + $0x8] sm:$0xff] %vm950, %v2798
    %2803 = vst.msk [vmem:[#allocation2 + $0x10] sm:$0xff] %vm950, %v2799
    %2804 = vst.msk [vmem:[#allocation2 + $0x18] sm:$0xff] %vm950, %v2800
    // Predicated region
    $region62: #{bb_for_tuta_explicit_forward.1} parent=1 // pred_check
      _
    $region63: #{bb_for_tuta_explicit_forward.1} parent=1 // pred_check_branch
      %2806 = sbr.rel (0) target = $region65
    $region64: #{bb_for_tuta_explicit_forward.1} parent=1 // pred_region
      %2808 = vsyncadd [#allocation3], 0
      %s2809 = sshll.u32 [#allocation2], 4
      %s2810 = int_to_ptr.vmem [resolvable:$true] %s2809
      %s2811 = sshll.u32 %s15, 4
      %s2812 = int_to_ptr.hbm [resolvable:$true] %s2811
      %2817 = dma.vmem_to_hbm [thread:$0]  %s2810, 512, %s2812, [#allocation3], 128, 128, 8
    $region65: #{bb_for_tuta_explicit_forward.1} parent=1 // pred_fallthru
      _
    // Predicated region
    $region66: #{bb_for_tuta_explicit_forward.1} parent=1 // pred_check
      _
    $region67: #{bb_for_tuta_explicit_forward.1} parent=1 // pred_check_branch
      %2819 = sbr.rel (0) target = $region69
    $region68: #{bb_for_tuta_explicit_forward.1} parent=1 // pred_region
      %2821 = dma.done [#allocation3], 512
    $region69: #{bb_for_tuta_explicit_forward.1} parent=1 // pred_fallthru
      _
    %2822 = vsyncpa [#allocation3], 1

</llo_original>
